<compile_context>
chip_gen: v5e
topology: v5e:2x2
jax: 0.10.0
libtpu: 0.0.40
codegen_flags: <defaults>
</compile_context>

<pallas_src>
import functools
import math

import jax
import jax.numpy as jnp
from jax.experimental import pallas as pl
from jax.experimental.pallas import tpu as pltpu


def wave_attn_kernel(x_ref, w_ref, dots_ref, o_ref):
    # x_ref   : (1, C, T)  one batch element; channels on sublanes, T spatial
    #           positions on lanes.
    # w_ref   : (C, 1)     1x1 conv weight.
    # dots_ref: (K, 1)     wave frequencies (ch_out of them).
    # o_ref   : (1, K, T)
    x = x_ref[0]                                                # (C, T)
    # 1x1 conv == weighted sum over channels (VPU mul + sublane reduce).
    freq = jnp.sum(x * w_ref[...], axis=0, keepdims=True)      # (1, T)
    # Outer product with the frequency ladder, then sin (EUP).
    phase = dots_ref[...] * freq                                # (K,1)*(1,T) -> (K, T)
    o_ref[0] = jnp.sin(phase).astype(o_ref.dtype)


@jax.jit
def wave_attn(x_nchw, conv_w, dots):
    """x_nchw: (N, C, H, W) as in PyTorch.
    conv_w: (1, C, 1, 1)  (nn.Conv2d(ch_in, 1, 1, bias=False).weight).
    dots:   (ch_out,)     (the registered buffer, squeezed)."""
    N, C, H, W = x_nchw.shape
    K = dots.shape[0]
    HW = H * W

    # Flatten spatial onto the lane axis -- pure reshapes, no transposes.
    x_flat = x_nchw.reshape(N, C, HW).astype(jnp.float32)       # (N, C, HW)
    w_col = conv_w.reshape(C, 1).astype(jnp.float32)            # (C, 1)
    dots_col = dots.reshape(K, 1).astype(jnp.float32)           # (K, 1)

    # Spatial tiling so big images pipeline / fit VMEM; whole image per block
    # when HW is small or not a multiple of the tile.
    HW_TILE = 512
    if HW % HW_TILE != 0:
        HW_TILE = HW
    n_sp = HW // HW_TILE

    out = pl.pallas_call(
        wave_attn_kernel,
        out_shape=jax.ShapeDtypeStruct((N, K, HW), jnp.float32),
        grid_spec=pltpu.PrefetchScalarGridSpec(
            num_scalar_prefetch=0,
            grid=(N, n_sp),
            in_specs=[
                pl.BlockSpec((1, C, HW_TILE), lambda n, s: (n, 0, s)),
                pl.BlockSpec((C, 1), lambda n, s: (0, 0)),
                pl.BlockSpec((K, 1), lambda n, s: (0, 0)),
            ],
            out_specs=pl.BlockSpec((1, K, HW_TILE), lambda n, s: (n, 0, s)),
        ),
        compiler_params=pltpu.CompilerParams(
            dimension_semantics=("parallel", "parallel")),
    )(x_flat, w_col, dots_col)

    # (N, K, H*W) -> (N, K, H, W): free reshape, already NCHW order.
    return out.reshape(N, K, H, W).astype(x_nchw.dtype)


def wave_attn_reference(x_nchw, conv_w, dots):
    """Plain-JAX reference mirroring the PyTorch forward."""
    w = conv_w.reshape(-1)                                       # (C,)
    freq = jnp.einsum("nchw,c->nhw", x_nchw, w,
                      precision=jax.lax.Precision.HIGHEST)       # (N, H, W)
    return jnp.sin(freq[:, None, :, :] * dots[None, :, None, None])


if __name__ == "__main__":
    N, C_in, H, W = 2, 4, 16, 16
    ch_out = 100                       # module default

    key = jax.random.PRNGKey(0)
    k1, k2 = jax.random.split(key)

    x = jax.random.normal(k1, (N, C_in, H, W), jnp.float32)
    # Conv2d(ch_in, 1, 1, bias=False) weight.
    conv_w = 0.25 * jax.random.normal(k2, (1, C_in, 1, 1), jnp.float32)
    # Registered buffer: linspace(-6*pi, 6*pi, ch_out).
    dots = jnp.linspace(-6.0 * math.pi, 6.0 * math.pi, ch_out,
                        dtype=jnp.float32)

    out = wave_attn(x, conv_w, dots)
    out = jax.block_until_ready(out)

    ref = wave_attn_reference(x, conv_w, dots)
    ref = jax.block_until_ready(ref)

    assert out.shape == (N, ch_out, H, W)
    max_err = float(jnp.max(jnp.abs(out - ref)))
    assert jnp.allclose(out, ref, atol=1e-2, rtol=1e-2), max_err
    print("KERNEL_OK")
</pallas_src>

<mosaic_0001>
module attributes {stable_mosaic.version = 11 : i64} {
  func.func @wave_attn_kernel(%arg0: i32, %arg1: i32, %arg2: memref<1x4x256xf32, #tpu.memory_space<vmem>>, %arg3: memref<4x1xf32, #tpu.memory_space<vmem>>, %arg4: memref<100x1xf32, #tpu.memory_space<vmem>>, %arg5: memref<1x100x256xf32, #tpu.memory_space<vmem>>) attributes {dimension_semantics = [#tpu.dimension_semantics<parallel>, #tpu.dimension_semantics<parallel>], iteration_bounds = array<i64: 2, 1>, scalar_prefetch = 0 : i64, scratch_operands = 0 : i64, tpu.core_type = #tpu.core_type<tc>, window_params = [{transform_indices = @transform_0, window_bounds = array<i64: 1, 4, 256>}, {pipeline_mode = #tpu.pipeline_mode<synchronous>, transform_indices = @transform_1, window_bounds = array<i64: 4, 1>}, {pipeline_mode = #tpu.pipeline_mode<synchronous>, transform_indices = @transform_2, window_bounds = array<i64: 100, 1>}, {transform_indices = @transform_3, window_bounds = array<i64: 1, 100, 256>}]} {
    %c0 = arith.constant 0 : index
    %c0_0 = arith.constant 0 : index
    %c0_1 = arith.constant 0 : index
    %0 = vector.load %arg2[%c0, %c0_0, %c0_1] : memref<1x4x256xf32, #tpu.memory_space<vmem>>, vector<1x4x256xf32>
    %1 = vector.shape_cast %0 : vector<1x4x256xf32> to vector<4x256xf32>
    %c0_2 = arith.constant 0 : index
    %c0_3 = arith.constant 0 : index
    %2 = vector.load %arg3[%c0_2, %c0_3] : memref<4x1xf32, #tpu.memory_space<vmem>>, vector<4x1xf32>
    %3 = vector.broadcast %2 : vector<4x1xf32> to vector<4x256xf32>
    %4 = arith.mulf %1, %3 : vector<4x256xf32>
    %cst = arith.constant dense<0.000000e+00> : vector<256xf32>
    %5 = vector.multi_reduction <add>, %4, %cst [0] : vector<4x256xf32> to vector<256xf32>
    %6 = vector.shape_cast %5 : vector<256xf32> to vector<1x256xf32>
    %c0_4 = arith.constant 0 : index
    %c0_5 = arith.constant 0 : index
    %7 = vector.load %arg4[%c0_4, %c0_5] : memref<100x1xf32, #tpu.memory_space<vmem>>, vector<100x1xf32>
    %8 = vector.broadcast %7 : vector<100x1xf32> to vector<100x256xf32>
    %9 = vector.broadcast %6 : vector<1x256xf32> to vector<100x256xf32>
    %10 = arith.mulf %8, %9 : vector<100x256xf32>
    %11 = math.sin %10 : vector<100x256xf32>
    %c0_6 = arith.constant 0 : index
    %c0_7 = arith.constant 0 : index
    %c0_8 = arith.constant 0 : index
    %12 = vector.load %arg5[%c0_6, %c0_7, %c0_8] : memref<1x100x256xf32, #tpu.memory_space<vmem>>, vector<1x100x256xf32>
    %13 = vector.shape_cast %12 : vector<1x100x256xf32> to vector<100x256xf32>
    %14 = vector.shape_cast %11 : vector<100x256xf32> to vector<1x100x256xf32>
    tpu.vector_store %arg5[%c0_6, %c0_7, %c0_8], %14 {strides = array<i32>} : memref<1x100x256xf32, #tpu.memory_space<vmem>>, vector<1x100x256xf32>,
    return
  }
  func.func @transform_0(%arg0: i32, %arg1: i32) -> (i32, i32, i32) {
    %c0_i32 = arith.constant 0 : i32
    %c0_i32_0 = arith.constant 0 : i32
    return %arg0, %c0_i32, %arg1 : i32, i32, i32
  }
  func.func @transform_1(%arg0: i32, %arg1: i32) -> (i32, i32) {
    %c0_i32 = arith.constant 0 : i32
    %c0_i32_0 = arith.constant 0 : i32
    %c0_i32_1 = arith.constant 0 : i32
    return %c0_i32, %c0_i32_0 : i32, i32
  }
  func.func @transform_2(%arg0: i32, %arg1: i32) -> (i32, i32) {
    %c0_i32 = arith.constant 0 : i32
    %c0_i32_0 = arith.constant 0 : i32
    %c0_i32_1 = arith.constant 0 : i32
    return %c0_i32, %c0_i32_0 : i32, i32
  }
  func.func @transform_3(%arg0: i32, %arg1: i32) -> (i32, i32, i32) {
    %c0_i32 = arith.constant 0 : i32
    %c0_i32_0 = arith.constant 0 : i32
    return %arg0, %c0_i32, %arg1 : i32, i32, i32
  }
}

</mosaic_0001>

<llo_original>
// kernel: wave_attn.1
$region0: #{wave_attn.1}
  #allocation0 [shape = 'u32[]', space=smem, size = 0x4, offset = 0x4, fixed_abs, tag = 'smem constant byte address 0x4 - core index']
  #allocation1 [shape = 'u32[72,128]{1,0:T(1,128)}', space=vmem, size = 0x9000, scoped, tag = 'internal scratch']
  %s0 = inlined_call_operand.vmem [shape: f32[2,4,256], index: 0, kind: input, shape index: {}]
  %s1 = inlined_call_operand.vmem [shape: f32[4,1], index: 1, kind: input, shape index: {}]
  %s2 = inlined_call_operand.vmem [shape: f32[100,1], index: 2, kind: input, shape index: {}]
  %s3 = inlined_call_operand.vmem [shape: f32[2,100,256], index: 3, kind: output, shape index: {}]
  %s4 = sld [smem:[#allocation0]]
  $region45: #{wave_attn.1} parent=0
    _
  %s6 = ssub.s32 1, %s4
  %s7 = scalar_select 0, %s6, %s4
  loop: start=0, step=1, limit=4
  $region2: #{wave_attn.1} parent=0 // loop_pre_header
    _
  $region3: #{wave_attn.1} parent=0 // loop_header
    %s9 = sphi 0, %s13
    %p10 = scmp.ge.s32.totalorder %s9, 4
    %s16 = sphi 0, %s28
    %s17 = sphi 0, %s24
    %s18 = sphi 0, %s16
    %s19 = sphi 0, %s17
    %s20 = sphi 0, %s18
    %s21 = sphi 0, %s19
    %s33 = sphi 0, %s35
    %s36 = sphi 0, %s33
    %s37 = sphi 0, %s36
    %s53 = sphi 0, %s37
    %s57 = sphi 0, %s57
    %s59 = sphi 0, %s57
    %s60 = sphi 0, %s59
    %s74 = sphi 0, %s60
    %s78 = sphi 0, %s78
    %s80 = sphi 0, %s78
    %s81 = sphi 0, %s80
    %s95 = sphi 0, %s81
    %s103 = sphi 0, %s105
    %s106 = sphi 0, %s103
    %s107 = sphi 0, %s106
    %s123 = sphi 0, %s107
  $region4: #{wave_attn.1} parent=0 // loop_header_branch
    %12 = sbr.rel (%p10) target = $region8
  $region5: #{wave_attn.1} parent=0 // loop_body
    %s14 = ssub.s32 %s9, 1
    %s15 = ssub.s32 %s9, 2
    %s22 = sadd.s32 1, %s17
    %p23 = scmp.ge.s32.totalorder %s22, 1
    %s24 = scalar_select %p23, 0, %s22
    %s25 = sadd.s32 1, %s16
    %s26 = scalar_select %p23, %s25, %s16
    %p27 = scmp.ge.s32.totalorder %s26, 2
    %s28 = scalar_select %p27, 0, %s26
    %s29 = ssub.s32 %s16, %s28
    %s30 = ssub.s32 %s17, %s24
    %s31 = sor.u32 %s29, %s30
    %p32 = scmp.eq.s32.totalorder %s31, 0
    %s34 = sadd.s32 %s33, 1
    %s35 = scalar_select %p32, %s33, %s34
    %p38 = pneg %p32
    %p39 = scmp.eq.s32.totalorder %s9, 1
    %p40 = por %p38, %p39
    %p41 = scmp.ne.s32.totalorder %s33, %s36
    %p42 = scmp.eq.s32.totalorder %s9, 0
    %p43 = por %p41, %p42
    %p44 = scmp.ne.s32.totalorder %s33, %s36
    %p45 = scmp.eq.s32.totalorder %s14, 1
    %p46 = por %p44, %p45
    %p47 = scmp.ne.s32.totalorder %s36, %s37
    %p48 = scmp.eq.s32.totalorder %s14, 0
    %p49 = por %p47, %p48
    %p50 = scmp.ne.s32.totalorder %s36, %s37
    %p51 = scmp.eq.s32.totalorder %s15, 1
    %p52 = por %p50, %p51
    %p54 = scmp.ne.s32.totalorder %s37, %s53
    %p55 = scmp.eq.s32.totalorder %s15, 0
    %p56 = por %p54, %p55
    %s58 = sadd.s32 %s57, 1
    %p61 = scmp.eq.s32.totalorder %s9, 1
    %p62 = scmp.ne.s32.totalorder %s57, %s59
    %p63 = scmp.eq.s32.totalorder %s9, 0
    %p64 = por %p62, %p63
    %p65 = scmp.ne.s32.totalorder %s57, %s59
    %p66 = scmp.eq.s32.totalorder %s14, 1
    %p67 = por %p65, %p66
    %p68 = scmp.ne.s32.totalorder %s59, %s60
    %p69 = scmp.eq.s32.totalorder %s14, 0
    %p70 = por %p68, %p69
    %p71 = scmp.ne.s32.totalorder %s59, %s60
    %p72 = scmp.eq.s32.totalorder %s15, 1
    %p73 = por %p71, %p72
    %p75 = scmp.ne.s32.totalorder %s60, %s74
    %p76 = scmp.eq.s32.totalorder %s15, 0
    %p77 = por %p75, %p76
    %s79 = sadd.s32 %s78, 1
    %p82 = scmp.eq.s32.totalorder %s9, 1
    %p83 = scmp.ne.s32.totalorder %s78, %s80
    %p84 = scmp.eq.s32.totalorder %s9, 0
    %p85 = por %p83, %p84
    %p86 = scmp.ne.s32.totalorder %s78, %s80
    %p87 = scmp.eq.s32.totalorder %s14, 1
    %p88 = por %p86, %p87
    %p89 = scmp.ne.s32.totalorder %s80, %s81
    %p90 = scmp.eq.s32.totalorder %s14, 0
    %p91 = por %p89, %p90
    %p92 = scmp.ne.s32.totalorder %s80, %s81
    %p93 = scmp.eq.s32.totalorder %s15, 1
    %p94 = por %p92, %p93
    %p96 = scmp.ne.s32.totalorder %s81, %s95
    %p97 = scmp.eq.s32.totalorder %s15, 0
    %p98 = por %p96, %p97
    %s99 = ssub.s32 %s16, %s28
    %s100 = ssub.s32 %s17, %s24
    %s101 = sor.u32 %s99, %s100
    %p102 = scmp.eq.s32.totalorder %s101, 0
    %s104 = sadd.s32 %s103, 1
    %s105 = scalar_select %p102, %s103, %s104
    %p108 = pneg %p102
    %p109 = scmp.eq.s32.totalorder %s9, 1
    %p110 = por %p108, %p109
    %p111 = scmp.ne.s32.totalorder %s103, %s106
    %p112 = scmp.eq.s32.totalorder %s9, 0
    %p113 = por %p111, %p112
    %p114 = scmp.ne.s32.totalorder %s103, %s106
    %p115 = scmp.eq.s32.totalorder %s14, 1
    %p116 = por %p114, %p115
    %p117 = scmp.ne.s32.totalorder %s106, %s107
    %p118 = scmp.eq.s32.totalorder %s14, 0
    %p119 = por %p117, %p118
    %p120 = scmp.ne.s32.totalorder %s106, %s107
    %p121 = scmp.eq.s32.totalorder %s15, 1
    %p122 = por %p120, %p121
    %p124 = scmp.ne.s32.totalorder %s107, %s123
    %p125 = scmp.eq.s32.totalorder %s15, 0
    %p126 = por %p124, %p125
    %p127 = scmp.le.s32.totalorder 1, %s9
    %p128 = scmp.lt.s32.totalorder %s9, 3
    %p129 = pnand %p127, %p128
    %p130 = pneg %p129
    // Predicated region
    $region9: #{wave_attn.1} parent=5 // pred_check
      _
    $region10: #{wave_attn.1} parent=5 // pred_check_branch
      %132 = sbr.rel (%p129) target = $region12
    $region11: #{wave_attn.1} parent=5 // pred_region
      %s133 = ssub.s32 %s9, 1
      // Predicated region
      $region13: #{wave_attn.1} parent=11 // pred_check
        %p134 = pneg %p70
      $region14: #{wave_attn.1} parent=11 // pred_check_branch
        %136 = sbr.rel (%p134) target = $region16
      $region15: #{wave_attn.1} parent=11 // pred_region
        _
      $region16: #{wave_attn.1} parent=11 // pred_fallthru
        _
      // Predicated region
      $region17: #{wave_attn.1} parent=11 // pred_check
        %p137 = pneg %p91
      $region18: #{wave_attn.1} parent=11 // pred_check_branch
        %139 = sbr.rel (%p137) target = $region20
      $region19: #{wave_attn.1} parent=11 // pred_region
        _
      $region20: #{wave_attn.1} parent=11 // pred_fallthru
        _
    $region12: #{wave_attn.1} parent=5 // pred_fallthru
      _
    %p140 = scmp.lt.s32.totalorder %s9, 2
    // Predicated region
    $region21: #{wave_attn.1} parent=5 // pred_check
      %p141 = pneg %p140
    $region22: #{wave_attn.1} parent=5 // pred_check_branch
      %143 = sbr.rel (%p141) target = $region24
    $region23: #{wave_attn.1} parent=5 // pred_region
      // Predicated region
      $region25: #{wave_attn.1} parent=23 // pred_check
        %p144 = pneg %p43
      $region26: #{wave_attn.1} parent=23 // pred_check_branch
        %146 = sbr.rel (%p144) target = $region28
      $region27: #{wave_attn.1} parent=23 // pred_region
        %s147 = smul.u32 2, %s17
        %p148 = scmp.lt.s32.totalorder %s16, 1
        %s149 = scalar_select %p148, %s16, 1
        %p150 = scmp.lt.s32.totalorder %s147, 1
        %s151 = scalar_select %p150, %s147, 1
        %s152 = smul.addr %s149, 2
        %s153 = sadd.s32 %s151, %s152
        %s154 = smul.addr %s153, 4
        %s155 = scalar_lea.vmem %s0, %s154
        %s156 = smul.u32 2, %s17
      $region28: #{wave_attn.1} parent=23 // pred_fallthru
        _
    $region24: #{wave_attn.1} parent=5 // pred_fallthru
      _
    %p157 = scmp.le.s32.totalorder 1, %s9
    %p158 = scmp.lt.s32.totalorder %s9, 3
    %p159 = pnand %p157, %p158
    %p160 = pneg %p159
    // Predicated region
    $region29: #{wave_attn.1} parent=5 // pred_check
      _
    $region30: #{wave_attn.1} parent=5 // pred_check_branch
      %162 = sbr.rel (%p159) target = $region32
    $region31: #{wave_attn.1} parent=5 // pred_region
      %s163 = ssub.s32 %s9, 1
      %s164 = smul.u32 2, %s19
      %p165 = scmp.lt.s32.totalorder %s18, 1
      %s166 = scalar_select %p165, %s18, 1
      %p167 = scmp.lt.s32.totalorder %s164, 1
      %s168 = scalar_select %p167, %s164, 1
      %s169 = smul.addr %s166, 2
      %s170 = sadd.s32 %s168, %s169
      %s171 = smul.addr %s170, 4
      %s172 = scalar_lea.vmem %s0, %s171
      %p173 = pneg %p49
      %p174 = pneg %p46
      %p175 = pneg %p70
      %p176 = pneg %p67
      %p177 = pneg %p91
      %p178 = pneg %p88
      %p179 = pneg %p119
      %p180 = pneg %p116
      %s181 = smul.u32 2, %s19
      %p182 = scmp.lt.s32.totalorder %s18, 1
      %s183 = scalar_select %p182, %s18, 1
      %p184 = scmp.lt.s32.totalorder %s181, 1
      %s185 = scalar_select %p184, %s181, 1
      %s186 = smul.addr %s183, 26
      %s187 = sadd.s32 %s185, %s186
      %s188 = smul.addr %s187, 8
      %s189 = scalar_lea.vmem %s3, %s188
      %s190 = smul.u32 2, %s19
      %p191 = scmp.lt.s32.totalorder %s18, 1
      %s192 = scalar_select %p191, %s18, 1
      %p193 = scmp.lt.s32.totalorder %s190, 1
      %s194 = scalar_select %p193, %s190, 1
      %s195 = smul.addr %s192, 2
      %s196 = sadd.s32 %s194, %s195
      %s197 = smul.addr %s196, 4
      %s198 = scalar_lea.vmem %s0, %s197
      %s199 = smul.u32 2, %s19
      %s200 = smul.u32 2, %s19
      %p201 = scmp.lt.s32.totalorder %s18, 1
      %s202 = scalar_select %p201, %s18, 1
      %p203 = scmp.lt.s32.totalorder %s200, 1
      %s204 = scalar_select %p203, %s200, 1
      %s205 = smul.addr %s202, 26
      %s206 = sadd.s32 %s204, %s205
      %s207 = smul.addr %s206, 8
      %s208 = scalar_lea.vmem %s3, %s207
      %s209 = smul.u32 2, %s19
      %v210 = vld [vmem:[%s198] sm:$0xff]
      %v211 = vld [vmem:[%s1] sm:$0xf]
      %213 = vset.pattern.permute.xlu0 0
      %214 = vperm.xlu0 %213, %v211
      %v215 = vpop.permute.xlu0 %214
      %v217 = vunpack.c.l.s4 839922192
      %v218 = vunpack.c.0.s8 %v217
      %v219 = vperm.slane %v215, %v218
      %v221 = vmul.f32 %v210, %v219
      %223 = vst [vmem:[#allocation1] ss:$2 sm:$0xff] %v221
      %v224 = vld.sshfl [vmem:[#allocation1] sm:$0xff pattern:$0x75316420]
      %v225 = vld.sshfl [vmem:[#allocation1 + $0x8] sm:$0xff pattern:$0x75316420]
      %vm228 = vcmask 1043456
      %v229 = vsel %vm228, %v224, 0.0
      %v230 = vrot.slane %v229, 4
      %v231 = vadd.f32 %v229, %v230
      %v232 = vrot.slane %v231, 2
      %v233 = vadd.f32 %v231, %v232
      %v234 = vrot.slane %v233, 1
      %v235 = vadd.f32 %v233, %v234
      %v236 = vsel %vm228, %v225, 0.0
      %v237 = vrot.slane %v236, 4
      %v238 = vadd.f32 %v236, %v237
      %v239 = vrot.slane %v238, 2
      %v240 = vadd.f32 %v238, %v239
      %v241 = vrot.slane %v240, 1
      %v242 = vadd.f32 %v240, %v241
      %v243 = vld [vmem:[%s2] sm:$0xff]
      %v244 = vld [vmem:[%s2 + $0x8] sm:$0xff]
      %v245 = vld [vmem:[%s2 + $0x10] sm:$0xff]
      %v246 = vld [vmem:[%s2 + $0x18] sm:$0xff]
      %v247 = vld [vmem:[%s2 + $0x20] sm:$0xff]
      %v248 = vld [vmem:[%s2 + $0x28] sm:$0xff]
      %v249 = vld [vmem:[%s2 + $0x30] sm:$0xff]
      %v250 = vld [vmem:[%s2 + $0x38] sm:$0xff]
      %v251 = vld [vmem:[%s2 + $0x40] sm:$0xff]
      %v252 = vld [vmem:[%s2 + $0x48] sm:$0xff]
      %v253 = vld [vmem:[%s2 + $0x50] sm:$0xff]
      %v254 = vld [vmem:[%s2 + $0x58] sm:$0xff]
      %v255 = vld [vmem:[%s2 + $0x60] sm:$0xf]
      %257 = vset.pattern.permute.xlu0 0
      %258 = vperm.xlu0 %257, %v243
      %v259 = vpop.permute.xlu0 %258
      %262 = vset.pattern.permute.xlu0 0
      %263 = vperm.xlu0 %262, %v244
      %v264 = vpop.permute.xlu0 %263
      %267 = vset.pattern.permute.xlu0 0
      %268 = vperm.xlu0 %267, %v245
      %v269 = vpop.permute.xlu0 %268
      %272 = vset.pattern.permute.xlu0 0
      %273 = vperm.xlu0 %272, %v246
      %v274 = vpop.permute.xlu0 %273
      %277 = vset.pattern.permute.xlu0 0
      %278 = vperm.xlu0 %277, %v247
      %v279 = vpop.permute.xlu0 %278
      %282 = vset.pattern.permute.xlu0 0
      %283 = vperm.xlu0 %282, %v248
      %v284 = vpop.permute.xlu0 %283
      %287 = vset.pattern.permute.xlu0 0
      %288 = vperm.xlu0 %287, %v249
      %v289 = vpop.permute.xlu0 %288
      %292 = vset.pattern.permute.xlu0 0
      %293 = vperm.xlu0 %292, %v250
      %v294 = vpop.permute.xlu0 %293
      %297 = vset.pattern.permute.xlu0 0
      %298 = vperm.xlu0 %297, %v251
      %v299 = vpop.permute.xlu0 %298
      %302 = vset.pattern.permute.xlu0 0
      %303 = vperm.xlu0 %302, %v252
      %v304 = vpop.permute.xlu0 %303
      %307 = vset.pattern.permute.xlu0 0
      %308 = vperm.xlu0 %307, %v253
      %v309 = vpop.permute.xlu0 %308
      %312 = vset.pattern.permute.xlu0 0
      %313 = vperm.xlu0 %312, %v254
      %v314 = vpop.permute.xlu0 %313
      %317 = vset.pattern.permute.xlu0 0
      %318 = vperm.xlu0 %317, %v255
      %v319 = vpop.permute.xlu0 %318
      %v321 = vmul.f32 %v259, %v235
      %v322 = vmul.f32 %v259, %v242
      %v323 = vmul.f32 %v264, %v235
      %v324 = vmul.f32 %v264, %v242
      %v325 = vmul.f32 %v269, %v235
      %v326 = vmul.f32 %v269, %v242
      %v327 = vmul.f32 %v274, %v235
      %v328 = vmul.f32 %v274, %v242
      %v329 = vmul.f32 %v279, %v235
      %v330 = vmul.f32 %v279, %v242
      %v331 = vmul.f32 %v284, %v235
      %v332 = vmul.f32 %v284, %v242
      %v333 = vmul.f32 %v289, %v235
      %v334 = vmul.f32 %v289, %v242
      %v335 = vmul.f32 %v294, %v235
      %v336 = vmul.f32 %v294, %v242
      %v337 = vmul.f32 %v299, %v235
      %v338 = vmul.f32 %v299, %v242
      %v339 = vmul.f32 %v304, %v235
      %v340 = vmul.f32 %v304, %v242
      %v341 = vmul.f32 %v309, %v235
      %v342 = vmul.f32 %v309, %v242
      %v343 = vmul.f32 %v314, %v235
      %v344 = vmul.f32 %v314, %v242
      %v345 = vmul.f32 %v319, %v235
      %v346 = vmul.f32 %v319, %v242
      %v347 = vand.u32 2147483647, %v321
      %vm348 = vcmp.le.f32.partialorder %v347, 0.7853982
      %vm349 = vcmp.lt.s32.totalorder %v321, 0
      %v350 = vand.u32 %v321, 2139095040
      %v351 = vshrl.u32 %v350, 23
      %v352 = vsub.s32 %v351, 127
      %v353 = vand.u32 2147483647, %v321
      %v354 = vand.u32 %v353, 8388607
      %v355 = vor.u32 %v354, 8388608
      %v356 = vsub.s32 0, %v355
      %v357 = vadd.s32 %v352, 1
      %vm358 = vcmp.gt.s32.totalorder %v357, 0
      %v359 = vsel %vm358, %v357, 0
      %v360 = vshrl.u32 %v359, 5
      %v361 = vand.u32 %v359, 31
      %v362 = vsub.s32 32, %v361
      %v363 = vshrl.u32 683565275, %v362
      %v364 = vshll.u32 683565275, %v361
      %v365 = vshrl.u32 2475754826, %v362
      %v366 = vor.u32 %v364, %v365
      %v367 = vshll.u32 2475754826, %v361
      %v368 = vshrl.u32 2131351028, %v362
      %v369 = vor.u32 %v367, %v368
      %v370 = vshll.u32 2131351028, %v361
      %v371 = vshrl.u32 2102212464, %v362
      %v372 = vor.u32 %v370, %v371
      %v373 = vshll.u32 2102212464, %v361
      %v374 = vshrl.u32 920167782, %v362
      %v375 = vor.u32 %v373, %v374
      %v376 = vshll.u32 920167782, %v361
      %v377 = vshrl.u32 1326507024, %v362
      %v378 = vor.u32 %v376, %v377
      %vm379 = vcmp.lt.s32.totalorder %v360, 1
      %vm380 = vcmp.lt.s32.totalorder %v360, 2
      %vm381 = vcmp.lt.s32.totalorder %v360, 3
      %vm382 = vcmp.lt.s32.totalorder %v360, 4
      %v383 = vsel %vm379, %v363, %v366
      %v384 = vsel %vm382, %v372, 2102212464
      %v385 = vsel %vm381, %v369, %v384
      %v386 = vsel %vm380, %v383, %v385
      %v387 = vsel %vm379, %v366, %v369
      %v388 = vsel %vm382, %v375, 920167782
      %v389 = vsel %vm381, %v372, %v388
      %v390 = vsel %vm380, %v387, %v389
      %v391 = vsel %vm379, %v369, %v372
      %v392 = vsel %vm382, %v378, 1326507024
      %v393 = vsel %vm381, %v375, %v392
      %v394 = vsel %vm380, %v391, %v393
      %v395 = vshll.u32 %v355, 8
      %v396 = vand.u32 %v395, 65535
      %v397 = vshrl.u32 %v395, 16
      %v398 = vand.u32 %v394, 65535
      %v399 = vshrl.u32 %v394, 16
      %v400 = vmul.u32 %v396, %v398
      %v401 = vmul.u32 %v396, %v399
      %v402 = vmul.u32 %v397, %v398
      %v403 = vmul.u32 %v397, %v399
      %v404 = vshll.u32 %v401, 16
      %v405 = vshrl.u32 %v401, 16
      %v406 = vshll.u32 %v402, 16
      %v407 = vshrl.u32 %v402, 16
      %vm408 = vc.u32 %v400, %v404
      %v409 = vsel %vm408, 1, 0
      %v410 = vadd.s32 %v400, %v404
      %v411 = vadd.s32 %v403, %v409
      %vm412 = vc.u32 %v410, %v406
      %v413 = vsel %vm412, 1, 0
      %v414 = vadd.s32 %v410, %v406
      %v415 = vadd.s32 %v411, %v413
      %v416 = vadd.s32 %v415, %v405
      %v417 = vadd.s32 %v416, %v407
      %v418 = vand.u32 %v395, 65535
      %v419 = vshrl.u32 %v395, 16
      %v420 = vand.u32 %v390, 65535
      %v421 = vshrl.u32 %v390, 16
      %v422 = vmul.u32 %v418, %v420
      %v423 = vmul.u32 %v418, %v421
      %v424 = vmul.u32 %v419, %v420
      %v425 = vmul.u32 %v419, %v421
      %v426 = vshll.u32 %v423, 16
      %v427 = vshrl.u32 %v423, 16
      %v428 = vshll.u32 %v424, 16
      %v429 = vshrl.u32 %v424, 16
      %vm430 = vc.u32 %v422, %v426
      %v431 = vsel %vm430, 1, 0
      %v432 = vadd.s32 %v422, %v426
      %v433 = vadd.s32 %v425, %v431
      %vm434 = vc.u32 %v432, %v428
      %v435 = vsel %vm434, 1, 0
      %v436 = vadd.s32 %v432, %v428
      %v437 = vadd.s32 %v433, %v435
      %v438 = vadd.s32 %v437, %v427
      %v439 = vadd.s32 %v438, %v429
      %v440 = vmul.u32 %v395, %v386
      %v441 = vadd.s32 %v417, %v436
      %vm442 = vc.u32 %v417, %v436
      %v443 = vadd.s32 %v439, 1
      %v444 = vsel %vm442, %v443, %v439
      %v445 = vadd.s32 %v440, %v444
      %v446 = vadd.s32 %v445, 536870912
      %v447 = vshrl.u32 %v446, 30
      %v448 = vshll.u32 %v447, 30
      %v449 = vsub.s32 %v445, %v448
      %vm450 = vcmp.lt.s32.totalorder %v449, 0
      %v451 = vsub.s32 0, %v449
      %v452 = vsel %vm450, %v451, %v449
      %v453 = vclz %v452
      %v454 = vsub.s32 %v453, 2
      %vm455 = vcmp.gt.s32.totalorder 0, %v454
      %v456 = vsel %vm455, 0, %v454
      %v457 = vsub.s32 32, %v456
      %v458 = vshll.u32 %v449, %v456
      %v459 = vshrl.u32 %v441, %v457
      %v460 = vor.u32 %v458, %v459
      %v461 = vsub.s32 4294967266, %v456
      %v462 = vadd.s32 %v461, 127
      %v463 = vshll.u32 %v462, 23
      %v464 = vor.u32 4788187, %v463
      %v465 = vand.u32 2147483647, %v464
      %v467 = vcvt.s32.f32 %v460
      %v468 = vmul.f32 %v467, %v465
      %v469 = vxor.u32 %v468, 2147483648
      %v470 = vsel %vm349, %v469, %v468
      %v471 = vsub.s32 4, %v447
      %v472 = vsel %vm349, %v471, %v447
      %v473 = vsel %vm348, %v321, %v470
      %v474 = vsel %vm348, 0, %v472
      %v475 = vmul.f32 %v473, %v473
      %v476 = vmul.f32 %v475, -0.001358992
      %v477 = vadd.f32 %v476, 0.041655596
      %v478 = vmul.f32 %v475, %v477
      %v479 = vadd.f32 %v478, -0.4999988
      %v480 = vmul.f32 %v475, %v479
      %v481 = vadd.f32 1.0, %v480
      %v482 = vmul.f32 %v473, %v473
      %v483 = vmul.f32 %v482, -0.00019511016
      %v484 = vadd.f32 %v483, 0.008332121
      %v485 = vmul.f32 %v482, %v484
      %v486 = vadd.f32 %v485, -0.16666654
      %v487 = vmul.f32 %v482, %v486
      %v488 = vadd.f32 %v487, 1.0
      %v489 = vmul.f32 %v488, %v473
      %vm490 = vweird.f32 %v321
      %v491 = vadd.s32 %v474, 3
      %v492 = vand.u32 %v491, 3
      %vm493 = vcmp.lt.s32.totalorder %v492, 2
      %vm494 = vcmp.eq.s32.totalorder %v492, 0
      %v495 = vxor.u32 %v489, 2147483648
      %v496 = vsel %vm494, %v481, %v495
      %vm497 = vcmp.eq.s32.totalorder %v492, 2
      %v498 = vxor.u32 %v481, 2147483648
      %v499 = vsel %vm497, %v498, %v489
      %v500 = vsel %vm493, %v496, %v499
      %v501 = vsel %vm490, nan, %v500
      %v502 = vand.u32 2147483647, %v322
      %vm503 = vcmp.le.f32.partialorder %v502, 0.7853982
      %vm504 = vcmp.lt.s32.totalorder %v322, 0
      %v505 = vand.u32 %v322, 2139095040
      %v506 = vshrl.u32 %v505, 23
      %v507 = vsub.s32 %v506, 127
      %v508 = vand.u32 2147483647, %v322
      %v509 = vand.u32 %v508, 8388607
      %v510 = vor.u32 %v509, 8388608
      %v511 = vsub.s32 0, %v510
      %v512 = vadd.s32 %v507, 1
      %vm513 = vcmp.gt.s32.totalorder %v512, 0
      %v514 = vsel %vm513, %v512, 0
      %v515 = vshrl.u32 %v514, 5
      %v516 = vand.u32 %v514, 31
      %v517 = vsub.s32 32, %v516
      %v518 = vshrl.u32 683565275, %v517
      %v519 = vshll.u32 683565275, %v516
      %v520 = vshrl.u32 2475754826, %v517
      %v521 = vor.u32 %v519, %v520
      %v522 = vshll.u32 2475754826, %v516
      %v523 = vshrl.u32 2131351028, %v517
      %v524 = vor.u32 %v522, %v523
      %v525 = vshll.u32 2131351028, %v516
      %v526 = vshrl.u32 2102212464, %v517
      %v527 = vor.u32 %v525, %v526
      %v528 = vshll.u32 2102212464, %v516
      %v529 = vshrl.u32 920167782, %v517
      %v530 = vor.u32 %v528, %v529
      %v531 = vshll.u32 920167782, %v516
      %v532 = vshrl.u32 1326507024, %v517
      %v533 = vor.u32 %v531, %v532
      %vm534 = vcmp.lt.s32.totalorder %v515, 1
      %vm535 = vcmp.lt.s32.totalorder %v515, 2
      %vm536 = vcmp.lt.s32.totalorder %v515, 3
      %vm537 = vcmp.lt.s32.totalorder %v515, 4
      %v538 = vsel %vm534, %v518, %v521
      %v539 = vsel %vm537, %v527, 2102212464
      %v540 = vsel %vm536, %v524, %v539
      %v541 = vsel %vm535, %v538, %v540
      %v542 = vsel %vm534, %v521, %v524
      %v543 = vsel %vm537, %v530, 920167782
      %v544 = vsel %vm536, %v527, %v543
      %v545 = vsel %vm535, %v542, %v544
      %v546 = vsel %vm534, %v524, %v527
      %v547 = vsel %vm537, %v533, 1326507024
      %v548 = vsel %vm536, %v530, %v547
      %v549 = vsel %vm535, %v546, %v548
      %v550 = vshll.u32 %v510, 8
      %v551 = vand.u32 %v550, 65535
      %v552 = vshrl.u32 %v550, 16
      %v553 = vand.u32 %v549, 65535
      %v554 = vshrl.u32 %v549, 16
      %v555 = vmul.u32 %v551, %v553
      %v556 = vmul.u32 %v551, %v554
      %v557 = vmul.u32 %v552, %v553
      %v558 = vmul.u32 %v552, %v554
      %v559 = vshll.u32 %v556, 16
      %v560 = vshrl.u32 %v556, 16
      %v561 = vshll.u32 %v557, 16
      %v562 = vshrl.u32 %v557, 16
      %vm563 = vc.u32 %v555, %v559
      %v564 = vsel %vm563, 1, 0
      %v565 = vadd.s32 %v555, %v559
      %v566 = vadd.s32 %v558, %v564
      %vm567 = vc.u32 %v565, %v561
      %v568 = vsel %vm567, 1, 0
      %v569 = vadd.s32 %v565, %v561
      %v570 = vadd.s32 %v566, %v568
      %v571 = vadd.s32 %v570, %v560
      %v572 = vadd.s32 %v571, %v562
      %v573 = vand.u32 %v550, 65535
      %v574 = vshrl.u32 %v550, 16
      %v575 = vand.u32 %v545, 65535
      %v576 = vshrl.u32 %v545, 16
      %v577 = vmul.u32 %v573, %v575
      %v578 = vmul.u32 %v573, %v576
      %v579 = vmul.u32 %v574, %v575
      %v580 = vmul.u32 %v574, %v576
      %v581 = vshll.u32 %v578, 16
      %v582 = vshrl.u32 %v578, 16
      %v583 = vshll.u32 %v579, 16
      %v584 = vshrl.u32 %v579, 16
      %vm585 = vc.u32 %v577, %v581
      %v586 = vsel %vm585, 1, 0
      %v587 = vadd.s32 %v577, %v581
      %v588 = vadd.s32 %v580, %v586
      %vm589 = vc.u32 %v587, %v583
      %v590 = vsel %vm589, 1, 0
      %v591 = vadd.s32 %v587, %v583
      %v592 = vadd.s32 %v588, %v590
      %v593 = vadd.s32 %v592, %v582
      %v594 = vadd.s32 %v593, %v584
      %v595 = vmul.u32 %v550, %v541
      %v596 = vadd.s32 %v572, %v591
      %vm597 = vc.u32 %v572, %v591
      %v598 = vadd.s32 %v594, 1
      %v599 = vsel %vm597, %v598, %v594
      %v600 = vadd.s32 %v595, %v599
      %v601 = vadd.s32 %v600, 536870912
      %v602 = vshrl.u32 %v601, 30
      %v603 = vshll.u32 %v602, 30
      %v604 = vsub.s32 %v600, %v603
      %vm605 = vcmp.lt.s32.totalorder %v604, 0
      %v606 = vsub.s32 0, %v604
      %v607 = vsel %vm605, %v606, %v604
      %v608 = vclz %v607
      %v609 = vsub.s32 %v608, 2
      %vm610 = vcmp.gt.s32.totalorder 0, %v609
      %v611 = vsel %vm610, 0, %v609
      %v612 = vsub.s32 32, %v611
      %v613 = vshll.u32 %v604, %v611
      %v614 = vshrl.u32 %v596, %v612
      %v615 = vor.u32 %v613, %v614
      %v616 = vsub.s32 4294967266, %v611
      %v617 = vadd.s32 %v616, 127
      %v618 = vshll.u32 %v617, 23
      %v619 = vor.u32 4788187, %v618
      %v620 = vand.u32 2147483647, %v619
      %v622 = vcvt.s32.f32 %v615
      %v623 = vmul.f32 %v622, %v620
      %v624 = vxor.u32 %v623, 2147483648
      %v625 = vsel %vm504, %v624, %v623
      %v626 = vsub.s32 4, %v602
      %v627 = vsel %vm504, %v626, %v602
      %v628 = vsel %vm503, %v322, %v625
      %v629 = vsel %vm503, 0, %v627
      %v630 = vmul.f32 %v628, %v628
      %v631 = vmul.f32 %v630, -0.001358992
      %v632 = vadd.f32 %v631, 0.041655596
      %v633 = vmul.f32 %v630, %v632
      %v634 = vadd.f32 %v633, -0.4999988
      %v635 = vmul.f32 %v630, %v634
      %v636 = vadd.f32 1.0, %v635
      %v637 = vmul.f32 %v628, %v628
      %v638 = vmul.f32 %v637, -0.00019511016
      %v639 = vadd.f32 %v638, 0.008332121
      %v640 = vmul.f32 %v637, %v639
      %v641 = vadd.f32 %v640, -0.16666654
      %v642 = vmul.f32 %v637, %v641
      %v643 = vadd.f32 %v642, 1.0
      %v644 = vmul.f32 %v643, %v628
      %vm645 = vweird.f32 %v322
      %v646 = vadd.s32 %v629, 3
      %v647 = vand.u32 %v646, 3
      %vm648 = vcmp.lt.s32.totalorder %v647, 2
      %vm649 = vcmp.eq.s32.totalorder %v647, 0
      %v650 = vxor.u32 %v644, 2147483648
      %v651 = vsel %vm649, %v636, %v650
      %vm652 = vcmp.eq.s32.totalorder %v647, 2
      %v653 = vxor.u32 %v636, 2147483648
      %v654 = vsel %vm652, %v653, %v644
      %v655 = vsel %vm648, %v651, %v654
      %v656 = vsel %vm645, nan, %v655
      %v657 = vand.u32 2147483647, %v323
      %vm658 = vcmp.le.f32.partialorder %v657, 0.7853982
      %vm659 = vcmp.lt.s32.totalorder %v323, 0
      %v660 = vand.u32 %v323, 2139095040
      %v661 = vshrl.u32 %v660, 23
      %v662 = vsub.s32 %v661, 127
      %v663 = vand.u32 2147483647, %v323
      %v664 = vand.u32 %v663, 8388607
      %v665 = vor.u32 %v664, 8388608
      %v666 = vsub.s32 0, %v665
      %v667 = vadd.s32 %v662, 1
      %vm668 = vcmp.gt.s32.totalorder %v667, 0
      %v669 = vsel %vm668, %v667, 0
      %v670 = vshrl.u32 %v669, 5
      %v671 = vand.u32 %v669, 31
      %v672 = vsub.s32 32, %v671
      %v673 = vshrl.u32 683565275, %v672
      %v674 = vshll.u32 683565275, %v671
      %v675 = vshrl.u32 2475754826, %v672
      %v676 = vor.u32 %v674, %v675
      %v677 = vshll.u32 2475754826, %v671
      %v678 = vshrl.u32 2131351028, %v672
      %v679 = vor.u32 %v677, %v678
      %v680 = vshll.u32 2131351028, %v671
      %v681 = vshrl.u32 2102212464, %v672
      %v682 = vor.u32 %v680, %v681
      %v683 = vshll.u32 2102212464, %v671
      %v684 = vshrl.u32 920167782, %v672
      %v685 = vor.u32 %v683, %v684
      %v686 = vshll.u32 920167782, %v671
      %v687 = vshrl.u32 1326507024, %v672
      %v688 = vor.u32 %v686, %v687
      %vm689 = vcmp.lt.s32.totalorder %v670, 1
      %vm690 = vcmp.lt.s32.totalorder %v670, 2
      %vm691 = vcmp.lt.s32.totalorder %v670, 3
      %vm692 = vcmp.lt.s32.totalorder %v670, 4
      %v693 = vsel %vm689, %v673, %v676
      %v694 = vsel %vm692, %v682, 2102212464
      %v695 = vsel %vm691, %v679, %v694
      %v696 = vsel %vm690, %v693, %v695
      %v697 = vsel %vm689, %v676, %v679
      %v698 = vsel %vm692, %v685, 920167782
      %v699 = vsel %vm691, %v682, %v698
      %v700 = vsel %vm690, %v697, %v699
      %v701 = vsel %vm689, %v679, %v682
      %v702 = vsel %vm692, %v688, 1326507024
      %v703 = vsel %vm691, %v685, %v702
      %v704 = vsel %vm690, %v701, %v703
      %v705 = vshll.u32 %v665, 8
      %v706 = vand.u32 %v705, 65535
      %v707 = vshrl.u32 %v705, 16
      %v708 = vand.u32 %v704, 65535
      %v709 = vshrl.u32 %v704, 16
      %v710 = vmul.u32 %v706, %v708
      %v711 = vmul.u32 %v706, %v709
      %v712 = vmul.u32 %v707, %v708
      %v713 = vmul.u32 %v707, %v709
      %v714 = vshll.u32 %v711, 16
      %v715 = vshrl.u32 %v711, 16
      %v716 = vshll.u32 %v712, 16
      %v717 = vshrl.u32 %v712, 16
      %vm718 = vc.u32 %v710, %v714
      %v719 = vsel %vm718, 1, 0
      %v720 = vadd.s32 %v710, %v714
      %v721 = vadd.s32 %v713, %v719
      %vm722 = vc.u32 %v720, %v716
      %v723 = vsel %vm722, 1, 0
      %v724 = vadd.s32 %v720, %v716
      %v725 = vadd.s32 %v721, %v723
      %v726 = vadd.s32 %v725, %v715
      %v727 = vadd.s32 %v726, %v717
      %v728 = vand.u32 %v705, 65535
      %v729 = vshrl.u32 %v705, 16
      %v730 = vand.u32 %v700, 65535
      %v731 = vshrl.u32 %v700, 16
      %v732 = vmul.u32 %v728, %v730
      %v733 = vmul.u32 %v728, %v731
      %v734 = vmul.u32 %v729, %v730
      %v735 = vmul.u32 %v729, %v731
      %v736 = vshll.u32 %v733, 16
      %v737 = vshrl.u32 %v733, 16
      %v738 = vshll.u32 %v734, 16
      %v739 = vshrl.u32 %v734, 16
      %vm740 = vc.u32 %v732, %v736
      %v741 = vsel %vm740, 1, 0
      %v742 = vadd.s32 %v732, %v736
      %v743 = vadd.s32 %v735, %v741
      %vm744 = vc.u32 %v742, %v738
      %v745 = vsel %vm744, 1, 0
      %v746 = vadd.s32 %v742, %v738
      %v747 = vadd.s32 %v743, %v745
      %v748 = vadd.s32 %v747, %v737
      %v749 = vadd.s32 %v748, %v739
      %v750 = vmul.u32 %v705, %v696
      %v751 = vadd.s32 %v727, %v746
      %vm752 = vc.u32 %v727, %v746
      %v753 = vadd.s32 %v749, 1
      %v754 = vsel %vm752, %v753, %v749
      %v755 = vadd.s32 %v750, %v754
      %v756 = vadd.s32 %v755, 536870912
      %v757 = vshrl.u32 %v756, 30
      %v758 = vshll.u32 %v757, 30
      %v759 = vsub.s32 %v755, %v758
      %vm760 = vcmp.lt.s32.totalorder %v759, 0
      %v761 = vsub.s32 0, %v759
      %v762 = vsel %vm760, %v761, %v759
      %v763 = vclz %v762
      %v764 = vsub.s32 %v763, 2
      %vm765 = vcmp.gt.s32.totalorder 0, %v764
      %v766 = vsel %vm765, 0, %v764
      %v767 = vsub.s32 32, %v766
      %v768 = vshll.u32 %v759, %v766
      %v769 = vshrl.u32 %v751, %v767
      %v770 = vor.u32 %v768, %v769
      %v771 = vsub.s32 4294967266, %v766
      %v772 = vadd.s32 %v771, 127
      %v773 = vshll.u32 %v772, 23
      %v774 = vor.u32 4788187, %v773
      %v775 = vand.u32 2147483647, %v774
      %v777 = vcvt.s32.f32 %v770
      %v778 = vmul.f32 %v777, %v775
      %v779 = vxor.u32 %v778, 2147483648
      %v780 = vsel %vm659, %v779, %v778
      %v781 = vsub.s32 4, %v757
      %v782 = vsel %vm659, %v781, %v757
      %v783 = vsel %vm658, %v323, %v780
      %v784 = vsel %vm658, 0, %v782
      %v785 = vmul.f32 %v783, %v783
      %v786 = vmul.f32 %v785, -0.001358992
      %v787 = vadd.f32 %v786, 0.041655596
      %v788 = vmul.f32 %v785, %v787
      %v789 = vadd.f32 %v788, -0.4999988
      %v790 = vmul.f32 %v785, %v789
      %v791 = vadd.f32 1.0, %v790
      %v792 = vmul.f32 %v783, %v783
      %v793 = vmul.f32 %v792, -0.00019511016
      %v794 = vadd.f32 %v793, 0.008332121
      %v795 = vmul.f32 %v792, %v794
      %v796 = vadd.f32 %v795, -0.16666654
      %v797 = vmul.f32 %v792, %v796
      %v798 = vadd.f32 %v797, 1.0
      %v799 = vmul.f32 %v798, %v783
      %vm800 = vweird.f32 %v323
      %v801 = vadd.s32 %v784, 3
      %v802 = vand.u32 %v801, 3
      %vm803 = vcmp.lt.s32.totalorder %v802, 2
      %vm804 = vcmp.eq.s32.totalorder %v802, 0
      %v805 = vxor.u32 %v799, 2147483648
      %v806 = vsel %vm804, %v791, %v805
      %vm807 = vcmp.eq.s32.totalorder %v802, 2
      %v808 = vxor.u32 %v791, 2147483648
      %v809 = vsel %vm807, %v808, %v799
      %v810 = vsel %vm803, %v806, %v809
      %v811 = vsel %vm800, nan, %v810
      %v812 = vand.u32 2147483647, %v324
      %vm813 = vcmp.le.f32.partialorder %v812, 0.7853982
      %vm814 = vcmp.lt.s32.totalorder %v324, 0
      %v815 = vand.u32 %v324, 2139095040
      %v816 = vshrl.u32 %v815, 23
      %v817 = vsub.s32 %v816, 127
      %v818 = vand.u32 2147483647, %v324
      %v819 = vand.u32 %v818, 8388607
      %v820 = vor.u32 %v819, 8388608
      %v821 = vsub.s32 0, %v820
      %v822 = vadd.s32 %v817, 1
      %vm823 = vcmp.gt.s32.totalorder %v822, 0
      %v824 = vsel %vm823, %v822, 0
      %v825 = vshrl.u32 %v824, 5
      %v826 = vand.u32 %v824, 31
      %v827 = vsub.s32 32, %v826
      %v828 = vshrl.u32 683565275, %v827
      %v829 = vshll.u32 683565275, %v826
      %v830 = vshrl.u32 2475754826, %v827
      %v831 = vor.u32 %v829, %v830
      %v832 = vshll.u32 2475754826, %v826
      %v833 = vshrl.u32 2131351028, %v827
      %v834 = vor.u32 %v832, %v833
      %v835 = vshll.u32 2131351028, %v826
      %v836 = vshrl.u32 2102212464, %v827
      %v837 = vor.u32 %v835, %v836
      %v838 = vshll.u32 2102212464, %v826
      %v839 = vshrl.u32 920167782, %v827
      %v840 = vor.u32 %v838, %v839
      %v841 = vshll.u32 920167782, %v826
      %v842 = vshrl.u32 1326507024, %v827
      %v843 = vor.u32 %v841, %v842
      %vm844 = vcmp.lt.s32.totalorder %v825, 1
      %vm845 = vcmp.lt.s32.totalorder %v825, 2
      %vm846 = vcmp.lt.s32.totalorder %v825, 3
      %vm847 = vcmp.lt.s32.totalorder %v825, 4
      %v848 = vsel %vm844, %v828, %v831
      %v849 = vsel %vm847, %v837, 2102212464
      %v850 = vsel %vm846, %v834, %v849
      %v851 = vsel %vm845, %v848, %v850
      %v852 = vsel %vm844, %v831, %v834
      %v853 = vsel %vm847, %v840, 920167782
      %v854 = vsel %vm846, %v837, %v853
      %v855 = vsel %vm845, %v852, %v854
      %v856 = vsel %vm844, %v834, %v837
      %v857 = vsel %vm847, %v843, 1326507024
      %v858 = vsel %vm846, %v840, %v857
      %v859 = vsel %vm845, %v856, %v858
      %v860 = vshll.u32 %v820, 8
      %v861 = vand.u32 %v860, 65535
      %v862 = vshrl.u32 %v860, 16
      %v863 = vand.u32 %v859, 65535
      %v864 = vshrl.u32 %v859, 16
      %v865 = vmul.u32 %v861, %v863
      %v866 = vmul.u32 %v861, %v864
      %v867 = vmul.u32 %v862, %v863
      %v868 = vmul.u32 %v862, %v864
      %v869 = vshll.u32 %v866, 16
      %v870 = vshrl.u32 %v866, 16
      %v871 = vshll.u32 %v867, 16
      %v872 = vshrl.u32 %v867, 16
      %vm873 = vc.u32 %v865, %v869
      %v874 = vsel %vm873, 1, 0
      %v875 = vadd.s32 %v865, %v869
      %v876 = vadd.s32 %v868, %v874
      %vm877 = vc.u32 %v875, %v871
      %v878 = vsel %vm877, 1, 0
      %v879 = vadd.s32 %v875, %v871
      %v880 = vadd.s32 %v876, %v878
      %v881 = vadd.s32 %v880, %v870
      %v882 = vadd.s32 %v881, %v872
      %v883 = vand.u32 %v860, 65535
      %v884 = vshrl.u32 %v860, 16
      %v885 = vand.u32 %v855, 65535
      %v886 = vshrl.u32 %v855, 16
      %v887 = vmul.u32 %v883, %v885
      %v888 = vmul.u32 %v883, %v886
      %v889 = vmul.u32 %v884, %v885
      %v890 = vmul.u32 %v884, %v886
      %v891 = vshll.u32 %v888, 16
      %v892 = vshrl.u32 %v888, 16
      %v893 = vshll.u32 %v889, 16
      %v894 = vshrl.u32 %v889, 16
      %vm895 = vc.u32 %v887, %v891
      %v896 = vsel %vm895, 1, 0
      %v897 = vadd.s32 %v887, %v891
      %v898 = vadd.s32 %v890, %v896
      %vm899 = vc.u32 %v897, %v893
      %v900 = vsel %vm899, 1, 0
      %v901 = vadd.s32 %v897, %v893
      %v902 = vadd.s32 %v898, %v900
      %v903 = vadd.s32 %v902, %v892
      %v904 = vadd.s32 %v903, %v894
      %v905 = vmul.u32 %v860, %v851
      %v906 = vadd.s32 %v882, %v901
      %vm907 = vc.u32 %v882, %v901
      %v908 = vadd.s32 %v904, 1
      %v909 = vsel %vm907, %v908, %v904
      %v910 = vadd.s32 %v905, %v909
      %v911 = vadd.s32 %v910, 536870912
      %v912 = vshrl.u32 %v911, 30
      %v913 = vshll.u32 %v912, 30
      %v914 = vsub.s32 %v910, %v913
      %vm915 = vcmp.lt.s32.totalorder %v914, 0
      %v916 = vsub.s32 0, %v914
      %v917 = vsel %vm915, %v916, %v914
      %v918 = vclz %v917
      %v919 = vsub.s32 %v918, 2
      %vm920 = vcmp.gt.s32.totalorder 0, %v919
      %v921 = vsel %vm920, 0, %v919
      %v922 = vsub.s32 32, %v921
      %v923 = vshll.u32 %v914, %v921
      %v924 = vshrl.u32 %v906, %v922
      %v925 = vor.u32 %v923, %v924
      %v926 = vsub.s32 4294967266, %v921
      %v927 = vadd.s32 %v926, 127
      %v928 = vshll.u32 %v927, 23
      %v929 = vor.u32 4788187, %v928
      %v930 = vand.u32 2147483647, %v929
      %v932 = vcvt.s32.f32 %v925
      %v933 = vmul.f32 %v932, %v930
      %v934 = vxor.u32 %v933, 2147483648
      %v935 = vsel %vm814, %v934, %v933
      %v936 = vsub.s32 4, %v912
      %v937 = vsel %vm814, %v936, %v912
      %v938 = vsel %vm813, %v324, %v935
      %v939 = vsel %vm813, 0, %v937
      %v940 = vmul.f32 %v938, %v938
      %v941 = vmul.f32 %v940, -0.001358992
      %v942 = vadd.f32 %v941, 0.041655596
      %v943 = vmul.f32 %v940, %v942
      %v944 = vadd.f32 %v943, -0.4999988
      %v945 = vmul.f32 %v940, %v944
      %v946 = vadd.f32 1.0, %v945
      %v947 = vmul.f32 %v938, %v938
      %v948 = vmul.f32 %v947, -0.00019511016
      %v949 = vadd.f32 %v948, 0.008332121
      %v950 = vmul.f32 %v947, %v949
      %v951 = vadd.f32 %v950, -0.16666654
      %v952 = vmul.f32 %v947, %v951
      %v953 = vadd.f32 %v952, 1.0
      %v954 = vmul.f32 %v953, %v938
      %vm955 = vweird.f32 %v324
      %v956 = vadd.s32 %v939, 3
      %v957 = vand.u32 %v956, 3
      %vm958 = vcmp.lt.s32.totalorder %v957, 2
      %vm959 = vcmp.eq.s32.totalorder %v957, 0
      %v960 = vxor.u32 %v954, 2147483648
      %v961 = vsel %vm959, %v946, %v960
      %vm962 = vcmp.eq.s32.totalorder %v957, 2
      %v963 = vxor.u32 %v946, 2147483648
      %v964 = vsel %vm962, %v963, %v954
      %v965 = vsel %vm958, %v961, %v964
      %v966 = vsel %vm955, nan, %v965
      %v967 = vand.u32 2147483647, %v325
      %vm968 = vcmp.le.f32.partialorder %v967, 0.7853982
      %vm969 = vcmp.lt.s32.totalorder %v325, 0
      %v970 = vand.u32 %v325, 2139095040
      %v971 = vshrl.u32 %v970, 23
      %v972 = vsub.s32 %v971, 127
      %v973 = vand.u32 2147483647, %v325
      %v974 = vand.u32 %v973, 8388607
      %v975 = vor.u32 %v974, 8388608
      %v976 = vsub.s32 0, %v975
      %v977 = vadd.s32 %v972, 1
      %vm978 = vcmp.gt.s32.totalorder %v977, 0
      %v979 = vsel %vm978, %v977, 0
      %v980 = vshrl.u32 %v979, 5
      %v981 = vand.u32 %v979, 31
      %v982 = vsub.s32 32, %v981
      %v983 = vshrl.u32 683565275, %v982
      %v984 = vshll.u32 683565275, %v981
      %v985 = vshrl.u32 2475754826, %v982
      %v986 = vor.u32 %v984, %v985
      %v987 = vshll.u32 2475754826, %v981
      %v988 = vshrl.u32 2131351028, %v982
      %v989 = vor.u32 %v987, %v988
      %v990 = vshll.u32 2131351028, %v981
      %v991 = vshrl.u32 2102212464, %v982
      %v992 = vor.u32 %v990, %v991
      %v993 = vshll.u32 2102212464, %v981
      %v994 = vshrl.u32 920167782, %v982
      %v995 = vor.u32 %v993, %v994
      %v996 = vshll.u32 920167782, %v981
      %v997 = vshrl.u32 1326507024, %v982
      %v998 = vor.u32 %v996, %v997
      %vm999 = vcmp.lt.s32.totalorder %v980, 1
      %vm1000 = vcmp.lt.s32.totalorder %v980, 2
      %vm1001 = vcmp.lt.s32.totalorder %v980, 3
      %vm1002 = vcmp.lt.s32.totalorder %v980, 4
      %v1003 = vsel %vm999, %v983, %v986
      %v1004 = vsel %vm1002, %v992, 2102212464
      %v1005 = vsel %vm1001, %v989, %v1004
      %v1006 = vsel %vm1000, %v1003, %v1005
      %v1007 = vsel %vm999, %v986, %v989
      %v1008 = vsel %vm1002, %v995, 920167782
      %v1009 = vsel %vm1001, %v992, %v1008
      %v1010 = vsel %vm1000, %v1007, %v1009
      %v1011 = vsel %vm999, %v989, %v992
      %v1012 = vsel %vm1002, %v998, 1326507024
      %v1013 = vsel %vm1001, %v995, %v1012
      %v1014 = vsel %vm1000, %v1011, %v1013
      %v1015 = vshll.u32 %v975, 8
      %v1016 = vand.u32 %v1015, 65535
      %v1017 = vshrl.u32 %v1015, 16
      %v1018 = vand.u32 %v1014, 65535
      %v1019 = vshrl.u32 %v1014, 16
      %v1020 = vmul.u32 %v1016, %v1018
      %v1021 = vmul.u32 %v1016, %v1019
      %v1022 = vmul.u32 %v1017, %v1018
      %v1023 = vmul.u32 %v1017, %v1019
      %v1024 = vshll.u32 %v1021, 16
      %v1025 = vshrl.u32 %v1021, 16
      %v1026 = vshll.u32 %v1022, 16
      %v1027 = vshrl.u32 %v1022, 16
      %vm1028 = vc.u32 %v1020, %v1024
      %v1029 = vsel %vm1028, 1, 0
      %v1030 = vadd.s32 %v1020, %v1024
      %v1031 = vadd.s32 %v1023, %v1029
      %vm1032 = vc.u32 %v1030, %v1026
      %v1033 = vsel %vm1032, 1, 0
      %v1034 = vadd.s32 %v1030, %v1026
      %v1035 = vadd.s32 %v1031, %v1033
      %v1036 = vadd.s32 %v1035, %v1025
      %v1037 = vadd.s32 %v1036, %v1027
      %v1038 = vand.u32 %v1015, 65535
      %v1039 = vshrl.u32 %v1015, 16
      %v1040 = vand.u32 %v1010, 65535
      %v1041 = vshrl.u32 %v1010, 16
      %v1042 = vmul.u32 %v1038, %v1040
      %v1043 = vmul.u32 %v1038, %v1041
      %v1044 = vmul.u32 %v1039, %v1040
      %v1045 = vmul.u32 %v1039, %v1041
      %v1046 = vshll.u32 %v1043, 16
      %v1047 = vshrl.u32 %v1043, 16
      %v1048 = vshll.u32 %v1044, 16
      %v1049 = vshrl.u32 %v1044, 16
      %vm1050 = vc.u32 %v1042, %v1046
      %v1051 = vsel %vm1050, 1, 0
      %v1052 = vadd.s32 %v1042, %v1046
      %v1053 = vadd.s32 %v1045, %v1051
      %vm1054 = vc.u32 %v1052, %v1048
      %v1055 = vsel %vm1054, 1, 0
      %v1056 = vadd.s32 %v1052, %v1048
      %v1057 = vadd.s32 %v1053, %v1055
      %v1058 = vadd.s32 %v1057, %v1047
      %v1059 = vadd.s32 %v1058, %v1049
      %v1060 = vmul.u32 %v1015, %v1006
      %v1061 = vadd.s32 %v1037, %v1056
      %vm1062 = vc.u32 %v1037, %v1056
      %v1063 = vadd.s32 %v1059, 1
      %v1064 = vsel %vm1062, %v1063, %v1059
      %v1065 = vadd.s32 %v1060, %v1064
      %v1066 = vadd.s32 %v1065, 536870912
      %v1067 = vshrl.u32 %v1066, 30
      %v1068 = vshll.u32 %v1067, 30
      %v1069 = vsub.s32 %v1065, %v1068
      %vm1070 = vcmp.lt.s32.totalorder %v1069, 0
      %v1071 = vsub.s32 0, %v1069
      %v1072 = vsel %vm1070, %v1071, %v1069
      %v1073 = vclz %v1072
      %v1074 = vsub.s32 %v1073, 2
      %vm1075 = vcmp.gt.s32.totalorder 0, %v1074
      %v1076 = vsel %vm1075, 0, %v1074
      %v1077 = vsub.s32 32, %v1076
      %v1078 = vshll.u32 %v1069, %v1076
      %v1079 = vshrl.u32 %v1061, %v1077
      %v1080 = vor.u32 %v1078, %v1079
      %v1081 = vsub.s32 4294967266, %v1076
      %v1082 = vadd.s32 %v1081, 127
      %v1083 = vshll.u32 %v1082, 23
      %v1084 = vor.u32 4788187, %v1083
      %v1085 = vand.u32 2147483647, %v1084
      %v1087 = vcvt.s32.f32 %v1080
      %v1088 = vmul.f32 %v1087, %v1085
      %v1089 = vxor.u32 %v1088, 2147483648
      %v1090 = vsel %vm969, %v1089, %v1088
      %v1091 = vsub.s32 4, %v1067
      %v1092 = vsel %vm969, %v1091, %v1067
      %v1093 = vsel %vm968, %v325, %v1090
      %v1094 = vsel %vm968, 0, %v1092
      %v1095 = vmul.f32 %v1093, %v1093
      %v1096 = vmul.f32 %v1095, -0.001358992
      %v1097 = vadd.f32 %v1096, 0.041655596
      %v1098 = vmul.f32 %v1095, %v1097
      %v1099 = vadd.f32 %v1098, -0.4999988
      %v1100 = vmul.f32 %v1095, %v1099
      %v1101 = vadd.f32 1.0, %v1100
      %v1102 = vmul.f32 %v1093, %v1093
      %v1103 = vmul.f32 %v1102, -0.00019511016
      %v1104 = vadd.f32 %v1103, 0.008332121
      %v1105 = vmul.f32 %v1102, %v1104
      %v1106 = vadd.f32 %v1105, -0.16666654
      %v1107 = vmul.f32 %v1102, %v1106
      %v1108 = vadd.f32 %v1107, 1.0
      %v1109 = vmul.f32 %v1108, %v1093
      %vm1110 = vweird.f32 %v325
      %v1111 = vadd.s32 %v1094, 3
      %v1112 = vand.u32 %v1111, 3
      %vm1113 = vcmp.lt.s32.totalorder %v1112, 2
      %vm1114 = vcmp.eq.s32.totalorder %v1112, 0
      %v1115 = vxor.u32 %v1109, 2147483648
      %v1116 = vsel %vm1114, %v1101, %v1115
      %vm1117 = vcmp.eq.s32.totalorder %v1112, 2
      %v1118 = vxor.u32 %v1101, 2147483648
      %v1119 = vsel %vm1117, %v1118, %v1109
      %v1120 = vsel %vm1113, %v1116, %v1119
      %v1121 = vsel %vm1110, nan, %v1120
      %v1122 = vand.u32 2147483647, %v326
      %vm1123 = vcmp.le.f32.partialorder %v1122, 0.7853982
      %vm1124 = vcmp.lt.s32.totalorder %v326, 0
      %v1125 = vand.u32 %v326, 2139095040
      %v1126 = vshrl.u32 %v1125, 23
      %v1127 = vsub.s32 %v1126, 127
      %v1128 = vand.u32 2147483647, %v326
      %v1129 = vand.u32 %v1128, 8388607
      %v1130 = vor.u32 %v1129, 8388608
      %v1131 = vsub.s32 0, %v1130
      %v1132 = vadd.s32 %v1127, 1
      %vm1133 = vcmp.gt.s32.totalorder %v1132, 0
      %v1134 = vsel %vm1133, %v1132, 0
      %v1135 = vshrl.u32 %v1134, 5
      %v1136 = vand.u32 %v1134, 31
      %v1137 = vsub.s32 32, %v1136
      %v1138 = vshrl.u32 683565275, %v1137
      %v1139 = vshll.u32 683565275, %v1136
      %v1140 = vshrl.u32 2475754826, %v1137
      %v1141 = vor.u32 %v1139, %v1140
      %v1142 = vshll.u32 2475754826, %v1136
      %v1143 = vshrl.u32 2131351028, %v1137
      %v1144 = vor.u32 %v1142, %v1143
      %v1145 = vshll.u32 2131351028, %v1136
      %v1146 = vshrl.u32 2102212464, %v1137
      %v1147 = vor.u32 %v1145, %v1146
      %v1148 = vshll.u32 2102212464, %v1136
      %v1149 = vshrl.u32 920167782, %v1137
      %v1150 = vor.u32 %v1148, %v1149
      %v1151 = vshll.u32 920167782, %v1136
      %v1152 = vshrl.u32 1326507024, %v1137
      %v1153 = vor.u32 %v1151, %v1152
      %vm1154 = vcmp.lt.s32.totalorder %v1135, 1
      %vm1155 = vcmp.lt.s32.totalorder %v1135, 2
      %vm1156 = vcmp.lt.s32.totalorder %v1135, 3
      %vm1157 = vcmp.lt.s32.totalorder %v1135, 4
      %v1158 = vsel %vm1154, %v1138, %v1141
      %v1159 = vsel %vm1157, %v1147, 2102212464
      %v1160 = vsel %vm1156, %v1144, %v1159
      %v1161 = vsel %vm1155, %v1158, %v1160
      %v1162 = vsel %vm1154, %v1141, %v1144
      %v1163 = vsel %vm1157, %v1150, 920167782
      %v1164 = vsel %vm1156, %v1147, %v1163
      %v1165 = vsel %vm1155, %v1162, %v1164
      %v1166 = vsel %vm1154, %v1144, %v1147
      %v1167 = vsel %vm1157, %v1153, 1326507024
      %v1168 = vsel %vm1156, %v1150, %v1167
      %v1169 = vsel %vm1155, %v1166, %v1168
      %v1170 = vshll.u32 %v1130, 8
      %v1171 = vand.u32 %v1170, 65535
      %v1172 = vshrl.u32 %v1170, 16
      %v1173 = vand.u32 %v1169, 65535
      %v1174 = vshrl.u32 %v1169, 16
      %v1175 = vmul.u32 %v1171, %v1173
      %v1176 = vmul.u32 %v1171, %v1174
      %v1177 = vmul.u32 %v1172, %v1173
      %v1178 = vmul.u32 %v1172, %v1174
      %v1179 = vshll.u32 %v1176, 16
      %v1180 = vshrl.u32 %v1176, 16
      %v1181 = vshll.u32 %v1177, 16
      %v1182 = vshrl.u32 %v1177, 16
      %vm1183 = vc.u32 %v1175, %v1179
      %v1184 = vsel %vm1183, 1, 0
      %v1185 = vadd.s32 %v1175, %v1179
      %v1186 = vadd.s32 %v1178, %v1184
      %vm1187 = vc.u32 %v1185, %v1181
      %v1188 = vsel %vm1187, 1, 0
      %v1189 = vadd.s32 %v1185, %v1181
      %v1190 = vadd.s32 %v1186, %v1188
      %v1191 = vadd.s32 %v1190, %v1180
      %v1192 = vadd.s32 %v1191, %v1182
      %v1193 = vand.u32 %v1170, 65535
      %v1194 = vshrl.u32 %v1170, 16
      %v1195 = vand.u32 %v1165, 65535
      %v1196 = vshrl.u32 %v1165, 16
      %v1197 = vmul.u32 %v1193, %v1195
      %v1198 = vmul.u32 %v1193, %v1196
      %v1199 = vmul.u32 %v1194, %v1195
      %v1200 = vmul.u32 %v1194, %v1196
      %v1201 = vshll.u32 %v1198, 16
      %v1202 = vshrl.u32 %v1198, 16
      %v1203 = vshll.u32 %v1199, 16
      %v1204 = vshrl.u32 %v1199, 16
      %vm1205 = vc.u32 %v1197, %v1201
      %v1206 = vsel %vm1205, 1, 0
      %v1207 = vadd.s32 %v1197, %v1201
      %v1208 = vadd.s32 %v1200, %v1206
      %vm1209 = vc.u32 %v1207, %v1203
      %v1210 = vsel %vm1209, 1, 0
      %v1211 = vadd.s32 %v1207, %v1203
      %v1212 = vadd.s32 %v1208, %v1210
      %v1213 = vadd.s32 %v1212, %v1202
      %v1214 = vadd.s32 %v1213, %v1204
      %v1215 = vmul.u32 %v1170, %v1161
      %v1216 = vadd.s32 %v1192, %v1211
      %vm1217 = vc.u32 %v1192, %v1211
      %v1218 = vadd.s32 %v1214, 1
      %v1219 = vsel %vm1217, %v1218, %v1214
      %v1220 = vadd.s32 %v1215, %v1219
      %v1221 = vadd.s32 %v1220, 536870912
      %v1222 = vshrl.u32 %v1221, 30
      %v1223 = vshll.u32 %v1222, 30
      %v1224 = vsub.s32 %v1220, %v1223
      %vm1225 = vcmp.lt.s32.totalorder %v1224, 0
      %v1226 = vsub.s32 0, %v1224
      %v1227 = vsel %vm1225, %v1226, %v1224
      %v1228 = vclz %v1227
      %v1229 = vsub.s32 %v1228, 2
      %vm1230 = vcmp.gt.s32.totalorder 0, %v1229
      %v1231 = vsel %vm1230, 0, %v1229
      %v1232 = vsub.s32 32, %v1231
      %v1233 = vshll.u32 %v1224, %v1231
      %v1234 = vshrl.u32 %v1216, %v1232
      %v1235 = vor.u32 %v1233, %v1234
      %v1236 = vsub.s32 4294967266, %v1231
      %v1237 = vadd.s32 %v1236, 127
      %v1238 = vshll.u32 %v1237, 23
      %v1239 = vor.u32 4788187, %v1238
      %v1240 = vand.u32 2147483647, %v1239
      %v1242 = vcvt.s32.f32 %v1235
      %v1243 = vmul.f32 %v1242, %v1240
      %v1244 = vxor.u32 %v1243, 2147483648
      %v1245 = vsel %vm1124, %v1244, %v1243
      %v1246 = vsub.s32 4, %v1222
      %v1247 = vsel %vm1124, %v1246, %v1222
      %v1248 = vsel %vm1123, %v326, %v1245
      %v1249 = vsel %vm1123, 0, %v1247
      %v1250 = vmul.f32 %v1248, %v1248
      %v1251 = vmul.f32 %v1250, -0.001358992
      %v1252 = vadd.f32 %v1251, 0.041655596
      %v1253 = vmul.f32 %v1250, %v1252
      %v1254 = vadd.f32 %v1253, -0.4999988
      %v1255 = vmul.f32 %v1250, %v1254
      %v1256 = vadd.f32 1.0, %v1255
      %v1257 = vmul.f32 %v1248, %v1248
      %v1258 = vmul.f32 %v1257, -0.00019511016
      %v1259 = vadd.f32 %v1258, 0.008332121
      %v1260 = vmul.f32 %v1257, %v1259
      %v1261 = vadd.f32 %v1260, -0.16666654
      %v1262 = vmul.f32 %v1257, %v1261
      %v1263 = vadd.f32 %v1262, 1.0
      %v1264 = vmul.f32 %v1263, %v1248
      %vm1265 = vweird.f32 %v326
      %v1266 = vadd.s32 %v1249, 3
      %v1267 = vand.u32 %v1266, 3
      %vm1268 = vcmp.lt.s32.totalorder %v1267, 2
      %vm1269 = vcmp.eq.s32.totalorder %v1267, 0
      %v1270 = vxor.u32 %v1264, 2147483648
      %v1271 = vsel %vm1269, %v1256, %v1270
      %vm1272 = vcmp.eq.s32.totalorder %v1267, 2
      %v1273 = vxor.u32 %v1256, 2147483648
      %v1274 = vsel %vm1272, %v1273, %v1264
      %v1275 = vsel %vm1268, %v1271, %v1274
      %v1276 = vsel %vm1265, nan, %v1275
      %v1277 = vand.u32 2147483647, %v327
      %vm1278 = vcmp.le.f32.partialorder %v1277, 0.7853982
      %vm1279 = vcmp.lt.s32.totalorder %v327, 0
      %v1280 = vand.u32 %v327, 2139095040
      %v1281 = vshrl.u32 %v1280, 23
      %v1282 = vsub.s32 %v1281, 127
      %v1283 = vand.u32 2147483647, %v327
      %v1284 = vand.u32 %v1283, 8388607
      %v1285 = vor.u32 %v1284, 8388608
      %v1286 = vsub.s32 0, %v1285
      %v1287 = vadd.s32 %v1282, 1
      %vm1288 = vcmp.gt.s32.totalorder %v1287, 0
      %v1289 = vsel %vm1288, %v1287, 0
      %v1290 = vshrl.u32 %v1289, 5
      %v1291 = vand.u32 %v1289, 31
      %v1292 = vsub.s32 32, %v1291
      %v1293 = vshrl.u32 683565275, %v1292
      %v1294 = vshll.u32 683565275, %v1291
      %v1295 = vshrl.u32 2475754826, %v1292
      %v1296 = vor.u32 %v1294, %v1295
      %v1297 = vshll.u32 2475754826, %v1291
      %v1298 = vshrl.u32 2131351028, %v1292
      %v1299 = vor.u32 %v1297, %v1298
      %v1300 = vshll.u32 2131351028, %v1291
      %v1301 = vshrl.u32 2102212464, %v1292
      %v1302 = vor.u32 %v1300, %v1301
      %v1303 = vshll.u32 2102212464, %v1291
      %v1304 = vshrl.u32 920167782, %v1292
      %v1305 = vor.u32 %v1303, %v1304
      %v1306 = vshll.u32 920167782, %v1291
      %v1307 = vshrl.u32 1326507024, %v1292
      %v1308 = vor.u32 %v1306, %v1307
      %vm1309 = vcmp.lt.s32.totalorder %v1290, 1
      %vm1310 = vcmp.lt.s32.totalorder %v1290, 2
      %vm1311 = vcmp.lt.s32.totalorder %v1290, 3
      %vm1312 = vcmp.lt.s32.totalorder %v1290, 4
      %v1313 = vsel %vm1309, %v1293, %v1296
      %v1314 = vsel %vm1312, %v1302, 2102212464
      %v1315 = vsel %vm1311, %v1299, %v1314
      %v1316 = vsel %vm1310, %v1313, %v1315
      %v1317 = vsel %vm1309, %v1296, %v1299
      %v1318 = vsel %vm1312, %v1305, 920167782
      %v1319 = vsel %vm1311, %v1302, %v1318
      %v1320 = vsel %vm1310, %v1317, %v1319
      %v1321 = vsel %vm1309, %v1299, %v1302
      %v1322 = vsel %vm1312, %v1308, 1326507024
      %v1323 = vsel %vm1311, %v1305, %v1322
      %v1324 = vsel %vm1310, %v1321, %v1323
      %v1325 = vshll.u32 %v1285, 8
      %v1326 = vand.u32 %v1325, 65535
      %v1327 = vshrl.u32 %v1325, 16
      %v1328 = vand.u32 %v1324, 65535
      %v1329 = vshrl.u32 %v1324, 16
      %v1330 = vmul.u32 %v1326, %v1328
      %v1331 = vmul.u32 %v1326, %v1329
      %v1332 = vmul.u32 %v1327, %v1328
      %v1333 = vmul.u32 %v1327, %v1329
      %v1334 = vshll.u32 %v1331, 16
      %v1335 = vshrl.u32 %v1331, 16
      %v1336 = vshll.u32 %v1332, 16
      %v1337 = vshrl.u32 %v1332, 16
      %vm1338 = vc.u32 %v1330, %v1334
      %v1339 = vsel %vm1338, 1, 0
      %v1340 = vadd.s32 %v1330, %v1334
      %v1341 = vadd.s32 %v1333, %v1339
      %vm1342 = vc.u32 %v1340, %v1336
      %v1343 = vsel %vm1342, 1, 0
      %v1344 = vadd.s32 %v1340, %v1336
      %v1345 = vadd.s32 %v1341, %v1343
      %v1346 = vadd.s32 %v1345, %v1335
      %v1347 = vadd.s32 %v1346, %v1337
      %v1348 = vand.u32 %v1325, 65535
      %v1349 = vshrl.u32 %v1325, 16
      %v1350 = vand.u32 %v1320, 65535
      %v1351 = vshrl.u32 %v1320, 16
      %v1352 = vmul.u32 %v1348, %v1350
      %v1353 = vmul.u32 %v1348, %v1351
      %v1354 = vmul.u32 %v1349, %v1350
      %v1355 = vmul.u32 %v1349, %v1351
      %v1356 = vshll.u32 %v1353, 16
      %v1357 = vshrl.u32 %v1353, 16
      %v1358 = vshll.u32 %v1354, 16
      %v1359 = vshrl.u32 %v1354, 16
      %vm1360 = vc.u32 %v1352, %v1356
      %v1361 = vsel %vm1360, 1, 0
      %v1362 = vadd.s32 %v1352, %v1356
      %v1363 = vadd.s32 %v1355, %v1361
      %vm1364 = vc.u32 %v1362, %v1358
      %v1365 = vsel %vm1364, 1, 0
      %v1366 = vadd.s32 %v1362, %v1358
      %v1367 = vadd.s32 %v1363, %v1365
      %v1368 = vadd.s32 %v1367, %v1357
      %v1369 = vadd.s32 %v1368, %v1359
      %v1370 = vmul.u32 %v1325, %v1316
      %v1371 = vadd.s32 %v1347, %v1366
      %vm1372 = vc.u32 %v1347, %v1366
      %v1373 = vadd.s32 %v1369, 1
      %v1374 = vsel %vm1372, %v1373, %v1369
      %v1375 = vadd.s32 %v1370, %v1374
      %v1376 = vadd.s32 %v1375, 536870912
      %v1377 = vshrl.u32 %v1376, 30
      %v1378 = vshll.u32 %v1377, 30
      %v1379 = vsub.s32 %v1375, %v1378
      %vm1380 = vcmp.lt.s32.totalorder %v1379, 0
      %v1381 = vsub.s32 0, %v1379
      %v1382 = vsel %vm1380, %v1381, %v1379
      %v1383 = vclz %v1382
      %v1384 = vsub.s32 %v1383, 2
      %vm1385 = vcmp.gt.s32.totalorder 0, %v1384
      %v1386 = vsel %vm1385, 0, %v1384
      %v1387 = vsub.s32 32, %v1386
      %v1388 = vshll.u32 %v1379, %v1386
      %v1389 = vshrl.u32 %v1371, %v1387
      %v1390 = vor.u32 %v1388, %v1389
      %v1391 = vsub.s32 4294967266, %v1386
      %v1392 = vadd.s32 %v1391, 127
      %v1393 = vshll.u32 %v1392, 23
      %v1394 = vor.u32 4788187, %v1393
      %v1395 = vand.u32 2147483647, %v1394
      %v1397 = vcvt.s32.f32 %v1390
      %v1398 = vmul.f32 %v1397, %v1395
      %v1399 = vxor.u32 %v1398, 2147483648
      %v1400 = vsel %vm1279, %v1399, %v1398
      %v1401 = vsub.s32 4, %v1377
      %v1402 = vsel %vm1279, %v1401, %v1377
      %v1403 = vsel %vm1278, %v327, %v1400
      %v1404 = vsel %vm1278, 0, %v1402
      %v1405 = vmul.f32 %v1403, %v1403
      %v1406 = vmul.f32 %v1405, -0.001358992
      %v1407 = vadd.f32 %v1406, 0.041655596
      %v1408 = vmul.f32 %v1405, %v1407
      %v1409 = vadd.f32 %v1408, -0.4999988
      %v1410 = vmul.f32 %v1405, %v1409
      %v1411 = vadd.f32 1.0, %v1410
      %v1412 = vmul.f32 %v1403, %v1403
      %v1413 = vmul.f32 %v1412, -0.00019511016
      %v1414 = vadd.f32 %v1413, 0.008332121
      %v1415 = vmul.f32 %v1412, %v1414
      %v1416 = vadd.f32 %v1415, -0.16666654
      %v1417 = vmul.f32 %v1412, %v1416
      %v1418 = vadd.f32 %v1417, 1.0
      %v1419 = vmul.f32 %v1418, %v1403
      %vm1420 = vweird.f32 %v327
      %v1421 = vadd.s32 %v1404, 3
      %v1422 = vand.u32 %v1421, 3
      %vm1423 = vcmp.lt.s32.totalorder %v1422, 2
      %vm1424 = vcmp.eq.s32.totalorder %v1422, 0
      %v1425 = vxor.u32 %v1419, 2147483648
      %v1426 = vsel %vm1424, %v1411, %v1425
      %vm1427 = vcmp.eq.s32.totalorder %v1422, 2
      %v1428 = vxor.u32 %v1411, 2147483648
      %v1429 = vsel %vm1427, %v1428, %v1419
      %v1430 = vsel %vm1423, %v1426, %v1429
      %v1431 = vsel %vm1420, nan, %v1430
      %v1432 = vand.u32 2147483647, %v328
      %vm1433 = vcmp.le.f32.partialorder %v1432, 0.7853982
      %vm1434 = vcmp.lt.s32.totalorder %v328, 0
      %v1435 = vand.u32 %v328, 2139095040
      %v1436 = vshrl.u32 %v1435, 23
      %v1437 = vsub.s32 %v1436, 127
      %v1438 = vand.u32 2147483647, %v328
      %v1439 = vand.u32 %v1438, 8388607
      %v1440 = vor.u32 %v1439, 8388608
      %v1441 = vsub.s32 0, %v1440
      %v1442 = vadd.s32 %v1437, 1
      %vm1443 = vcmp.gt.s32.totalorder %v1442, 0
      %v1444 = vsel %vm1443, %v1442, 0
      %v1445 = vshrl.u32 %v1444, 5
      %v1446 = vand.u32 %v1444, 31
      %v1447 = vsub.s32 32, %v1446
      %v1448 = vshrl.u32 683565275, %v1447
      %v1449 = vshll.u32 683565275, %v1446
      %v1450 = vshrl.u32 2475754826, %v1447
      %v1451 = vor.u32 %v1449, %v1450
      %v1452 = vshll.u32 2475754826, %v1446
      %v1453 = vshrl.u32 2131351028, %v1447
      %v1454 = vor.u32 %v1452, %v1453
      %v1455 = vshll.u32 2131351028, %v1446
      %v1456 = vshrl.u32 2102212464, %v1447
      %v1457 = vor.u32 %v1455, %v1456
      %v1458 = vshll.u32 2102212464, %v1446
      %v1459 = vshrl.u32 920167782, %v1447
      %v1460 = vor.u32 %v1458, %v1459
      %v1461 = vshll.u32 920167782, %v1446
      %v1462 = vshrl.u32 1326507024, %v1447
      %v1463 = vor.u32 %v1461, %v1462
      %vm1464 = vcmp.lt.s32.totalorder %v1445, 1
      %vm1465 = vcmp.lt.s32.totalorder %v1445, 2
      %vm1466 = vcmp.lt.s32.totalorder %v1445, 3
      %vm1467 = vcmp.lt.s32.totalorder %v1445, 4
      %v1468 = vsel %vm1464, %v1448, %v1451
      %v1469 = vsel %vm1467, %v1457, 2102212464
      %v1470 = vsel %vm1466, %v1454, %v1469
      %v1471 = vsel %vm1465, %v1468, %v1470
      %v1472 = vsel %vm1464, %v1451, %v1454
      %v1473 = vsel %vm1467, %v1460, 920167782
      %v1474 = vsel %vm1466, %v1457, %v1473
      %v1475 = vsel %vm1465, %v1472, %v1474
      %v1476 = vsel %vm1464, %v1454, %v1457
      %v1477 = vsel %vm1467, %v1463, 1326507024
      %v1478 = vsel %vm1466, %v1460, %v1477
      %v1479 = vsel %vm1465, %v1476, %v1478
      %v1480 = vshll.u32 %v1440, 8
      %v1481 = vand.u32 %v1480, 65535
      %v1482 = vshrl.u32 %v1480, 16
      %v1483 = vand.u32 %v1479, 65535
      %v1484 = vshrl.u32 %v1479, 16
      %v1485 = vmul.u32 %v1481, %v1483
      %v1486 = vmul.u32 %v1481, %v1484
      %v1487 = vmul.u32 %v1482, %v1483
      %v1488 = vmul.u32 %v1482, %v1484
      %v1489 = vshll.u32 %v1486, 16
      %v1490 = vshrl.u32 %v1486, 16
      %v1491 = vshll.u32 %v1487, 16
      %v1492 = vshrl.u32 %v1487, 16
      %vm1493 = vc.u32 %v1485, %v1489
      %v1494 = vsel %vm1493, 1, 0
      %v1495 = vadd.s32 %v1485, %v1489
      %v1496 = vadd.s32 %v1488, %v1494
      %vm1497 = vc.u32 %v1495, %v1491
      %v1498 = vsel %vm1497, 1, 0
      %v1499 = vadd.s32 %v1495, %v1491
      %v1500 = vadd.s32 %v1496, %v1498
      %v1501 = vadd.s32 %v1500, %v1490
      %v1502 = vadd.s32 %v1501, %v1492
      %v1503 = vand.u32 %v1480, 65535
      %v1504 = vshrl.u32 %v1480, 16
      %v1505 = vand.u32 %v1475, 65535
      %v1506 = vshrl.u32 %v1475, 16
      %v1507 = vmul.u32 %v1503, %v1505
      %v1508 = vmul.u32 %v1503, %v1506
      %v1509 = vmul.u32 %v1504, %v1505
      %v1510 = vmul.u32 %v1504, %v1506
      %v1511 = vshll.u32 %v1508, 16
      %v1512 = vshrl.u32 %v1508, 16
      %v1513 = vshll.u32 %v1509, 16
      %v1514 = vshrl.u32 %v1509, 16
      %vm1515 = vc.u32 %v1507, %v1511
      %v1516 = vsel %vm1515, 1, 0
      %v1517 = vadd.s32 %v1507, %v1511
      %v1518 = vadd.s32 %v1510, %v1516
      %vm1519 = vc.u32 %v1517, %v1513
      %v1520 = vsel %vm1519, 1, 0
      %v1521 = vadd.s32 %v1517, %v1513
      %v1522 = vadd.s32 %v1518, %v1520
      %v1523 = vadd.s32 %v1522, %v1512
      %v1524 = vadd.s32 %v1523, %v1514
      %v1525 = vmul.u32 %v1480, %v1471
      %v1526 = vadd.s32 %v1502, %v1521
      %vm1527 = vc.u32 %v1502, %v1521
      %v1528 = vadd.s32 %v1524, 1
      %v1529 = vsel %vm1527, %v1528, %v1524
      %v1530 = vadd.s32 %v1525, %v1529
      %v1531 = vadd.s32 %v1530, 536870912
      %v1532 = vshrl.u32 %v1531, 30
      %v1533 = vshll.u32 %v1532, 30
      %v1534 = vsub.s32 %v1530, %v1533
      %vm1535 = vcmp.lt.s32.totalorder %v1534, 0
      %v1536 = vsub.s32 0, %v1534
      %v1537 = vsel %vm1535, %v1536, %v1534
      %v1538 = vclz %v1537
      %v1539 = vsub.s32 %v1538, 2
      %vm1540 = vcmp.gt.s32.totalorder 0, %v1539
      %v1541 = vsel %vm1540, 0, %v1539
      %v1542 = vsub.s32 32, %v1541
      %v1543 = vshll.u32 %v1534, %v1541
      %v1544 = vshrl.u32 %v1526, %v1542
      %v1545 = vor.u32 %v1543, %v1544
      %v1546 = vsub.s32 4294967266, %v1541
      %v1547 = vadd.s32 %v1546, 127
      %v1548 = vshll.u32 %v1547, 23
      %v1549 = vor.u32 4788187, %v1548
      %v1550 = vand.u32 2147483647, %v1549
      %v1552 = vcvt.s32.f32 %v1545
      %v1553 = vmul.f32 %v1552, %v1550
      %v1554 = vxor.u32 %v1553, 2147483648
      %v1555 = vsel %vm1434, %v1554, %v1553
      %v1556 = vsub.s32 4, %v1532
      %v1557 = vsel %vm1434, %v1556, %v1532
      %v1558 = vsel %vm1433, %v328, %v1555
      %v1559 = vsel %vm1433, 0, %v1557
      %v1560 = vmul.f32 %v1558, %v1558
      %v1561 = vmul.f32 %v1560, -0.001358992
      %v1562 = vadd.f32 %v1561, 0.041655596
      %v1563 = vmul.f32 %v1560, %v1562
      %v1564 = vadd.f32 %v1563, -0.4999988
      %v1565 = vmul.f32 %v1560, %v1564
      %v1566 = vadd.f32 1.0, %v1565
      %v1567 = vmul.f32 %v1558, %v1558
      %v1568 = vmul.f32 %v1567, -0.00019511016
      %v1569 = vadd.f32 %v1568, 0.008332121
      %v1570 = vmul.f32 %v1567, %v1569
      %v1571 = vadd.f32 %v1570, -0.16666654
      %v1572 = vmul.f32 %v1567, %v1571
      %v1573 = vadd.f32 %v1572, 1.0
      %v1574 = vmul.f32 %v1573, %v1558
      %vm1575 = vweird.f32 %v328
      %v1576 = vadd.s32 %v1559, 3
      %v1577 = vand.u32 %v1576, 3
      %vm1578 = vcmp.lt.s32.totalorder %v1577, 2
      %vm1579 = vcmp.eq.s32.totalorder %v1577, 0
      %v1580 = vxor.u32 %v1574, 2147483648
      %v1581 = vsel %vm1579, %v1566, %v1580
      %vm1582 = vcmp.eq.s32.totalorder %v1577, 2
      %v1583 = vxor.u32 %v1566, 2147483648
      %v1584 = vsel %vm1582, %v1583, %v1574
      %v1585 = vsel %vm1578, %v1581, %v1584
      %v1586 = vsel %vm1575, nan, %v1585
      %v1587 = vand.u32 2147483647, %v329
      %vm1588 = vcmp.le.f32.partialorder %v1587, 0.7853982
      %vm1589 = vcmp.lt.s32.totalorder %v329, 0
      %v1590 = vand.u32 %v329, 2139095040
      %v1591 = vshrl.u32 %v1590, 23
      %v1592 = vsub.s32 %v1591, 127
      %v1593 = vand.u32 2147483647, %v329
      %v1594 = vand.u32 %v1593, 8388607
      %v1595 = vor.u32 %v1594, 8388608
      %v1596 = vsub.s32 0, %v1595
      %v1597 = vadd.s32 %v1592, 1
      %vm1598 = vcmp.gt.s32.totalorder %v1597, 0
      %v1599 = vsel %vm1598, %v1597, 0
      %v1600 = vshrl.u32 %v1599, 5
      %v1601 = vand.u32 %v1599, 31
      %v1602 = vsub.s32 32, %v1601
      %v1603 = vshrl.u32 683565275, %v1602
      %v1604 = vshll.u32 683565275, %v1601
      %v1605 = vshrl.u32 2475754826, %v1602
      %v1606 = vor.u32 %v1604, %v1605
      %v1607 = vshll.u32 2475754826, %v1601
      %v1608 = vshrl.u32 2131351028, %v1602
      %v1609 = vor.u32 %v1607, %v1608
      %v1610 = vshll.u32 2131351028, %v1601
      %v1611 = vshrl.u32 2102212464, %v1602
      %v1612 = vor.u32 %v1610, %v1611
      %v1613 = vshll.u32 2102212464, %v1601
      %v1614 = vshrl.u32 920167782, %v1602
      %v1615 = vor.u32 %v1613, %v1614
      %v1616 = vshll.u32 920167782, %v1601
      %v1617 = vshrl.u32 1326507024, %v1602
      %v1618 = vor.u32 %v1616, %v1617
      %vm1619 = vcmp.lt.s32.totalorder %v1600, 1
      %vm1620 = vcmp.lt.s32.totalorder %v1600, 2
      %vm1621 = vcmp.lt.s32.totalorder %v1600, 3
      %vm1622 = vcmp.lt.s32.totalorder %v1600, 4
      %v1623 = vsel %vm1619, %v1603, %v1606
      %v1624 = vsel %vm1622, %v1612, 2102212464
      %v1625 = vsel %vm1621, %v1609, %v1624
      %v1626 = vsel %vm1620, %v1623, %v1625
      %v1627 = vsel %vm1619, %v1606, %v1609
      %v1628 = vsel %vm1622, %v1615, 920167782
      %v1629 = vsel %vm1621, %v1612, %v1628
      %v1630 = vsel %vm1620, %v1627, %v1629
      %v1631 = vsel %vm1619, %v1609, %v1612
      %v1632 = vsel %vm1622, %v1618, 1326507024
      %v1633 = vsel %vm1621, %v1615, %v1632
      %v1634 = vsel %vm1620, %v1631, %v1633
      %v1635 = vshll.u32 %v1595, 8
      %v1636 = vand.u32 %v1635, 65535
      %v1637 = vshrl.u32 %v1635, 16
      %v1638 = vand.u32 %v1634, 65535
      %v1639 = vshrl.u32 %v1634, 16
      %v1640 = vmul.u32 %v1636, %v1638
      %v1641 = vmul.u32 %v1636, %v1639
      %v1642 = vmul.u32 %v1637, %v1638
      %v1643 = vmul.u32 %v1637, %v1639
      %v1644 = vshll.u32 %v1641, 16
      %v1645 = vshrl.u32 %v1641, 16
      %v1646 = vshll.u32 %v1642, 16
      %v1647 = vshrl.u32 %v1642, 16
      %vm1648 = vc.u32 %v1640, %v1644
      %v1649 = vsel %vm1648, 1, 0
      %v1650 = vadd.s32 %v1640, %v1644
      %v1651 = vadd.s32 %v1643, %v1649
      %vm1652 = vc.u32 %v1650, %v1646
      %v1653 = vsel %vm1652, 1, 0
      %v1654 = vadd.s32 %v1650, %v1646
      %v1655 = vadd.s32 %v1651, %v1653
      %v1656 = vadd.s32 %v1655, %v1645
      %v1657 = vadd.s32 %v1656, %v1647
      %v1658 = vand.u32 %v1635, 65535
      %v1659 = vshrl.u32 %v1635, 16
      %v1660 = vand.u32 %v1630, 65535
      %v1661 = vshrl.u32 %v1630, 16
      %v1662 = vmul.u32 %v1658, %v1660
      %v1663 = vmul.u32 %v1658, %v1661
      %v1664 = vmul.u32 %v1659, %v1660
      %v1665 = vmul.u32 %v1659, %v1661
      %v1666 = vshll.u32 %v1663, 16
      %v1667 = vshrl.u32 %v1663, 16
      %v1668 = vshll.u32 %v1664, 16
      %v1669 = vshrl.u32 %v1664, 16
      %vm1670 = vc.u32 %v1662, %v1666
      %v1671 = vsel %vm1670, 1, 0
      %v1672 = vadd.s32 %v1662, %v1666
      %v1673 = vadd.s32 %v1665, %v1671
      %vm1674 = vc.u32 %v1672, %v1668
      %v1675 = vsel %vm1674, 1, 0
      %v1676 = vadd.s32 %v1672, %v1668
      %v1677 = vadd.s32 %v1673, %v1675
      %v1678 = vadd.s32 %v1677, %v1667
      %v1679 = vadd.s32 %v1678, %v1669
      %v1680 = vmul.u32 %v1635, %v1626
      %v1681 = vadd.s32 %v1657, %v1676
      %vm1682 = vc.u32 %v1657, %v1676
      %v1683 = vadd.s32 %v1679, 1
      %v1684 = vsel %vm1682, %v1683, %v1679
      %v1685 = vadd.s32 %v1680, %v1684
      %v1686 = vadd.s32 %v1685, 536870912
      %v1687 = vshrl.u32 %v1686, 30
      %v1688 = vshll.u32 %v1687, 30
      %v1689 = vsub.s32 %v1685, %v1688
      %vm1690 = vcmp.lt.s32.totalorder %v1689, 0
      %v1691 = vsub.s32 0, %v1689
      %v1692 = vsel %vm1690, %v1691, %v1689
      %v1693 = vclz %v1692
      %v1694 = vsub.s32 %v1693, 2
      %vm1695 = vcmp.gt.s32.totalorder 0, %v1694
      %v1696 = vsel %vm1695, 0, %v1694
      %v1697 = vsub.s32 32, %v1696
      %v1698 = vshll.u32 %v1689, %v1696
      %v1699 = vshrl.u32 %v1681, %v1697
      %v1700 = vor.u32 %v1698, %v1699
      %v1701 = vsub.s32 4294967266, %v1696
      %v1702 = vadd.s32 %v1701, 127
      %v1703 = vshll.u32 %v1702, 23
      %v1704 = vor.u32 4788187, %v1703
      %v1705 = vand.u32 2147483647, %v1704
      %v1707 = vcvt.s32.f32 %v1700
      %v1708 = vmul.f32 %v1707, %v1705
      %v1709 = vxor.u32 %v1708, 2147483648
      %v1710 = vsel %vm1589, %v1709, %v1708
      %v1711 = vsub.s32 4, %v1687
      %v1712 = vsel %vm1589, %v1711, %v1687
      %v1713 = vsel %vm1588, %v329, %v1710
      %v1714 = vsel %vm1588, 0, %v1712
      %v1715 = vmul.f32 %v1713, %v1713
      %v1716 = vmul.f32 %v1715, -0.001358992
      %v1717 = vadd.f32 %v1716, 0.041655596
      %v1718 = vmul.f32 %v1715, %v1717
      %v1719 = vadd.f32 %v1718, -0.4999988
      %v1720 = vmul.f32 %v1715, %v1719
      %v1721 = vadd.f32 1.0, %v1720
      %v1722 = vmul.f32 %v1713, %v1713
      %v1723 = vmul.f32 %v1722, -0.00019511016
      %v1724 = vadd.f32 %v1723, 0.008332121
      %v1725 = vmul.f32 %v1722, %v1724
      %v1726 = vadd.f32 %v1725, -0.16666654
      %v1727 = vmul.f32 %v1722, %v1726
      %v1728 = vadd.f32 %v1727, 1.0
      %v1729 = vmul.f32 %v1728, %v1713
      %vm1730 = vweird.f32 %v329
      %v1731 = vadd.s32 %v1714, 3
      %v1732 = vand.u32 %v1731, 3
      %vm1733 = vcmp.lt.s32.totalorder %v1732, 2
      %vm1734 = vcmp.eq.s32.totalorder %v1732, 0
      %v1735 = vxor.u32 %v1729, 2147483648
      %v1736 = vsel %vm1734, %v1721, %v1735
      %vm1737 = vcmp.eq.s32.totalorder %v1732, 2
      %v1738 = vxor.u32 %v1721, 2147483648
      %v1739 = vsel %vm1737, %v1738, %v1729
      %v1740 = vsel %vm1733, %v1736, %v1739
      %v1741 = vsel %vm1730, nan, %v1740
      %v1742 = vand.u32 2147483647, %v330
      %vm1743 = vcmp.le.f32.partialorder %v1742, 0.7853982
      %vm1744 = vcmp.lt.s32.totalorder %v330, 0
      %v1745 = vand.u32 %v330, 2139095040
      %v1746 = vshrl.u32 %v1745, 23
      %v1747 = vsub.s32 %v1746, 127
      %v1748 = vand.u32 2147483647, %v330
      %v1749 = vand.u32 %v1748, 8388607
      %v1750 = vor.u32 %v1749, 8388608
      %v1751 = vsub.s32 0, %v1750
      %v1752 = vadd.s32 %v1747, 1
      %vm1753 = vcmp.gt.s32.totalorder %v1752, 0
      %v1754 = vsel %vm1753, %v1752, 0
      %v1755 = vshrl.u32 %v1754, 5
      %v1756 = vand.u32 %v1754, 31
      %v1757 = vsub.s32 32, %v1756
      %v1758 = vshrl.u32 683565275, %v1757
      %v1759 = vshll.u32 683565275, %v1756
      %v1760 = vshrl.u32 2475754826, %v1757
      %v1761 = vor.u32 %v1759, %v1760
      %v1762 = vshll.u32 2475754826, %v1756
      %v1763 = vshrl.u32 2131351028, %v1757
      %v1764 = vor.u32 %v1762, %v1763
      %v1765 = vshll.u32 2131351028, %v1756
      %v1766 = vshrl.u32 2102212464, %v1757
      %v1767 = vor.u32 %v1765, %v1766
      %v1768 = vshll.u32 2102212464, %v1756
      %v1769 = vshrl.u32 920167782, %v1757
      %v1770 = vor.u32 %v1768, %v1769
      %v1771 = vshll.u32 920167782, %v1756
      %v1772 = vshrl.u32 1326507024, %v1757
      %v1773 = vor.u32 %v1771, %v1772
      %vm1774 = vcmp.lt.s32.totalorder %v1755, 1
      %vm1775 = vcmp.lt.s32.totalorder %v1755, 2
      %vm1776 = vcmp.lt.s32.totalorder %v1755, 3
      %vm1777 = vcmp.lt.s32.totalorder %v1755, 4
      %v1778 = vsel %vm1774, %v1758, %v1761
      %v1779 = vsel %vm1777, %v1767, 2102212464
      %v1780 = vsel %vm1776, %v1764, %v1779
      %v1781 = vsel %vm1775, %v1778, %v1780
      %v1782 = vsel %vm1774, %v1761, %v1764
      %v1783 = vsel %vm1777, %v1770, 920167782
      %v1784 = vsel %vm1776, %v1767, %v1783
      %v1785 = vsel %vm1775, %v1782, %v1784
      %v1786 = vsel %vm1774, %v1764, %v1767
      %v1787 = vsel %vm1777, %v1773, 1326507024
      %v1788 = vsel %vm1776, %v1770, %v1787
      %v1789 = vsel %vm1775, %v1786, %v1788
      %v1790 = vshll.u32 %v1750, 8
      %v1791 = vand.u32 %v1790, 65535
      %v1792 = vshrl.u32 %v1790, 16
      %v1793 = vand.u32 %v1789, 65535
      %v1794 = vshrl.u32 %v1789, 16
      %v1795 = vmul.u32 %v1791, %v1793
      %v1796 = vmul.u32 %v1791, %v1794
      %v1797 = vmul.u32 %v1792, %v1793
      %v1798 = vmul.u32 %v1792, %v1794
      %v1799 = vshll.u32 %v1796, 16
      %v1800 = vshrl.u32 %v1796, 16
      %v1801 = vshll.u32 %v1797, 16
      %v1802 = vshrl.u32 %v1797, 16
      %vm1803 = vc.u32 %v1795, %v1799
      %v1804 = vsel %vm1803, 1, 0
      %v1805 = vadd.s32 %v1795, %v1799
      %v1806 = vadd.s32 %v1798, %v1804
      %vm1807 = vc.u32 %v1805, %v1801
      %v1808 = vsel %vm1807, 1, 0
      %v1809 = vadd.s32 %v1805, %v1801
      %v1810 = vadd.s32 %v1806, %v1808
      %v1811 = vadd.s32 %v1810, %v1800
      %v1812 = vadd.s32 %v1811, %v1802
      %v1813 = vand.u32 %v1790, 65535
      %v1814 = vshrl.u32 %v1790, 16
      %v1815 = vand.u32 %v1785, 65535
      %v1816 = vshrl.u32 %v1785, 16
      %v1817 = vmul.u32 %v1813, %v1815
      %v1818 = vmul.u32 %v1813, %v1816
      %v1819 = vmul.u32 %v1814, %v1815
      %v1820 = vmul.u32 %v1814, %v1816
      %v1821 = vshll.u32 %v1818, 16
      %v1822 = vshrl.u32 %v1818, 16
      %v1823 = vshll.u32 %v1819, 16
      %v1824 = vshrl.u32 %v1819, 16
      %vm1825 = vc.u32 %v1817, %v1821
      %v1826 = vsel %vm1825, 1, 0
      %v1827 = vadd.s32 %v1817, %v1821
      %v1828 = vadd.s32 %v1820, %v1826
      %vm1829 = vc.u32 %v1827, %v1823
      %v1830 = vsel %vm1829, 1, 0
      %v1831 = vadd.s32 %v1827, %v1823
      %v1832 = vadd.s32 %v1828, %v1830
      %v1833 = vadd.s32 %v1832, %v1822
      %v1834 = vadd.s32 %v1833, %v1824
      %v1835 = vmul.u32 %v1790, %v1781
      %v1836 = vadd.s32 %v1812, %v1831
      %vm1837 = vc.u32 %v1812, %v1831
      %v1838 = vadd.s32 %v1834, 1
      %v1839 = vsel %vm1837, %v1838, %v1834
      %v1840 = vadd.s32 %v1835, %v1839
      %v1841 = vadd.s32 %v1840, 536870912
      %v1842 = vshrl.u32 %v1841, 30
      %v1843 = vshll.u32 %v1842, 30
      %v1844 = vsub.s32 %v1840, %v1843
      %vm1845 = vcmp.lt.s32.totalorder %v1844, 0
      %v1846 = vsub.s32 0, %v1844
      %v1847 = vsel %vm1845, %v1846, %v1844
      %v1848 = vclz %v1847
      %v1849 = vsub.s32 %v1848, 2
      %vm1850 = vcmp.gt.s32.totalorder 0, %v1849
      %v1851 = vsel %vm1850, 0, %v1849
      %v1852 = vsub.s32 32, %v1851
      %v1853 = vshll.u32 %v1844, %v1851
      %v1854 = vshrl.u32 %v1836, %v1852
      %v1855 = vor.u32 %v1853, %v1854
      %v1856 = vsub.s32 4294967266, %v1851
      %v1857 = vadd.s32 %v1856, 127
      %v1858 = vshll.u32 %v1857, 23
      %v1859 = vor.u32 4788187, %v1858
      %v1860 = vand.u32 2147483647, %v1859
      %v1862 = vcvt.s32.f32 %v1855
      %v1863 = vmul.f32 %v1862, %v1860
      %v1864 = vxor.u32 %v1863, 2147483648
      %v1865 = vsel %vm1744, %v1864, %v1863
      %v1866 = vsub.s32 4, %v1842
      %v1867 = vsel %vm1744, %v1866, %v1842
      %v1868 = vsel %vm1743, %v330, %v1865
      %v1869 = vsel %vm1743, 0, %v1867
      %v1870 = vmul.f32 %v1868, %v1868
      %v1871 = vmul.f32 %v1870, -0.001358992
      %v1872 = vadd.f32 %v1871, 0.041655596
      %v1873 = vmul.f32 %v1870, %v1872
      %v1874 = vadd.f32 %v1873, -0.4999988
      %v1875 = vmul.f32 %v1870, %v1874
      %v1876 = vadd.f32 1.0, %v1875
      %v1877 = vmul.f32 %v1868, %v1868
      %v1878 = vmul.f32 %v1877, -0.00019511016
      %v1879 = vadd.f32 %v1878, 0.008332121
      %v1880 = vmul.f32 %v1877, %v1879
      %v1881 = vadd.f32 %v1880, -0.16666654
      %v1882 = vmul.f32 %v1877, %v1881
      %v1883 = vadd.f32 %v1882, 1.0
      %v1884 = vmul.f32 %v1883, %v1868
      %vm1885 = vweird.f32 %v330
      %v1886 = vadd.s32 %v1869, 3
      %v1887 = vand.u32 %v1886, 3
      %vm1888 = vcmp.lt.s32.totalorder %v1887, 2
      %vm1889 = vcmp.eq.s32.totalorder %v1887, 0
      %v1890 = vxor.u32 %v1884, 2147483648
      %v1891 = vsel %vm1889, %v1876, %v1890
      %vm1892 = vcmp.eq.s32.totalorder %v1887, 2
      %v1893 = vxor.u32 %v1876, 2147483648
      %v1894 = vsel %vm1892, %v1893, %v1884
      %v1895 = vsel %vm1888, %v1891, %v1894
      %v1896 = vsel %vm1885, nan, %v1895
      %v1897 = vand.u32 2147483647, %v331
      %vm1898 = vcmp.le.f32.partialorder %v1897, 0.7853982
      %vm1899 = vcmp.lt.s32.totalorder %v331, 0
      %v1900 = vand.u32 %v331, 2139095040
      %v1901 = vshrl.u32 %v1900, 23
      %v1902 = vsub.s32 %v1901, 127
      %v1903 = vand.u32 2147483647, %v331
      %v1904 = vand.u32 %v1903, 8388607
      %v1905 = vor.u32 %v1904, 8388608
      %v1906 = vsub.s32 0, %v1905
      %v1907 = vadd.s32 %v1902, 1
      %vm1908 = vcmp.gt.s32.totalorder %v1907, 0
      %v1909 = vsel %vm1908, %v1907, 0
      %v1910 = vshrl.u32 %v1909, 5
      %v1911 = vand.u32 %v1909, 31
      %v1912 = vsub.s32 32, %v1911
      %v1913 = vshrl.u32 683565275, %v1912
      %v1914 = vshll.u32 683565275, %v1911
      %v1915 = vshrl.u32 2475754826, %v1912
      %v1916 = vor.u32 %v1914, %v1915
      %v1917 = vshll.u32 2475754826, %v1911
      %v1918 = vshrl.u32 2131351028, %v1912
      %v1919 = vor.u32 %v1917, %v1918
      %v1920 = vshll.u32 2131351028, %v1911
      %v1921 = vshrl.u32 2102212464, %v1912
      %v1922 = vor.u32 %v1920, %v1921
      %v1923 = vshll.u32 2102212464, %v1911
      %v1924 = vshrl.u32 920167782, %v1912
      %v1925 = vor.u32 %v1923, %v1924
      %v1926 = vshll.u32 920167782, %v1911
      %v1927 = vshrl.u32 1326507024, %v1912
      %v1928 = vor.u32 %v1926, %v1927
      %vm1929 = vcmp.lt.s32.totalorder %v1910, 1
      %vm1930 = vcmp.lt.s32.totalorder %v1910, 2
      %vm1931 = vcmp.lt.s32.totalorder %v1910, 3
      %vm1932 = vcmp.lt.s32.totalorder %v1910, 4
      %v1933 = vsel %vm1929, %v1913, %v1916
      %v1934 = vsel %vm1932, %v1922, 2102212464
      %v1935 = vsel %vm1931, %v1919, %v1934
      %v1936 = vsel %vm1930, %v1933, %v1935
      %v1937 = vsel %vm1929, %v1916, %v1919
      %v1938 = vsel %vm1932, %v1925, 920167782
      %v1939 = vsel %vm1931, %v1922, %v1938
      %v1940 = vsel %vm1930, %v1937, %v1939
      %v1941 = vsel %vm1929, %v1919, %v1922
      %v1942 = vsel %vm1932, %v1928, 1326507024
      %v1943 = vsel %vm1931, %v1925, %v1942
      %v1944 = vsel %vm1930, %v1941, %v1943
      %v1945 = vshll.u32 %v1905, 8
      %v1946 = vand.u32 %v1945, 65535
      %v1947 = vshrl.u32 %v1945, 16
      %v1948 = vand.u32 %v1944, 65535
      %v1949 = vshrl.u32 %v1944, 16
      %v1950 = vmul.u32 %v1946, %v1948
      %v1951 = vmul.u32 %v1946, %v1949
      %v1952 = vmul.u32 %v1947, %v1948
      %v1953 = vmul.u32 %v1947, %v1949
      %v1954 = vshll.u32 %v1951, 16
      %v1955 = vshrl.u32 %v1951, 16
      %v1956 = vshll.u32 %v1952, 16
      %v1957 = vshrl.u32 %v1952, 16
      %vm1958 = vc.u32 %v1950, %v1954
      %v1959 = vsel %vm1958, 1, 0
      %v1960 = vadd.s32 %v1950, %v1954
      %v1961 = vadd.s32 %v1953, %v1959
      %vm1962 = vc.u32 %v1960, %v1956
      %v1963 = vsel %vm1962, 1, 0
      %v1964 = vadd.s32 %v1960, %v1956
      %v1965 = vadd.s32 %v1961, %v1963
      %v1966 = vadd.s32 %v1965, %v1955
      %v1967 = vadd.s32 %v1966, %v1957
      %v1968 = vand.u32 %v1945, 65535
      %v1969 = vshrl.u32 %v1945, 16
      %v1970 = vand.u32 %v1940, 65535
      %v1971 = vshrl.u32 %v1940, 16
      %v1972 = vmul.u32 %v1968, %v1970
      %v1973 = vmul.u32 %v1968, %v1971
      %v1974 = vmul.u32 %v1969, %v1970
      %v1975 = vmul.u32 %v1969, %v1971
      %v1976 = vshll.u32 %v1973, 16
      %v1977 = vshrl.u32 %v1973, 16
      %v1978 = vshll.u32 %v1974, 16
      %v1979 = vshrl.u32 %v1974, 16
      %vm1980 = vc.u32 %v1972, %v1976
      %v1981 = vsel %vm1980, 1, 0
      %v1982 = vadd.s32 %v1972, %v1976
      %v1983 = vadd.s32 %v1975, %v1981
      %vm1984 = vc.u32 %v1982, %v1978
      %v1985 = vsel %vm1984, 1, 0
      %v1986 = vadd.s32 %v1982, %v1978
      %v1987 = vadd.s32 %v1983, %v1985
      %v1988 = vadd.s32 %v1987, %v1977
      %v1989 = vadd.s32 %v1988, %v1979
      %v1990 = vmul.u32 %v1945, %v1936
      %v1991 = vadd.s32 %v1967, %v1986
      %vm1992 = vc.u32 %v1967, %v1986
      %v1993 = vadd.s32 %v1989, 1
      %v1994 = vsel %vm1992, %v1993, %v1989
      %v1995 = vadd.s32 %v1990, %v1994
      %v1996 = vadd.s32 %v1995, 536870912
      %v1997 = vshrl.u32 %v1996, 30
      %v1998 = vshll.u32 %v1997, 30
      %v1999 = vsub.s32 %v1995, %v1998
      %vm2000 = vcmp.lt.s32.totalorder %v1999, 0
      %v2001 = vsub.s32 0, %v1999
      %v2002 = vsel %vm2000, %v2001, %v1999
      %v2003 = vclz %v2002
      %v2004 = vsub.s32 %v2003, 2
      %vm2005 = vcmp.gt.s32.totalorder 0, %v2004
      %v2006 = vsel %vm2005, 0, %v2004
      %v2007 = vsub.s32 32, %v2006
      %v2008 = vshll.u32 %v1999, %v2006
      %v2009 = vshrl.u32 %v1991, %v2007
      %v2010 = vor.u32 %v2008, %v2009
      %v2011 = vsub.s32 4294967266, %v2006
      %v2012 = vadd.s32 %v2011, 127
      %v2013 = vshll.u32 %v2012, 23
      %v2014 = vor.u32 4788187, %v2013
      %v2015 = vand.u32 2147483647, %v2014
      %v2017 = vcvt.s32.f32 %v2010
      %v2018 = vmul.f32 %v2017, %v2015
      %v2019 = vxor.u32 %v2018, 2147483648
      %v2020 = vsel %vm1899, %v2019, %v2018
      %v2021 = vsub.s32 4, %v1997
      %v2022 = vsel %vm1899, %v2021, %v1997
      %v2023 = vsel %vm1898, %v331, %v2020
      %v2024 = vsel %vm1898, 0, %v2022
      %v2025 = vmul.f32 %v2023, %v2023
      %v2026 = vmul.f32 %v2025, -0.001358992
      %v2027 = vadd.f32 %v2026, 0.041655596
      %v2028 = vmul.f32 %v2025, %v2027
      %v2029 = vadd.f32 %v2028, -0.4999988
      %v2030 = vmul.f32 %v2025, %v2029
      %v2031 = vadd.f32 1.0, %v2030
      %v2032 = vmul.f32 %v2023, %v2023
      %v2033 = vmul.f32 %v2032, -0.00019511016
      %v2034 = vadd.f32 %v2033, 0.008332121
      %v2035 = vmul.f32 %v2032, %v2034
      %v2036 = vadd.f32 %v2035, -0.16666654
      %v2037 = vmul.f32 %v2032, %v2036
      %v2038 = vadd.f32 %v2037, 1.0
      %v2039 = vmul.f32 %v2038, %v2023
      %vm2040 = vweird.f32 %v331
      %v2041 = vadd.s32 %v2024, 3
      %v2042 = vand.u32 %v2041, 3
      %vm2043 = vcmp.lt.s32.totalorder %v2042, 2
      %vm2044 = vcmp.eq.s32.totalorder %v2042, 0
      %v2045 = vxor.u32 %v2039, 2147483648
      %v2046 = vsel %vm2044, %v2031, %v2045
      %vm2047 = vcmp.eq.s32.totalorder %v2042, 2
      %v2048 = vxor.u32 %v2031, 2147483648
      %v2049 = vsel %vm2047, %v2048, %v2039
      %v2050 = vsel %vm2043, %v2046, %v2049
      %v2051 = vsel %vm2040, nan, %v2050
      %v2052 = vand.u32 2147483647, %v332
      %vm2053 = vcmp.le.f32.partialorder %v2052, 0.7853982
      %vm2054 = vcmp.lt.s32.totalorder %v332, 0
      %v2055 = vand.u32 %v332, 2139095040
      %v2056 = vshrl.u32 %v2055, 23
      %v2057 = vsub.s32 %v2056, 127
      %v2058 = vand.u32 2147483647, %v332
      %v2059 = vand.u32 %v2058, 8388607
      %v2060 = vor.u32 %v2059, 8388608
      %v2061 = vsub.s32 0, %v2060
      %v2062 = vadd.s32 %v2057, 1
      %vm2063 = vcmp.gt.s32.totalorder %v2062, 0
      %v2064 = vsel %vm2063, %v2062, 0
      %v2065 = vshrl.u32 %v2064, 5
      %v2066 = vand.u32 %v2064, 31
      %v2067 = vsub.s32 32, %v2066
      %v2068 = vshrl.u32 683565275, %v2067
      %v2069 = vshll.u32 683565275, %v2066
      %v2070 = vshrl.u32 2475754826, %v2067
      %v2071 = vor.u32 %v2069, %v2070
      %v2072 = vshll.u32 2475754826, %v2066
      %v2073 = vshrl.u32 2131351028, %v2067
      %v2074 = vor.u32 %v2072, %v2073
      %v2075 = vshll.u32 2131351028, %v2066
      %v2076 = vshrl.u32 2102212464, %v2067
      %v2077 = vor.u32 %v2075, %v2076
      %v2078 = vshll.u32 2102212464, %v2066
      %v2079 = vshrl.u32 920167782, %v2067
      %v2080 = vor.u32 %v2078, %v2079
      %v2081 = vshll.u32 920167782, %v2066
      %v2082 = vshrl.u32 1326507024, %v2067
      %v2083 = vor.u32 %v2081, %v2082
      %vm2084 = vcmp.lt.s32.totalorder %v2065, 1
      %vm2085 = vcmp.lt.s32.totalorder %v2065, 2
      %vm2086 = vcmp.lt.s32.totalorder %v2065, 3
      %vm2087 = vcmp.lt.s32.totalorder %v2065, 4
      %v2088 = vsel %vm2084, %v2068, %v2071
      %v2089 = vsel %vm2087, %v2077, 2102212464
      %v2090 = vsel %vm2086, %v2074, %v2089
      %v2091 = vsel %vm2085, %v2088, %v2090
      %v2092 = vsel %vm2084, %v2071, %v2074
      %v2093 = vsel %vm2087, %v2080, 920167782
      %v2094 = vsel %vm2086, %v2077, %v2093
      %v2095 = vsel %vm2085, %v2092, %v2094
      %v2096 = vsel %vm2084, %v2074, %v2077
      %v2097 = vsel %vm2087, %v2083, 1326507024
      %v2098 = vsel %vm2086, %v2080, %v2097
      %v2099 = vsel %vm2085, %v2096, %v2098
      %v2100 = vshll.u32 %v2060, 8
      %v2101 = vand.u32 %v2100, 65535
      %v2102 = vshrl.u32 %v2100, 16
      %v2103 = vand.u32 %v2099, 65535
      %v2104 = vshrl.u32 %v2099, 16
      %v2105 = vmul.u32 %v2101, %v2103
      %v2106 = vmul.u32 %v2101, %v2104
      %v2107 = vmul.u32 %v2102, %v2103
      %v2108 = vmul.u32 %v2102, %v2104
      %v2109 = vshll.u32 %v2106, 16
      %v2110 = vshrl.u32 %v2106, 16
      %v2111 = vshll.u32 %v2107, 16
      %v2112 = vshrl.u32 %v2107, 16
      %vm2113 = vc.u32 %v2105, %v2109
      %v2114 = vsel %vm2113, 1, 0
      %v2115 = vadd.s32 %v2105, %v2109
      %v2116 = vadd.s32 %v2108, %v2114
      %vm2117 = vc.u32 %v2115, %v2111
      %v2118 = vsel %vm2117, 1, 0
      %v2119 = vadd.s32 %v2115, %v2111
      %v2120 = vadd.s32 %v2116, %v2118
      %v2121 = vadd.s32 %v2120, %v2110
      %v2122 = vadd.s32 %v2121, %v2112
      %v2123 = vand.u32 %v2100, 65535
      %v2124 = vshrl.u32 %v2100, 16
      %v2125 = vand.u32 %v2095, 65535
      %v2126 = vshrl.u32 %v2095, 16
      %v2127 = vmul.u32 %v2123, %v2125
      %v2128 = vmul.u32 %v2123, %v2126
      %v2129 = vmul.u32 %v2124, %v2125
      %v2130 = vmul.u32 %v2124, %v2126
      %v2131 = vshll.u32 %v2128, 16
      %v2132 = vshrl.u32 %v2128, 16
      %v2133 = vshll.u32 %v2129, 16
      %v2134 = vshrl.u32 %v2129, 16
      %vm2135 = vc.u32 %v2127, %v2131
      %v2136 = vsel %vm2135, 1, 0
      %v2137 = vadd.s32 %v2127, %v2131
      %v2138 = vadd.s32 %v2130, %v2136
      %vm2139 = vc.u32 %v2137, %v2133
      %v2140 = vsel %vm2139, 1, 0
      %v2141 = vadd.s32 %v2137, %v2133
      %v2142 = vadd.s32 %v2138, %v2140
      %v2143 = vadd.s32 %v2142, %v2132
      %v2144 = vadd.s32 %v2143, %v2134
      %v2145 = vmul.u32 %v2100, %v2091
      %v2146 = vadd.s32 %v2122, %v2141
      %vm2147 = vc.u32 %v2122, %v2141
      %v2148 = vadd.s32 %v2144, 1
      %v2149 = vsel %vm2147, %v2148, %v2144
      %v2150 = vadd.s32 %v2145, %v2149
      %v2151 = vadd.s32 %v2150, 536870912
      %v2152 = vshrl.u32 %v2151, 30
      %v2153 = vshll.u32 %v2152, 30
      %v2154 = vsub.s32 %v2150, %v2153
      %vm2155 = vcmp.lt.s32.totalorder %v2154, 0
      %v2156 = vsub.s32 0, %v2154
      %v2157 = vsel %vm2155, %v2156, %v2154
      %v2158 = vclz %v2157
      %v2159 = vsub.s32 %v2158, 2
      %vm2160 = vcmp.gt.s32.totalorder 0, %v2159
      %v2161 = vsel %vm2160, 0, %v2159
      %v2162 = vsub.s32 32, %v2161
      %v2163 = vshll.u32 %v2154, %v2161
      %v2164 = vshrl.u32 %v2146, %v2162
      %v2165 = vor.u32 %v2163, %v2164
      %v2166 = vsub.s32 4294967266, %v2161
      %v2167 = vadd.s32 %v2166, 127
      %v2168 = vshll.u32 %v2167, 23
      %v2169 = vor.u32 4788187, %v2168
      %v2170 = vand.u32 2147483647, %v2169
      %v2172 = vcvt.s32.f32 %v2165
      %v2173 = vmul.f32 %v2172, %v2170
      %v2174 = vxor.u32 %v2173, 2147483648
      %v2175 = vsel %vm2054, %v2174, %v2173
      %v2176 = vsub.s32 4, %v2152
      %v2177 = vsel %vm2054, %v2176, %v2152
      %v2178 = vsel %vm2053, %v332, %v2175
      %v2179 = vsel %vm2053, 0, %v2177
      %v2180 = vmul.f32 %v2178, %v2178
      %v2181 = vmul.f32 %v2180, -0.001358992
      %v2182 = vadd.f32 %v2181, 0.041655596
      %v2183 = vmul.f32 %v2180, %v2182
      %v2184 = vadd.f32 %v2183, -0.4999988
      %v2185 = vmul.f32 %v2180, %v2184
      %v2186 = vadd.f32 1.0, %v2185
      %v2187 = vmul.f32 %v2178, %v2178
      %v2188 = vmul.f32 %v2187, -0.00019511016
      %v2189 = vadd.f32 %v2188, 0.008332121
      %v2190 = vmul.f32 %v2187, %v2189
      %v2191 = vadd.f32 %v2190, -0.16666654
      %v2192 = vmul.f32 %v2187, %v2191
      %v2193 = vadd.f32 %v2192, 1.0
      %v2194 = vmul.f32 %v2193, %v2178
      %vm2195 = vweird.f32 %v332
      %v2196 = vadd.s32 %v2179, 3
      %v2197 = vand.u32 %v2196, 3
      %vm2198 = vcmp.lt.s32.totalorder %v2197, 2
      %vm2199 = vcmp.eq.s32.totalorder %v2197, 0
      %v2200 = vxor.u32 %v2194, 2147483648
      %v2201 = vsel %vm2199, %v2186, %v2200
      %vm2202 = vcmp.eq.s32.totalorder %v2197, 2
      %v2203 = vxor.u32 %v2186, 2147483648
      %v2204 = vsel %vm2202, %v2203, %v2194
      %v2205 = vsel %vm2198, %v2201, %v2204
      %v2206 = vsel %vm2195, nan, %v2205
      %v2207 = vand.u32 2147483647, %v333
      %vm2208 = vcmp.le.f32.partialorder %v2207, 0.7853982
      %vm2209 = vcmp.lt.s32.totalorder %v333, 0
      %v2210 = vand.u32 %v333, 2139095040
      %v2211 = vshrl.u32 %v2210, 23
      %v2212 = vsub.s32 %v2211, 127
      %v2213 = vand.u32 2147483647, %v333
      %v2214 = vand.u32 %v2213, 8388607
      %v2215 = vor.u32 %v2214, 8388608
      %v2216 = vsub.s32 0, %v2215
      %v2217 = vadd.s32 %v2212, 1
      %vm2218 = vcmp.gt.s32.totalorder %v2217, 0
      %v2219 = vsel %vm2218, %v2217, 0
      %v2220 = vshrl.u32 %v2219, 5
      %v2221 = vand.u32 %v2219, 31
      %v2222 = vsub.s32 32, %v2221
      %v2223 = vshrl.u32 683565275, %v2222
      %v2224 = vshll.u32 683565275, %v2221
      %v2225 = vshrl.u32 2475754826, %v2222
      %v2226 = vor.u32 %v2224, %v2225
      %v2227 = vshll.u32 2475754826, %v2221
      %v2228 = vshrl.u32 2131351028, %v2222
      %v2229 = vor.u32 %v2227, %v2228
      %v2230 = vshll.u32 2131351028, %v2221
      %v2231 = vshrl.u32 2102212464, %v2222
      %v2232 = vor.u32 %v2230, %v2231
      %v2233 = vshll.u32 2102212464, %v2221
      %v2234 = vshrl.u32 920167782, %v2222
      %v2235 = vor.u32 %v2233, %v2234
      %v2236 = vshll.u32 920167782, %v2221
      %v2237 = vshrl.u32 1326507024, %v2222
      %v2238 = vor.u32 %v2236, %v2237
      %vm2239 = vcmp.lt.s32.totalorder %v2220, 1
      %vm2240 = vcmp.lt.s32.totalorder %v2220, 2
      %vm2241 = vcmp.lt.s32.totalorder %v2220, 3
      %vm2242 = vcmp.lt.s32.totalorder %v2220, 4
      %v2243 = vsel %vm2239, %v2223, %v2226
      %v2244 = vsel %vm2242, %v2232, 2102212464
      %v2245 = vsel %vm2241, %v2229, %v2244
      %v2246 = vsel %vm2240, %v2243, %v2245
      %v2247 = vsel %vm2239, %v2226, %v2229
      %v2248 = vsel %vm2242, %v2235, 920167782
      %v2249 = vsel %vm2241, %v2232, %v2248
      %v2250 = vsel %vm2240, %v2247, %v2249
      %v2251 = vsel %vm2239, %v2229, %v2232
      %v2252 = vsel %vm2242, %v2238, 1326507024
      %v2253 = vsel %vm2241, %v2235, %v2252
      %v2254 = vsel %vm2240, %v2251, %v2253
      %v2255 = vshll.u32 %v2215, 8
      %v2256 = vand.u32 %v2255, 65535
      %v2257 = vshrl.u32 %v2255, 16
      %v2258 = vand.u32 %v2254, 65535
      %v2259 = vshrl.u32 %v2254, 16
      %v2260 = vmul.u32 %v2256, %v2258
      %v2261 = vmul.u32 %v2256, %v2259
      %v2262 = vmul.u32 %v2257, %v2258
      %v2263 = vmul.u32 %v2257, %v2259
      %v2264 = vshll.u32 %v2261, 16
      %v2265 = vshrl.u32 %v2261, 16
      %v2266 = vshll.u32 %v2262, 16
      %v2267 = vshrl.u32 %v2262, 16
      %vm2268 = vc.u32 %v2260, %v2264
      %v2269 = vsel %vm2268, 1, 0
      %v2270 = vadd.s32 %v2260, %v2264
      %v2271 = vadd.s32 %v2263, %v2269
      %vm2272 = vc.u32 %v2270, %v2266
      %v2273 = vsel %vm2272, 1, 0
      %v2274 = vadd.s32 %v2270, %v2266
      %v2275 = vadd.s32 %v2271, %v2273
      %v2276 = vadd.s32 %v2275, %v2265
      %v2277 = vadd.s32 %v2276, %v2267
      %v2278 = vand.u32 %v2255, 65535
      %v2279 = vshrl.u32 %v2255, 16
      %v2280 = vand.u32 %v2250, 65535
      %v2281 = vshrl.u32 %v2250, 16
      %v2282 = vmul.u32 %v2278, %v2280
      %v2283 = vmul.u32 %v2278, %v2281
      %v2284 = vmul.u32 %v2279, %v2280
      %v2285 = vmul.u32 %v2279, %v2281
      %v2286 = vshll.u32 %v2283, 16
      %v2287 = vshrl.u32 %v2283, 16
      %v2288 = vshll.u32 %v2284, 16
      %v2289 = vshrl.u32 %v2284, 16
      %vm2290 = vc.u32 %v2282, %v2286
      %v2291 = vsel %vm2290, 1, 0
      %v2292 = vadd.s32 %v2282, %v2286
      %v2293 = vadd.s32 %v2285, %v2291
      %vm2294 = vc.u32 %v2292, %v2288
      %v2295 = vsel %vm2294, 1, 0
      %v2296 = vadd.s32 %v2292, %v2288
      %v2297 = vadd.s32 %v2293, %v2295
      %v2298 = vadd.s32 %v2297, %v2287
      %v2299 = vadd.s32 %v2298, %v2289
      %v2300 = vmul.u32 %v2255, %v2246
      %v2301 = vadd.s32 %v2277, %v2296
      %vm2302 = vc.u32 %v2277, %v2296
      %v2303 = vadd.s32 %v2299, 1
      %v2304 = vsel %vm2302, %v2303, %v2299
      %v2305 = vadd.s32 %v2300, %v2304
      %v2306 = vadd.s32 %v2305, 536870912
      %v2307 = vshrl.u32 %v2306, 30
      %v2308 = vshll.u32 %v2307, 30
      %v2309 = vsub.s32 %v2305, %v2308
      %vm2310 = vcmp.lt.s32.totalorder %v2309, 0
      %v2311 = vsub.s32 0, %v2309
      %v2312 = vsel %vm2310, %v2311, %v2309
      %v2313 = vclz %v2312
      %v2314 = vsub.s32 %v2313, 2
      %vm2315 = vcmp.gt.s32.totalorder 0, %v2314
      %v2316 = vsel %vm2315, 0, %v2314
      %v2317 = vsub.s32 32, %v2316
      %v2318 = vshll.u32 %v2309, %v2316
      %v2319 = vshrl.u32 %v2301, %v2317
      %v2320 = vor.u32 %v2318, %v2319
      %v2321 = vsub.s32 4294967266, %v2316
      %v2322 = vadd.s32 %v2321, 127
      %v2323 = vshll.u32 %v2322, 23
      %v2324 = vor.u32 4788187, %v2323
      %v2325 = vand.u32 2147483647, %v2324
      %v2327 = vcvt.s32.f32 %v2320
      %v2328 = vmul.f32 %v2327, %v2325
      %v2329 = vxor.u32 %v2328, 2147483648
      %v2330 = vsel %vm2209, %v2329, %v2328
      %v2331 = vsub.s32 4, %v2307
      %v2332 = vsel %vm2209, %v2331, %v2307
      %v2333 = vsel %vm2208, %v333, %v2330
      %v2334 = vsel %vm2208, 0, %v2332
      %v2335 = vmul.f32 %v2333, %v2333
      %v2336 = vmul.f32 %v2335, -0.001358992
      %v2337 = vadd.f32 %v2336, 0.041655596
      %v2338 = vmul.f32 %v2335, %v2337
      %v2339 = vadd.f32 %v2338, -0.4999988
      %v2340 = vmul.f32 %v2335, %v2339
      %v2341 = vadd.f32 1.0, %v2340
      %v2342 = vmul.f32 %v2333, %v2333
      %v2343 = vmul.f32 %v2342, -0.00019511016
      %v2344 = vadd.f32 %v2343, 0.008332121
      %v2345 = vmul.f32 %v2342, %v2344
      %v2346 = vadd.f32 %v2345, -0.16666654
      %v2347 = vmul.f32 %v2342, %v2346
      %v2348 = vadd.f32 %v2347, 1.0
      %v2349 = vmul.f32 %v2348, %v2333
      %vm2350 = vweird.f32 %v333
      %v2351 = vadd.s32 %v2334, 3
      %v2352 = vand.u32 %v2351, 3
      %vm2353 = vcmp.lt.s32.totalorder %v2352, 2
      %vm2354 = vcmp.eq.s32.totalorder %v2352, 0
      %v2355 = vxor.u32 %v2349, 2147483648
      %v2356 = vsel %vm2354, %v2341, %v2355
      %vm2357 = vcmp.eq.s32.totalorder %v2352, 2
      %v2358 = vxor.u32 %v2341, 2147483648
      %v2359 = vsel %vm2357, %v2358, %v2349
      %v2360 = vsel %vm2353, %v2356, %v2359
      %v2361 = vsel %vm2350, nan, %v2360
      %v2362 = vand.u32 2147483647, %v334
      %vm2363 = vcmp.le.f32.partialorder %v2362, 0.7853982
      %vm2364 = vcmp.lt.s32.totalorder %v334, 0
      %v2365 = vand.u32 %v334, 2139095040
      %v2366 = vshrl.u32 %v2365, 23
      %v2367 = vsub.s32 %v2366, 127
      %v2368 = vand.u32 2147483647, %v334
      %v2369 = vand.u32 %v2368, 8388607
      %v2370 = vor.u32 %v2369, 8388608
      %v2371 = vsub.s32 0, %v2370
      %v2372 = vadd.s32 %v2367, 1
      %vm2373 = vcmp.gt.s32.totalorder %v2372, 0
      %v2374 = vsel %vm2373, %v2372, 0
      %v2375 = vshrl.u32 %v2374, 5
      %v2376 = vand.u32 %v2374, 31
      %v2377 = vsub.s32 32, %v2376
      %v2378 = vshrl.u32 683565275, %v2377
      %v2379 = vshll.u32 683565275, %v2376
      %v2380 = vshrl.u32 2475754826, %v2377
      %v2381 = vor.u32 %v2379, %v2380
      %v2382 = vshll.u32 2475754826, %v2376
      %v2383 = vshrl.u32 2131351028, %v2377
      %v2384 = vor.u32 %v2382, %v2383
      %v2385 = vshll.u32 2131351028, %v2376
      %v2386 = vshrl.u32 2102212464, %v2377
      %v2387 = vor.u32 %v2385, %v2386
      %v2388 = vshll.u32 2102212464, %v2376
      %v2389 = vshrl.u32 920167782, %v2377
      %v2390 = vor.u32 %v2388, %v2389
      %v2391 = vshll.u32 920167782, %v2376
      %v2392 = vshrl.u32 1326507024, %v2377
      %v2393 = vor.u32 %v2391, %v2392
      %vm2394 = vcmp.lt.s32.totalorder %v2375, 1
      %vm2395 = vcmp.lt.s32.totalorder %v2375, 2
      %vm2396 = vcmp.lt.s32.totalorder %v2375, 3
      %vm2397 = vcmp.lt.s32.totalorder %v2375, 4
      %v2398 = vsel %vm2394, %v2378, %v2381
      %v2399 = vsel %vm2397, %v2387, 2102212464
      %v2400 = vsel %vm2396, %v2384, %v2399
      %v2401 = vsel %vm2395, %v2398, %v2400
      %v2402 = vsel %vm2394, %v2381, %v2384
      %v2403 = vsel %vm2397, %v2390, 920167782
      %v2404 = vsel %vm2396, %v2387, %v2403
      %v2405 = vsel %vm2395, %v2402, %v2404
      %v2406 = vsel %vm2394, %v2384, %v2387
      %v2407 = vsel %vm2397, %v2393, 1326507024
      %v2408 = vsel %vm2396, %v2390, %v2407
      %v2409 = vsel %vm2395, %v2406, %v2408
      %v2410 = vshll.u32 %v2370, 8
      %v2411 = vand.u32 %v2410, 65535
      %v2412 = vshrl.u32 %v2410, 16
      %v2413 = vand.u32 %v2409, 65535
      %v2414 = vshrl.u32 %v2409, 16
      %v2415 = vmul.u32 %v2411, %v2413
      %v2416 = vmul.u32 %v2411, %v2414
      %v2417 = vmul.u32 %v2412, %v2413
      %v2418 = vmul.u32 %v2412, %v2414
      %v2419 = vshll.u32 %v2416, 16
      %v2420 = vshrl.u32 %v2416, 16
      %v2421 = vshll.u32 %v2417, 16
      %v2422 = vshrl.u32 %v2417, 16
      %vm2423 = vc.u32 %v2415, %v2419
      %v2424 = vsel %vm2423, 1, 0
      %v2425 = vadd.s32 %v2415, %v2419
      %v2426 = vadd.s32 %v2418, %v2424
      %vm2427 = vc.u32 %v2425, %v2421
      %v2428 = vsel %vm2427, 1, 0
      %v2429 = vadd.s32 %v2425, %v2421
      %v2430 = vadd.s32 %v2426, %v2428
      %v2431 = vadd.s32 %v2430, %v2420
      %v2432 = vadd.s32 %v2431, %v2422
      %v2433 = vand.u32 %v2410, 65535
      %v2434 = vshrl.u32 %v2410, 16
      %v2435 = vand.u32 %v2405, 65535
      %v2436 = vshrl.u32 %v2405, 16
      %v2437 = vmul.u32 %v2433, %v2435
      %v2438 = vmul.u32 %v2433, %v2436
      %v2439 = vmul.u32 %v2434, %v2435
      %v2440 = vmul.u32 %v2434, %v2436
      %v2441 = vshll.u32 %v2438, 16
      %v2442 = vshrl.u32 %v2438, 16
      %v2443 = vshll.u32 %v2439, 16
      %v2444 = vshrl.u32 %v2439, 16
      %vm2445 = vc.u32 %v2437, %v2441
      %v2446 = vsel %vm2445, 1, 0
      %v2447 = vadd.s32 %v2437, %v2441
      %v2448 = vadd.s32 %v2440, %v2446
      %vm2449 = vc.u32 %v2447, %v2443
      %v2450 = vsel %vm2449, 1, 0
      %v2451 = vadd.s32 %v2447, %v2443
      %v2452 = vadd.s32 %v2448, %v2450
      %v2453 = vadd.s32 %v2452, %v2442
      %v2454 = vadd.s32 %v2453, %v2444
      %v2455 = vmul.u32 %v2410, %v2401
      %v2456 = vadd.s32 %v2432, %v2451
      %vm2457 = vc.u32 %v2432, %v2451
      %v2458 = vadd.s32 %v2454, 1
      %v2459 = vsel %vm2457, %v2458, %v2454
      %v2460 = vadd.s32 %v2455, %v2459
      %v2461 = vadd.s32 %v2460, 536870912
      %v2462 = vshrl.u32 %v2461, 30
      %v2463 = vshll.u32 %v2462, 30
      %v2464 = vsub.s32 %v2460, %v2463
      %vm2465 = vcmp.lt.s32.totalorder %v2464, 0
      %v2466 = vsub.s32 0, %v2464
      %v2467 = vsel %vm2465, %v2466, %v2464
      %v2468 = vclz %v2467
      %v2469 = vsub.s32 %v2468, 2
      %vm2470 = vcmp.gt.s32.totalorder 0, %v2469
      %v2471 = vsel %vm2470, 0, %v2469
      %v2472 = vsub.s32 32, %v2471
      %v2473 = vshll.u32 %v2464, %v2471
      %v2474 = vshrl.u32 %v2456, %v2472
      %v2475 = vor.u32 %v2473, %v2474
      %v2476 = vsub.s32 4294967266, %v2471
      %v2477 = vadd.s32 %v2476, 127
      %v2478 = vshll.u32 %v2477, 23
      %v2479 = vor.u32 4788187, %v2478
      %v2480 = vand.u32 2147483647, %v2479
      %v2482 = vcvt.s32.f32 %v2475
      %v2483 = vmul.f32 %v2482, %v2480
      %v2484 = vxor.u32 %v2483, 2147483648
      %v2485 = vsel %vm2364, %v2484, %v2483
      %v2486 = vsub.s32 4, %v2462
      %v2487 = vsel %vm2364, %v2486, %v2462
      %v2488 = vsel %vm2363, %v334, %v2485
      %v2489 = vsel %vm2363, 0, %v2487
      %v2490 = vmul.f32 %v2488, %v2488
      %v2491 = vmul.f32 %v2490, -0.001358992
      %v2492 = vadd.f32 %v2491, 0.041655596
      %v2493 = vmul.f32 %v2490, %v2492
      %v2494 = vadd.f32 %v2493, -0.4999988
      %v2495 = vmul.f32 %v2490, %v2494
      %v2496 = vadd.f32 1.0, %v2495
      %v2497 = vmul.f32 %v2488, %v2488
      %v2498 = vmul.f32 %v2497, -0.00019511016
      %v2499 = vadd.f32 %v2498, 0.008332121
      %v2500 = vmul.f32 %v2497, %v2499
      %v2501 = vadd.f32 %v2500, -0.16666654
      %v2502 = vmul.f32 %v2497, %v2501
      %v2503 = vadd.f32 %v2502, 1.0
      %v2504 = vmul.f32 %v2503, %v2488
      %vm2505 = vweird.f32 %v334
      %v2506 = vadd.s32 %v2489, 3
      %v2507 = vand.u32 %v2506, 3
      %vm2508 = vcmp.lt.s32.totalorder %v2507, 2
      %vm2509 = vcmp.eq.s32.totalorder %v2507, 0
      %v2510 = vxor.u32 %v2504, 2147483648
      %v2511 = vsel %vm2509, %v2496, %v2510
      %vm2512 = vcmp.eq.s32.totalorder %v2507, 2
      %v2513 = vxor.u32 %v2496, 2147483648
      %v2514 = vsel %vm2512, %v2513, %v2504
      %v2515 = vsel %vm2508, %v2511, %v2514
      %v2516 = vsel %vm2505, nan, %v2515
      %v2517 = vand.u32 2147483647, %v335
      %vm2518 = vcmp.le.f32.partialorder %v2517, 0.7853982
      %vm2519 = vcmp.lt.s32.totalorder %v335, 0
      %v2520 = vand.u32 %v335, 2139095040
      %v2521 = vshrl.u32 %v2520, 23
      %v2522 = vsub.s32 %v2521, 127
      %v2523 = vand.u32 2147483647, %v335
      %v2524 = vand.u32 %v2523, 8388607
      %v2525 = vor.u32 %v2524, 8388608
      %v2526 = vsub.s32 0, %v2525
      %v2527 = vadd.s32 %v2522, 1
      %vm2528 = vcmp.gt.s32.totalorder %v2527, 0
      %v2529 = vsel %vm2528, %v2527, 0
      %v2530 = vshrl.u32 %v2529, 5
      %v2531 = vand.u32 %v2529, 31
      %v2532 = vsub.s32 32, %v2531
      %v2533 = vshrl.u32 683565275, %v2532
      %v2534 = vshll.u32 683565275, %v2531
      %v2535 = vshrl.u32 2475754826, %v2532
      %v2536 = vor.u32 %v2534, %v2535
      %v2537 = vshll.u32 2475754826, %v2531
      %v2538 = vshrl.u32 2131351028, %v2532
      %v2539 = vor.u32 %v2537, %v2538
      %v2540 = vshll.u32 2131351028, %v2531
      %v2541 = vshrl.u32 2102212464, %v2532
      %v2542 = vor.u32 %v2540, %v2541
      %v2543 = vshll.u32 2102212464, %v2531
      %v2544 = vshrl.u32 920167782, %v2532
      %v2545 = vor.u32 %v2543, %v2544
      %v2546 = vshll.u32 920167782, %v2531
      %v2547 = vshrl.u32 1326507024, %v2532
      %v2548 = vor.u32 %v2546, %v2547
      %vm2549 = vcmp.lt.s32.totalorder %v2530, 1
      %vm2550 = vcmp.lt.s32.totalorder %v2530, 2
      %vm2551 = vcmp.lt.s32.totalorder %v2530, 3
      %vm2552 = vcmp.lt.s32.totalorder %v2530, 4
      %v2553 = vsel %vm2549, %v2533, %v2536
      %v2554 = vsel %vm2552, %v2542, 2102212464
      %v2555 = vsel %vm2551, %v2539, %v2554
      %v2556 = vsel %vm2550, %v2553, %v2555
      %v2557 = vsel %vm2549, %v2536, %v2539
      %v2558 = vsel %vm2552, %v2545, 920167782
      %v2559 = vsel %vm2551, %v2542, %v2558
      %v2560 = vsel %vm2550, %v2557, %v2559
      %v2561 = vsel %vm2549, %v2539, %v2542
      %v2562 = vsel %vm2552, %v2548, 1326507024
      %v2563 = vsel %vm2551, %v2545, %v2562
      %v2564 = vsel %vm2550, %v2561, %v2563
      %v2565 = vshll.u32 %v2525, 8
      %v2566 = vand.u32 %v2565, 65535
      %v2567 = vshrl.u32 %v2565, 16
      %v2568 = vand.u32 %v2564, 65535
      %v2569 = vshrl.u32 %v2564, 16
      %v2570 = vmul.u32 %v2566, %v2568
      %v2571 = vmul.u32 %v2566, %v2569
      %v2572 = vmul.u32 %v2567, %v2568
      %v2573 = vmul.u32 %v2567, %v2569
      %v2574 = vshll.u32 %v2571, 16
      %v2575 = vshrl.u32 %v2571, 16
      %v2576 = vshll.u32 %v2572, 16
      %v2577 = vshrl.u32 %v2572, 16
      %vm2578 = vc.u32 %v2570, %v2574
      %v2579 = vsel %vm2578, 1, 0
      %v2580 = vadd.s32 %v2570, %v2574
      %v2581 = vadd.s32 %v2573, %v2579
      %vm2582 = vc.u32 %v2580, %v2576
      %v2583 = vsel %vm2582, 1, 0
      %v2584 = vadd.s32 %v2580, %v2576
      %v2585 = vadd.s32 %v2581, %v2583
      %v2586 = vadd.s32 %v2585, %v2575
      %v2587 = vadd.s32 %v2586, %v2577
      %v2588 = vand.u32 %v2565, 65535
      %v2589 = vshrl.u32 %v2565, 16
      %v2590 = vand.u32 %v2560, 65535
      %v2591 = vshrl.u32 %v2560, 16
      %v2592 = vmul.u32 %v2588, %v2590
      %v2593 = vmul.u32 %v2588, %v2591
      %v2594 = vmul.u32 %v2589, %v2590
      %v2595 = vmul.u32 %v2589, %v2591
      %v2596 = vshll.u32 %v2593, 16
      %v2597 = vshrl.u32 %v2593, 16
      %v2598 = vshll.u32 %v2594, 16
      %v2599 = vshrl.u32 %v2594, 16
      %vm2600 = vc.u32 %v2592, %v2596
      %v2601 = vsel %vm2600, 1, 0
      %v2602 = vadd.s32 %v2592, %v2596
      %v2603 = vadd.s32 %v2595, %v2601
      %vm2604 = vc.u32 %v2602, %v2598
      %v2605 = vsel %vm2604, 1, 0
      %v2606 = vadd.s32 %v2602, %v2598
      %v2607 = vadd.s32 %v2603, %v2605
      %v2608 = vadd.s32 %v2607, %v2597
      %v2609 = vadd.s32 %v2608, %v2599
      %v2610 = vmul.u32 %v2565, %v2556
      %v2611 = vadd.s32 %v2587, %v2606
      %vm2612 = vc.u32 %v2587, %v2606
      %v2613 = vadd.s32 %v2609, 1
      %v2614 = vsel %vm2612, %v2613, %v2609
      %v2615 = vadd.s32 %v2610, %v2614
      %v2616 = vadd.s32 %v2615, 536870912
      %v2617 = vshrl.u32 %v2616, 30
      %v2618 = vshll.u32 %v2617, 30
      %v2619 = vsub.s32 %v2615, %v2618
      %vm2620 = vcmp.lt.s32.totalorder %v2619, 0
      %v2621 = vsub.s32 0, %v2619
      %v2622 = vsel %vm2620, %v2621, %v2619
      %v2623 = vclz %v2622
      %v2624 = vsub.s32 %v2623, 2
      %vm2625 = vcmp.gt.s32.totalorder 0, %v2624
      %v2626 = vsel %vm2625, 0, %v2624
      %v2627 = vsub.s32 32, %v2626
      %v2628 = vshll.u32 %v2619, %v2626
      %v2629 = vshrl.u32 %v2611, %v2627
      %v2630 = vor.u32 %v2628, %v2629
      %v2631 = vsub.s32 4294967266, %v2626
      %v2632 = vadd.s32 %v2631, 127
      %v2633 = vshll.u32 %v2632, 23
      %v2634 = vor.u32 4788187, %v2633
      %v2635 = vand.u32 2147483647, %v2634
      %v2637 = vcvt.s32.f32 %v2630
      %v2638 = vmul.f32 %v2637, %v2635
      %v2639 = vxor.u32 %v2638, 2147483648
      %v2640 = vsel %vm2519, %v2639, %v2638
      %v2641 = vsub.s32 4, %v2617
      %v2642 = vsel %vm2519, %v2641, %v2617
      %v2643 = vsel %vm2518, %v335, %v2640
      %v2644 = vsel %vm2518, 0, %v2642
      %v2645 = vmul.f32 %v2643, %v2643
      %v2646 = vmul.f32 %v2645, -0.001358992
      %v2647 = vadd.f32 %v2646, 0.041655596
      %v2648 = vmul.f32 %v2645, %v2647
      %v2649 = vadd.f32 %v2648, -0.4999988
      %v2650 = vmul.f32 %v2645, %v2649
      %v2651 = vadd.f32 1.0, %v2650
      %v2652 = vmul.f32 %v2643, %v2643
      %v2653 = vmul.f32 %v2652, -0.00019511016
      %v2654 = vadd.f32 %v2653, 0.008332121
      %v2655 = vmul.f32 %v2652, %v2654
      %v2656 = vadd.f32 %v2655, -0.16666654
      %v2657 = vmul.f32 %v2652, %v2656
      %v2658 = vadd.f32 %v2657, 1.0
      %v2659 = vmul.f32 %v2658, %v2643
      %vm2660 = vweird.f32 %v335
      %v2661 = vadd.s32 %v2644, 3
      %v2662 = vand.u32 %v2661, 3
      %vm2663 = vcmp.lt.s32.totalorder %v2662, 2
      %vm2664 = vcmp.eq.s32.totalorder %v2662, 0
      %v2665 = vxor.u32 %v2659, 2147483648
      %v2666 = vsel %vm2664, %v2651, %v2665
      %vm2667 = vcmp.eq.s32.totalorder %v2662, 2
      %v2668 = vxor.u32 %v2651, 2147483648
      %v2669 = vsel %vm2667, %v2668, %v2659
      %v2670 = vsel %vm2663, %v2666, %v2669
      %v2671 = vsel %vm2660, nan, %v2670
      %v2672 = vand.u32 2147483647, %v336
      %vm2673 = vcmp.le.f32.partialorder %v2672, 0.7853982
      %vm2674 = vcmp.lt.s32.totalorder %v336, 0
      %v2675 = vand.u32 %v336, 2139095040
      %v2676 = vshrl.u32 %v2675, 23
      %v2677 = vsub.s32 %v2676, 127
      %v2678 = vand.u32 2147483647, %v336
      %v2679 = vand.u32 %v2678, 8388607
      %v2680 = vor.u32 %v2679, 8388608
      %v2681 = vsub.s32 0, %v2680
      %v2682 = vadd.s32 %v2677, 1
      %vm2683 = vcmp.gt.s32.totalorder %v2682, 0
      %v2684 = vsel %vm2683, %v2682, 0
      %v2685 = vshrl.u32 %v2684, 5
      %v2686 = vand.u32 %v2684, 31
      %v2687 = vsub.s32 32, %v2686
      %v2688 = vshrl.u32 683565275, %v2687
      %v2689 = vshll.u32 683565275, %v2686
      %v2690 = vshrl.u32 2475754826, %v2687
      %v2691 = vor.u32 %v2689, %v2690
      %v2692 = vshll.u32 2475754826, %v2686
      %v2693 = vshrl.u32 2131351028, %v2687
      %v2694 = vor.u32 %v2692, %v2693
      %v2695 = vshll.u32 2131351028, %v2686
      %v2696 = vshrl.u32 2102212464, %v2687
      %v2697 = vor.u32 %v2695, %v2696
      %v2698 = vshll.u32 2102212464, %v2686
      %v2699 = vshrl.u32 920167782, %v2687
      %v2700 = vor.u32 %v2698, %v2699
      %v2701 = vshll.u32 920167782, %v2686
      %v2702 = vshrl.u32 1326507024, %v2687
      %v2703 = vor.u32 %v2701, %v2702
      %vm2704 = vcmp.lt.s32.totalorder %v2685, 1
      %vm2705 = vcmp.lt.s32.totalorder %v2685, 2
      %vm2706 = vcmp.lt.s32.totalorder %v2685, 3
      %vm2707 = vcmp.lt.s32.totalorder %v2685, 4
      %v2708 = vsel %vm2704, %v2688, %v2691
      %v2709 = vsel %vm2707, %v2697, 2102212464
      %v2710 = vsel %vm2706, %v2694, %v2709
      %v2711 = vsel %vm2705, %v2708, %v2710
      %v2712 = vsel %vm2704, %v2691, %v2694
      %v2713 = vsel %vm2707, %v2700, 920167782
      %v2714 = vsel %vm2706, %v2697, %v2713
      %v2715 = vsel %vm2705, %v2712, %v2714
      %v2716 = vsel %vm2704, %v2694, %v2697
      %v2717 = vsel %vm2707, %v2703, 1326507024
      %v2718 = vsel %vm2706, %v2700, %v2717
      %v2719 = vsel %vm2705, %v2716, %v2718
      %v2720 = vshll.u32 %v2680, 8
      %v2721 = vand.u32 %v2720, 65535
      %v2722 = vshrl.u32 %v2720, 16
      %v2723 = vand.u32 %v2719, 65535
      %v2724 = vshrl.u32 %v2719, 16
      %v2725 = vmul.u32 %v2721, %v2723
      %v2726 = vmul.u32 %v2721, %v2724
      %v2727 = vmul.u32 %v2722, %v2723
      %v2728 = vmul.u32 %v2722, %v2724
      %v2729 = vshll.u32 %v2726, 16
      %v2730 = vshrl.u32 %v2726, 16
      %v2731 = vshll.u32 %v2727, 16
      %v2732 = vshrl.u32 %v2727, 16
      %vm2733 = vc.u32 %v2725, %v2729
      %v2734 = vsel %vm2733, 1, 0
      %v2735 = vadd.s32 %v2725, %v2729
      %v2736 = vadd.s32 %v2728, %v2734
      %vm2737 = vc.u32 %v2735, %v2731
      %v2738 = vsel %vm2737, 1, 0
      %v2739 = vadd.s32 %v2735, %v2731
      %v2740 = vadd.s32 %v2736, %v2738
      %v2741 = vadd.s32 %v2740, %v2730
      %v2742 = vadd.s32 %v2741, %v2732
      %v2743 = vand.u32 %v2720, 65535
      %v2744 = vshrl.u32 %v2720, 16
      %v2745 = vand.u32 %v2715, 65535
      %v2746 = vshrl.u32 %v2715, 16
      %v2747 = vmul.u32 %v2743, %v2745
      %v2748 = vmul.u32 %v2743, %v2746
      %v2749 = vmul.u32 %v2744, %v2745
      %v2750 = vmul.u32 %v2744, %v2746
      %v2751 = vshll.u32 %v2748, 16
      %v2752 = vshrl.u32 %v2748, 16
      %v2753 = vshll.u32 %v2749, 16
      %v2754 = vshrl.u32 %v2749, 16
      %vm2755 = vc.u32 %v2747, %v2751
      %v2756 = vsel %vm2755, 1, 0
      %v2757 = vadd.s32 %v2747, %v2751
      %v2758 = vadd.s32 %v2750, %v2756
      %vm2759 = vc.u32 %v2757, %v2753
      %v2760 = vsel %vm2759, 1, 0
      %v2761 = vadd.s32 %v2757, %v2753
      %v2762 = vadd.s32 %v2758, %v2760
      %v2763 = vadd.s32 %v2762, %v2752
      %v2764 = vadd.s32 %v2763, %v2754
      %v2765 = vmul.u32 %v2720, %v2711
      %v2766 = vadd.s32 %v2742, %v2761
      %vm2767 = vc.u32 %v2742, %v2761
      %v2768 = vadd.s32 %v2764, 1
      %v2769 = vsel %vm2767, %v2768, %v2764
      %v2770 = vadd.s32 %v2765, %v2769
      %v2771 = vadd.s32 %v2770, 536870912
      %v2772 = vshrl.u32 %v2771, 30
      %v2773 = vshll.u32 %v2772, 30
      %v2774 = vsub.s32 %v2770, %v2773
      %vm2775 = vcmp.lt.s32.totalorder %v2774, 0
      %v2776 = vsub.s32 0, %v2774
      %v2777 = vsel %vm2775, %v2776, %v2774
      %v2778 = vclz %v2777
      %v2779 = vsub.s32 %v2778, 2
      %vm2780 = vcmp.gt.s32.totalorder 0, %v2779
      %v2781 = vsel %vm2780, 0, %v2779
      %v2782 = vsub.s32 32, %v2781
      %v2783 = vshll.u32 %v2774, %v2781
      %v2784 = vshrl.u32 %v2766, %v2782
      %v2785 = vor.u32 %v2783, %v2784
      %v2786 = vsub.s32 4294967266, %v2781
      %v2787 = vadd.s32 %v2786, 127
      %v2788 = vshll.u32 %v2787, 23
      %v2789 = vor.u32 4788187, %v2788
      %v2790 = vand.u32 2147483647, %v2789
      %v2792 = vcvt.s32.f32 %v2785
      %v2793 = vmul.f32 %v2792, %v2790
      %v2794 = vxor.u32 %v2793, 2147483648
      %v2795 = vsel %vm2674, %v2794, %v2793
      %v2796 = vsub.s32 4, %v2772
      %v2797 = vsel %vm2674, %v2796, %v2772
      %v2798 = vsel %vm2673, %v336, %v2795
      %v2799 = vsel %vm2673, 0, %v2797
      %v2800 = vmul.f32 %v2798, %v2798
      %v2801 = vmul.f32 %v2800, -0.001358992
      %v2802 = vadd.f32 %v2801, 0.041655596
      %v2803 = vmul.f32 %v2800, %v2802
      %v2804 = vadd.f32 %v2803, -0.4999988
      %v2805 = vmul.f32 %v2800, %v2804
      %v2806 = vadd.f32 1.0, %v2805
      %v2807 = vmul.f32 %v2798, %v2798
      %v2808 = vmul.f32 %v2807, -0.00019511016
      %v2809 = vadd.f32 %v2808, 0.008332121
      %v2810 = vmul.f32 %v2807, %v2809
      %v2811 = vadd.f32 %v2810, -0.16666654
      %v2812 = vmul.f32 %v2807, %v2811
      %v2813 = vadd.f32 %v2812, 1.0
      %v2814 = vmul.f32 %v2813, %v2798
      %vm2815 = vweird.f32 %v336
      %v2816 = vadd.s32 %v2799, 3
      %v2817 = vand.u32 %v2816, 3
      %vm2818 = vcmp.lt.s32.totalorder %v2817, 2
      %vm2819 = vcmp.eq.s32.totalorder %v2817, 0
      %v2820 = vxor.u32 %v2814, 2147483648
      %v2821 = vsel %vm2819, %v2806, %v2820
      %vm2822 = vcmp.eq.s32.totalorder %v2817, 2
      %v2823 = vxor.u32 %v2806, 2147483648
      %v2824 = vsel %vm2822, %v2823, %v2814
      %v2825 = vsel %vm2818, %v2821, %v2824
      %v2826 = vsel %vm2815, nan, %v2825
      %v2827 = vand.u32 2147483647, %v337
      %vm2828 = vcmp.le.f32.partialorder %v2827, 0.7853982
      %vm2829 = vcmp.lt.s32.totalorder %v337, 0
      %v2830 = vand.u32 %v337, 2139095040
      %v2831 = vshrl.u32 %v2830, 23
      %v2832 = vsub.s32 %v2831, 127
      %v2833 = vand.u32 2147483647, %v337
      %v2834 = vand.u32 %v2833, 8388607
      %v2835 = vor.u32 %v2834, 8388608
      %v2836 = vsub.s32 0, %v2835
      %v2837 = vadd.s32 %v2832, 1
      %vm2838 = vcmp.gt.s32.totalorder %v2837, 0
      %v2839 = vsel %vm2838, %v2837, 0
      %v2840 = vshrl.u32 %v2839, 5
      %v2841 = vand.u32 %v2839, 31
      %v2842 = vsub.s32 32, %v2841
      %v2843 = vshrl.u32 683565275, %v2842
      %v2844 = vshll.u32 683565275, %v2841
      %v2845 = vshrl.u32 2475754826, %v2842
      %v2846 = vor.u32 %v2844, %v2845
      %v2847 = vshll.u32 2475754826, %v2841
      %v2848 = vshrl.u32 2131351028, %v2842
      %v2849 = vor.u32 %v2847, %v2848
      %v2850 = vshll.u32 2131351028, %v2841
      %v2851 = vshrl.u32 2102212464, %v2842
      %v2852 = vor.u32 %v2850, %v2851
      %v2853 = vshll.u32 2102212464, %v2841
      %v2854 = vshrl.u32 920167782, %v2842
      %v2855 = vor.u32 %v2853, %v2854
      %v2856 = vshll.u32 920167782, %v2841
      %v2857 = vshrl.u32 1326507024, %v2842
      %v2858 = vor.u32 %v2856, %v2857
      %vm2859 = vcmp.lt.s32.totalorder %v2840, 1
      %vm2860 = vcmp.lt.s32.totalorder %v2840, 2
      %vm2861 = vcmp.lt.s32.totalorder %v2840, 3
      %vm2862 = vcmp.lt.s32.totalorder %v2840, 4
      %v2863 = vsel %vm2859, %v2843, %v2846
      %v2864 = vsel %vm2862, %v2852, 2102212464
      %v2865 = vsel %vm2861, %v2849, %v2864
      %v2866 = vsel %vm2860, %v2863, %v2865
      %v2867 = vsel %vm2859, %v2846, %v2849
      %v2868 = vsel %vm2862, %v2855, 920167782
      %v2869 = vsel %vm2861, %v2852, %v2868
      %v2870 = vsel %vm2860, %v2867, %v2869
      %v2871 = vsel %vm2859, %v2849, %v2852
      %v2872 = vsel %vm2862, %v2858, 1326507024
      %v2873 = vsel %vm2861, %v2855, %v2872
      %v2874 = vsel %vm2860, %v2871, %v2873
      %v2875 = vshll.u32 %v2835, 8
      %v2876 = vand.u32 %v2875, 65535
      %v2877 = vshrl.u32 %v2875, 16
      %v2878 = vand.u32 %v2874, 65535
      %v2879 = vshrl.u32 %v2874, 16
      %v2880 = vmul.u32 %v2876, %v2878
      %v2881 = vmul.u32 %v2876, %v2879
      %v2882 = vmul.u32 %v2877, %v2878
      %v2883 = vmul.u32 %v2877, %v2879
      %v2884 = vshll.u32 %v2881, 16
      %v2885 = vshrl.u32 %v2881, 16
      %v2886 = vshll.u32 %v2882, 16
      %v2887 = vshrl.u32 %v2882, 16
      %vm2888 = vc.u32 %v2880, %v2884
      %v2889 = vsel %vm2888, 1, 0
      %v2890 = vadd.s32 %v2880, %v2884
      %v2891 = vadd.s32 %v2883, %v2889
      %vm2892 = vc.u32 %v2890, %v2886
      %v2893 = vsel %vm2892, 1, 0
      %v2894 = vadd.s32 %v2890, %v2886
      %v2895 = vadd.s32 %v2891, %v2893
      %v2896 = vadd.s32 %v2895, %v2885
      %v2897 = vadd.s32 %v2896, %v2887
      %v2898 = vand.u32 %v2875, 65535
      %v2899 = vshrl.u32 %v2875, 16
      %v2900 = vand.u32 %v2870, 65535
      %v2901 = vshrl.u32 %v2870, 16
      %v2902 = vmul.u32 %v2898, %v2900
      %v2903 = vmul.u32 %v2898, %v2901
      %v2904 = vmul.u32 %v2899, %v2900
      %v2905 = vmul.u32 %v2899, %v2901
      %v2906 = vshll.u32 %v2903, 16
      %v2907 = vshrl.u32 %v2903, 16
      %v2908 = vshll.u32 %v2904, 16
      %v2909 = vshrl.u32 %v2904, 16
      %vm2910 = vc.u32 %v2902, %v2906
      %v2911 = vsel %vm2910, 1, 0
      %v2912 = vadd.s32 %v2902, %v2906
      %v2913 = vadd.s32 %v2905, %v2911
      %vm2914 = vc.u32 %v2912, %v2908
      %v2915 = vsel %vm2914, 1, 0
      %v2916 = vadd.s32 %v2912, %v2908
      %v2917 = vadd.s32 %v2913, %v2915
      %v2918 = vadd.s32 %v2917, %v2907
      %v2919 = vadd.s32 %v2918, %v2909
      %v2920 = vmul.u32 %v2875, %v2866
      %v2921 = vadd.s32 %v2897, %v2916
      %vm2922 = vc.u32 %v2897, %v2916
      %v2923 = vadd.s32 %v2919, 1
      %v2924 = vsel %vm2922, %v2923, %v2919
      %v2925 = vadd.s32 %v2920, %v2924
      %v2926 = vadd.s32 %v2925, 536870912
      %v2927 = vshrl.u32 %v2926, 30
      %v2928 = vshll.u32 %v2927, 30
      %v2929 = vsub.s32 %v2925, %v2928
      %vm2930 = vcmp.lt.s32.totalorder %v2929, 0
      %v2931 = vsub.s32 0, %v2929
      %v2932 = vsel %vm2930, %v2931, %v2929
      %v2933 = vclz %v2932
      %v2934 = vsub.s32 %v2933, 2
      %vm2935 = vcmp.gt.s32.totalorder 0, %v2934
      %v2936 = vsel %vm2935, 0, %v2934
      %v2937 = vsub.s32 32, %v2936
      %v2938 = vshll.u32 %v2929, %v2936
      %v2939 = vshrl.u32 %v2921, %v2937
      %v2940 = vor.u32 %v2938, %v2939
      %v2941 = vsub.s32 4294967266, %v2936
      %v2942 = vadd.s32 %v2941, 127
      %v2943 = vshll.u32 %v2942, 23
      %v2944 = vor.u32 4788187, %v2943
      %v2945 = vand.u32 2147483647, %v2944
      %v2947 = vcvt.s32.f32 %v2940
      %v2948 = vmul.f32 %v2947, %v2945
      %v2949 = vxor.u32 %v2948, 2147483648
      %v2950 = vsel %vm2829, %v2949, %v2948
      %v2951 = vsub.s32 4, %v2927
      %v2952 = vsel %vm2829, %v2951, %v2927
      %v2953 = vsel %vm2828, %v337, %v2950
      %v2954 = vsel %vm2828, 0, %v2952
      %v2955 = vmul.f32 %v2953, %v2953
      %v2956 = vmul.f32 %v2955, -0.001358992
      %v2957 = vadd.f32 %v2956, 0.041655596
      %v2958 = vmul.f32 %v2955, %v2957
      %v2959 = vadd.f32 %v2958, -0.4999988
      %v2960 = vmul.f32 %v2955, %v2959
      %v2961 = vadd.f32 1.0, %v2960
      %v2962 = vmul.f32 %v2953, %v2953
      %v2963 = vmul.f32 %v2962, -0.00019511016
      %v2964 = vadd.f32 %v2963, 0.008332121
      %v2965 = vmul.f32 %v2962, %v2964
      %v2966 = vadd.f32 %v2965, -0.16666654
      %v2967 = vmul.f32 %v2962, %v2966
      %v2968 = vadd.f32 %v2967, 1.0
      %v2969 = vmul.f32 %v2968, %v2953
      %vm2970 = vweird.f32 %v337
      %v2971 = vadd.s32 %v2954, 3
      %v2972 = vand.u32 %v2971, 3
      %vm2973 = vcmp.lt.s32.totalorder %v2972, 2
      %vm2974 = vcmp.eq.s32.totalorder %v2972, 0
      %v2975 = vxor.u32 %v2969, 2147483648
      %v2976 = vsel %vm2974, %v2961, %v2975
      %vm2977 = vcmp.eq.s32.totalorder %v2972, 2
      %v2978 = vxor.u32 %v2961, 2147483648
      %v2979 = vsel %vm2977, %v2978, %v2969
      %v2980 = vsel %vm2973, %v2976, %v2979
      %v2981 = vsel %vm2970, nan, %v2980
      %v2982 = vand.u32 2147483647, %v338
      %vm2983 = vcmp.le.f32.partialorder %v2982, 0.7853982
      %vm2984 = vcmp.lt.s32.totalorder %v338, 0
      %v2985 = vand.u32 %v338, 2139095040
      %v2986 = vshrl.u32 %v2985, 23
      %v2987 = vsub.s32 %v2986, 127
      %v2988 = vand.u32 2147483647, %v338
      %v2989 = vand.u32 %v2988, 8388607
      %v2990 = vor.u32 %v2989, 8388608
      %v2991 = vsub.s32 0, %v2990
      %v2992 = vadd.s32 %v2987, 1
      %vm2993 = vcmp.gt.s32.totalorder %v2992, 0
      %v2994 = vsel %vm2993, %v2992, 0
      %v2995 = vshrl.u32 %v2994, 5
      %v2996 = vand.u32 %v2994, 31
      %v2997 = vsub.s32 32, %v2996
      %v2998 = vshrl.u32 683565275, %v2997
      %v2999 = vshll.u32 683565275, %v2996
      %v3000 = vshrl.u32 2475754826, %v2997
      %v3001 = vor.u32 %v2999, %v3000
      %v3002 = vshll.u32 2475754826, %v2996
      %v3003 = vshrl.u32 2131351028, %v2997
      %v3004 = vor.u32 %v3002, %v3003
      %v3005 = vshll.u32 2131351028, %v2996
      %v3006 = vshrl.u32 2102212464, %v2997
      %v3007 = vor.u32 %v3005, %v3006
      %v3008 = vshll.u32 2102212464, %v2996
      %v3009 = vshrl.u32 920167782, %v2997
      %v3010 = vor.u32 %v3008, %v3009
      %v3011 = vshll.u32 920167782, %v2996
      %v3012 = vshrl.u32 1326507024, %v2997
      %v3013 = vor.u32 %v3011, %v3012
      %vm3014 = vcmp.lt.s32.totalorder %v2995, 1
      %vm3015 = vcmp.lt.s32.totalorder %v2995, 2
      %vm3016 = vcmp.lt.s32.totalorder %v2995, 3
      %vm3017 = vcmp.lt.s32.totalorder %v2995, 4
      %v3018 = vsel %vm3014, %v2998, %v3001
      %v3019 = vsel %vm3017, %v3007, 2102212464
      %v3020 = vsel %vm3016, %v3004, %v3019
      %v3021 = vsel %vm3015, %v3018, %v3020
      %v3022 = vsel %vm3014, %v3001, %v3004
      %v3023 = vsel %vm3017, %v3010, 920167782
      %v3024 = vsel %vm3016, %v3007, %v3023
      %v3025 = vsel %vm3015, %v3022, %v3024
      %v3026 = vsel %vm3014, %v3004, %v3007
      %v3027 = vsel %vm3017, %v3013, 1326507024
      %v3028 = vsel %vm3016, %v3010, %v3027
      %v3029 = vsel %vm3015, %v3026, %v3028
      %v3030 = vshll.u32 %v2990, 8
      %v3031 = vand.u32 %v3030, 65535
      %v3032 = vshrl.u32 %v3030, 16
      %v3033 = vand.u32 %v3029, 65535
      %v3034 = vshrl.u32 %v3029, 16
      %v3035 = vmul.u32 %v3031, %v3033
      %v3036 = vmul.u32 %v3031, %v3034
      %v3037 = vmul.u32 %v3032, %v3033
      %v3038 = vmul.u32 %v3032, %v3034
      %v3039 = vshll.u32 %v3036, 16
      %v3040 = vshrl.u32 %v3036, 16
      %v3041 = vshll.u32 %v3037, 16
      %v3042 = vshrl.u32 %v3037, 16
      %vm3043 = vc.u32 %v3035, %v3039
      %v3044 = vsel %vm3043, 1, 0
      %v3045 = vadd.s32 %v3035, %v3039
      %v3046 = vadd.s32 %v3038, %v3044
      %vm3047 = vc.u32 %v3045, %v3041
      %v3048 = vsel %vm3047, 1, 0
      %v3049 = vadd.s32 %v3045, %v3041
      %v3050 = vadd.s32 %v3046, %v3048
      %v3051 = vadd.s32 %v3050, %v3040
      %v3052 = vadd.s32 %v3051, %v3042
      %v3053 = vand.u32 %v3030, 65535
      %v3054 = vshrl.u32 %v3030, 16
      %v3055 = vand.u32 %v3025, 65535
      %v3056 = vshrl.u32 %v3025, 16
      %v3057 = vmul.u32 %v3053, %v3055
      %v3058 = vmul.u32 %v3053, %v3056
      %v3059 = vmul.u32 %v3054, %v3055
      %v3060 = vmul.u32 %v3054, %v3056
      %v3061 = vshll.u32 %v3058, 16
      %v3062 = vshrl.u32 %v3058, 16
      %v3063 = vshll.u32 %v3059, 16
      %v3064 = vshrl.u32 %v3059, 16
      %vm3065 = vc.u32 %v3057, %v3061
      %v3066 = vsel %vm3065, 1, 0
      %v3067 = vadd.s32 %v3057, %v3061
      %v3068 = vadd.s32 %v3060, %v3066
      %vm3069 = vc.u32 %v3067, %v3063
      %v3070 = vsel %vm3069, 1, 0
      %v3071 = vadd.s32 %v3067, %v3063
      %v3072 = vadd.s32 %v3068, %v3070
      %v3073 = vadd.s32 %v3072, %v3062
      %v3074 = vadd.s32 %v3073, %v3064
      %v3075 = vmul.u32 %v3030, %v3021
      %v3076 = vadd.s32 %v3052, %v3071
      %vm3077 = vc.u32 %v3052, %v3071
      %v3078 = vadd.s32 %v3074, 1
      %v3079 = vsel %vm3077, %v3078, %v3074
      %v3080 = vadd.s32 %v3075, %v3079
      %v3081 = vadd.s32 %v3080, 536870912
      %v3082 = vshrl.u32 %v3081, 30
      %v3083 = vshll.u32 %v3082, 30
      %v3084 = vsub.s32 %v3080, %v3083
      %vm3085 = vcmp.lt.s32.totalorder %v3084, 0
      %v3086 = vsub.s32 0, %v3084
      %v3087 = vsel %vm3085, %v3086, %v3084
      %v3088 = vclz %v3087
      %v3089 = vsub.s32 %v3088, 2
      %vm3090 = vcmp.gt.s32.totalorder 0, %v3089
      %v3091 = vsel %vm3090, 0, %v3089
      %v3092 = vsub.s32 32, %v3091
      %v3093 = vshll.u32 %v3084, %v3091
      %v3094 = vshrl.u32 %v3076, %v3092
      %v3095 = vor.u32 %v3093, %v3094
      %v3096 = vsub.s32 4294967266, %v3091
      %v3097 = vadd.s32 %v3096, 127
      %v3098 = vshll.u32 %v3097, 23
      %v3099 = vor.u32 4788187, %v3098
      %v3100 = vand.u32 2147483647, %v3099
      %v3102 = vcvt.s32.f32 %v3095
      %v3103 = vmul.f32 %v3102, %v3100
      %v3104 = vxor.u32 %v3103, 2147483648
      %v3105 = vsel %vm2984, %v3104, %v3103
      %v3106 = vsub.s32 4, %v3082
      %v3107 = vsel %vm2984, %v3106, %v3082
      %v3108 = vsel %vm2983, %v338, %v3105
      %v3109 = vsel %vm2983, 0, %v3107
      %v3110 = vmul.f32 %v3108, %v3108
      %v3111 = vmul.f32 %v3110, -0.001358992
      %v3112 = vadd.f32 %v3111, 0.041655596
      %v3113 = vmul.f32 %v3110, %v3112
      %v3114 = vadd.f32 %v3113, -0.4999988
      %v3115 = vmul.f32 %v3110, %v3114
      %v3116 = vadd.f32 1.0, %v3115
      %v3117 = vmul.f32 %v3108, %v3108
      %v3118 = vmul.f32 %v3117, -0.00019511016
      %v3119 = vadd.f32 %v3118, 0.008332121
      %v3120 = vmul.f32 %v3117, %v3119
      %v3121 = vadd.f32 %v3120, -0.16666654
      %v3122 = vmul.f32 %v3117, %v3121
      %v3123 = vadd.f32 %v3122, 1.0
      %v3124 = vmul.f32 %v3123, %v3108
      %vm3125 = vweird.f32 %v338
      %v3126 = vadd.s32 %v3109, 3
      %v3127 = vand.u32 %v3126, 3
      %vm3128 = vcmp.lt.s32.totalorder %v3127, 2
      %vm3129 = vcmp.eq.s32.totalorder %v3127, 0
      %v3130 = vxor.u32 %v3124, 2147483648
      %v3131 = vsel %vm3129, %v3116, %v3130
      %vm3132 = vcmp.eq.s32.totalorder %v3127, 2
      %v3133 = vxor.u32 %v3116, 2147483648
      %v3134 = vsel %vm3132, %v3133, %v3124
      %v3135 = vsel %vm3128, %v3131, %v3134
      %v3136 = vsel %vm3125, nan, %v3135
      %v3137 = vand.u32 2147483647, %v339
      %vm3138 = vcmp.le.f32.partialorder %v3137, 0.7853982
      %vm3139 = vcmp.lt.s32.totalorder %v339, 0
      %v3140 = vand.u32 %v339, 2139095040
      %v3141 = vshrl.u32 %v3140, 23
      %v3142 = vsub.s32 %v3141, 127
      %v3143 = vand.u32 2147483647, %v339
      %v3144 = vand.u32 %v3143, 8388607
      %v3145 = vor.u32 %v3144, 8388608
      %v3146 = vsub.s32 0, %v3145
      %v3147 = vadd.s32 %v3142, 1
      %vm3148 = vcmp.gt.s32.totalorder %v3147, 0
      %v3149 = vsel %vm3148, %v3147, 0
      %v3150 = vshrl.u32 %v3149, 5
      %v3151 = vand.u32 %v3149, 31
      %v3152 = vsub.s32 32, %v3151
      %v3153 = vshrl.u32 683565275, %v3152
      %v3154 = vshll.u32 683565275, %v3151
      %v3155 = vshrl.u32 2475754826, %v3152
      %v3156 = vor.u32 %v3154, %v3155
      %v3157 = vshll.u32 2475754826, %v3151
      %v3158 = vshrl.u32 2131351028, %v3152
      %v3159 = vor.u32 %v3157, %v3158
      %v3160 = vshll.u32 2131351028, %v3151
      %v3161 = vshrl.u32 2102212464, %v3152
      %v3162 = vor.u32 %v3160, %v3161
      %v3163 = vshll.u32 2102212464, %v3151
      %v3164 = vshrl.u32 920167782, %v3152
      %v3165 = vor.u32 %v3163, %v3164
      %v3166 = vshll.u32 920167782, %v3151
      %v3167 = vshrl.u32 1326507024, %v3152
      %v3168 = vor.u32 %v3166, %v3167
      %vm3169 = vcmp.lt.s32.totalorder %v3150, 1
      %vm3170 = vcmp.lt.s32.totalorder %v3150, 2
      %vm3171 = vcmp.lt.s32.totalorder %v3150, 3
      %vm3172 = vcmp.lt.s32.totalorder %v3150, 4
      %v3173 = vsel %vm3169, %v3153, %v3156
      %v3174 = vsel %vm3172, %v3162, 2102212464
      %v3175 = vsel %vm3171, %v3159, %v3174
      %v3176 = vsel %vm3170, %v3173, %v3175
      %v3177 = vsel %vm3169, %v3156, %v3159
      %v3178 = vsel %vm3172, %v3165, 920167782
      %v3179 = vsel %vm3171, %v3162, %v3178
      %v3180 = vsel %vm3170, %v3177, %v3179
      %v3181 = vsel %vm3169, %v3159, %v3162
      %v3182 = vsel %vm3172, %v3168, 1326507024
      %v3183 = vsel %vm3171, %v3165, %v3182
      %v3184 = vsel %vm3170, %v3181, %v3183
      %v3185 = vshll.u32 %v3145, 8
      %v3186 = vand.u32 %v3185, 65535
      %v3187 = vshrl.u32 %v3185, 16
      %v3188 = vand.u32 %v3184, 65535
      %v3189 = vshrl.u32 %v3184, 16
      %v3190 = vmul.u32 %v3186, %v3188
      %v3191 = vmul.u32 %v3186, %v3189
      %v3192 = vmul.u32 %v3187, %v3188
      %v3193 = vmul.u32 %v3187, %v3189
      %v3194 = vshll.u32 %v3191, 16
      %v3195 = vshrl.u32 %v3191, 16
      %v3196 = vshll.u32 %v3192, 16
      %v3197 = vshrl.u32 %v3192, 16
      %vm3198 = vc.u32 %v3190, %v3194
      %v3199 = vsel %vm3198, 1, 0
      %v3200 = vadd.s32 %v3190, %v3194
      %v3201 = vadd.s32 %v3193, %v3199
      %vm3202 = vc.u32 %v3200, %v3196
      %v3203 = vsel %vm3202, 1, 0
      %v3204 = vadd.s32 %v3200, %v3196
      %v3205 = vadd.s32 %v3201, %v3203
      %v3206 = vadd.s32 %v3205, %v3195
      %v3207 = vadd.s32 %v3206, %v3197
      %v3208 = vand.u32 %v3185, 65535
      %v3209 = vshrl.u32 %v3185, 16
      %v3210 = vand.u32 %v3180, 65535
      %v3211 = vshrl.u32 %v3180, 16
      %v3212 = vmul.u32 %v3208, %v3210
      %v3213 = vmul.u32 %v3208, %v3211
      %v3214 = vmul.u32 %v3209, %v3210
      %v3215 = vmul.u32 %v3209, %v3211
      %v3216 = vshll.u32 %v3213, 16
      %v3217 = vshrl.u32 %v3213, 16
      %v3218 = vshll.u32 %v3214, 16
      %v3219 = vshrl.u32 %v3214, 16
      %vm3220 = vc.u32 %v3212, %v3216
      %v3221 = vsel %vm3220, 1, 0
      %v3222 = vadd.s32 %v3212, %v3216
      %v3223 = vadd.s32 %v3215, %v3221
      %vm3224 = vc.u32 %v3222, %v3218
      %v3225 = vsel %vm3224, 1, 0
      %v3226 = vadd.s32 %v3222, %v3218
      %v3227 = vadd.s32 %v3223, %v3225
      %v3228 = vadd.s32 %v3227, %v3217
      %v3229 = vadd.s32 %v3228, %v3219
      %v3230 = vmul.u32 %v3185, %v3176
      %v3231 = vadd.s32 %v3207, %v3226
      %vm3232 = vc.u32 %v3207, %v3226
      %v3233 = vadd.s32 %v3229, 1
      %v3234 = vsel %vm3232, %v3233, %v3229
      %v3235 = vadd.s32 %v3230, %v3234
      %v3236 = vadd.s32 %v3235, 536870912
      %v3237 = vshrl.u32 %v3236, 30
      %v3238 = vshll.u32 %v3237, 30
      %v3239 = vsub.s32 %v3235, %v3238
      %vm3240 = vcmp.lt.s32.totalorder %v3239, 0
      %v3241 = vsub.s32 0, %v3239
      %v3242 = vsel %vm3240, %v3241, %v3239
      %v3243 = vclz %v3242
      %v3244 = vsub.s32 %v3243, 2
      %vm3245 = vcmp.gt.s32.totalorder 0, %v3244
      %v3246 = vsel %vm3245, 0, %v3244
      %v3247 = vsub.s32 32, %v3246
      %v3248 = vshll.u32 %v3239, %v3246
      %v3249 = vshrl.u32 %v3231, %v3247
      %v3250 = vor.u32 %v3248, %v3249
      %v3251 = vsub.s32 4294967266, %v3246
      %v3252 = vadd.s32 %v3251, 127
      %v3253 = vshll.u32 %v3252, 23
      %v3254 = vor.u32 4788187, %v3253
      %v3255 = vand.u32 2147483647, %v3254
      %v3257 = vcvt.s32.f32 %v3250
      %v3258 = vmul.f32 %v3257, %v3255
      %v3259 = vxor.u32 %v3258, 2147483648
      %v3260 = vsel %vm3139, %v3259, %v3258
      %v3261 = vsub.s32 4, %v3237
      %v3262 = vsel %vm3139, %v3261, %v3237
      %v3263 = vsel %vm3138, %v339, %v3260
      %v3264 = vsel %vm3138, 0, %v3262
      %v3265 = vmul.f32 %v3263, %v3263
      %v3266 = vmul.f32 %v3265, -0.001358992
      %v3267 = vadd.f32 %v3266, 0.041655596
      %v3268 = vmul.f32 %v3265, %v3267
      %v3269 = vadd.f32 %v3268, -0.4999988
      %v3270 = vmul.f32 %v3265, %v3269
      %v3271 = vadd.f32 1.0, %v3270
      %v3272 = vmul.f32 %v3263, %v3263
      %v3273 = vmul.f32 %v3272, -0.00019511016
      %v3274 = vadd.f32 %v3273, 0.008332121
      %v3275 = vmul.f32 %v3272, %v3274
      %v3276 = vadd.f32 %v3275, -0.16666654
      %v3277 = vmul.f32 %v3272, %v3276
      %v3278 = vadd.f32 %v3277, 1.0
      %v3279 = vmul.f32 %v3278, %v3263
      %vm3280 = vweird.f32 %v339
      %v3281 = vadd.s32 %v3264, 3
      %v3282 = vand.u32 %v3281, 3
      %vm3283 = vcmp.lt.s32.totalorder %v3282, 2
      %vm3284 = vcmp.eq.s32.totalorder %v3282, 0
      %v3285 = vxor.u32 %v3279, 2147483648
      %v3286 = vsel %vm3284, %v3271, %v3285
      %vm3287 = vcmp.eq.s32.totalorder %v3282, 2
      %v3288 = vxor.u32 %v3271, 2147483648
      %v3289 = vsel %vm3287, %v3288, %v3279
      %v3290 = vsel %vm3283, %v3286, %v3289
      %v3291 = vsel %vm3280, nan, %v3290
      %v3292 = vand.u32 2147483647, %v340
      %vm3293 = vcmp.le.f32.partialorder %v3292, 0.7853982
      %vm3294 = vcmp.lt.s32.totalorder %v340, 0
      %v3295 = vand.u32 %v340, 2139095040
      %v3296 = vshrl.u32 %v3295, 23
      %v3297 = vsub.s32 %v3296, 127
      %v3298 = vand.u32 2147483647, %v340
      %v3299 = vand.u32 %v3298, 8388607
      %v3300 = vor.u32 %v3299, 8388608
      %v3301 = vsub.s32 0, %v3300
      %v3302 = vadd.s32 %v3297, 1
      %vm3303 = vcmp.gt.s32.totalorder %v3302, 0
      %v3304 = vsel %vm3303, %v3302, 0
      %v3305 = vshrl.u32 %v3304, 5
      %v3306 = vand.u32 %v3304, 31
      %v3307 = vsub.s32 32, %v3306
      %v3308 = vshrl.u32 683565275, %v3307
      %v3309 = vshll.u32 683565275, %v3306
      %v3310 = vshrl.u32 2475754826, %v3307
      %v3311 = vor.u32 %v3309, %v3310
      %v3312 = vshll.u32 2475754826, %v3306
      %v3313 = vshrl.u32 2131351028, %v3307
      %v3314 = vor.u32 %v3312, %v3313
      %v3315 = vshll.u32 2131351028, %v3306
      %v3316 = vshrl.u32 2102212464, %v3307
      %v3317 = vor.u32 %v3315, %v3316
      %v3318 = vshll.u32 2102212464, %v3306
      %v3319 = vshrl.u32 920167782, %v3307
      %v3320 = vor.u32 %v3318, %v3319
      %v3321 = vshll.u32 920167782, %v3306
      %v3322 = vshrl.u32 1326507024, %v3307
      %v3323 = vor.u32 %v3321, %v3322
      %vm3324 = vcmp.lt.s32.totalorder %v3305, 1
      %vm3325 = vcmp.lt.s32.totalorder %v3305, 2
      %vm3326 = vcmp.lt.s32.totalorder %v3305, 3
      %vm3327 = vcmp.lt.s32.totalorder %v3305, 4
      %v3328 = vsel %vm3324, %v3308, %v3311
      %v3329 = vsel %vm3327, %v3317, 2102212464
      %v3330 = vsel %vm3326, %v3314, %v3329
      %v3331 = vsel %vm3325, %v3328, %v3330
      %v3332 = vsel %vm3324, %v3311, %v3314
      %v3333 = vsel %vm3327, %v3320, 920167782
      %v3334 = vsel %vm3326, %v3317, %v3333
      %v3335 = vsel %vm3325, %v3332, %v3334
      %v3336 = vsel %vm3324, %v3314, %v3317
      %v3337 = vsel %vm3327, %v3323, 1326507024
      %v3338 = vsel %vm3326, %v3320, %v3337
      %v3339 = vsel %vm3325, %v3336, %v3338
      %v3340 = vshll.u32 %v3300, 8
      %v3341 = vand.u32 %v3340, 65535
      %v3342 = vshrl.u32 %v3340, 16
      %v3343 = vand.u32 %v3339, 65535
      %v3344 = vshrl.u32 %v3339, 16
      %v3345 = vmul.u32 %v3341, %v3343
      %v3346 = vmul.u32 %v3341, %v3344
      %v3347 = vmul.u32 %v3342, %v3343
      %v3348 = vmul.u32 %v3342, %v3344
      %v3349 = vshll.u32 %v3346, 16
      %v3350 = vshrl.u32 %v3346, 16
      %v3351 = vshll.u32 %v3347, 16
      %v3352 = vshrl.u32 %v3347, 16
      %vm3353 = vc.u32 %v3345, %v3349
      %v3354 = vsel %vm3353, 1, 0
      %v3355 = vadd.s32 %v3345, %v3349
      %v3356 = vadd.s32 %v3348, %v3354
      %vm3357 = vc.u32 %v3355, %v3351
      %v3358 = vsel %vm3357, 1, 0
      %v3359 = vadd.s32 %v3355, %v3351
      %v3360 = vadd.s32 %v3356, %v3358
      %v3361 = vadd.s32 %v3360, %v3350
      %v3362 = vadd.s32 %v3361, %v3352
      %v3363 = vand.u32 %v3340, 65535
      %v3364 = vshrl.u32 %v3340, 16
      %v3365 = vand.u32 %v3335, 65535
      %v3366 = vshrl.u32 %v3335, 16
      %v3367 = vmul.u32 %v3363, %v3365
      %v3368 = vmul.u32 %v3363, %v3366
      %v3369 = vmul.u32 %v3364, %v3365
      %v3370 = vmul.u32 %v3364, %v3366
      %v3371 = vshll.u32 %v3368, 16
      %v3372 = vshrl.u32 %v3368, 16
      %v3373 = vshll.u32 %v3369, 16
      %v3374 = vshrl.u32 %v3369, 16
      %vm3375 = vc.u32 %v3367, %v3371
      %v3376 = vsel %vm3375, 1, 0
      %v3377 = vadd.s32 %v3367, %v3371
      %v3378 = vadd.s32 %v3370, %v3376
      %vm3379 = vc.u32 %v3377, %v3373
      %v3380 = vsel %vm3379, 1, 0
      %v3381 = vadd.s32 %v3377, %v3373
      %v3382 = vadd.s32 %v3378, %v3380
      %v3383 = vadd.s32 %v3382, %v3372
      %v3384 = vadd.s32 %v3383, %v3374
      %v3385 = vmul.u32 %v3340, %v3331
      %v3386 = vadd.s32 %v3362, %v3381
      %vm3387 = vc.u32 %v3362, %v3381
      %v3388 = vadd.s32 %v3384, 1
      %v3389 = vsel %vm3387, %v3388, %v3384
      %v3390 = vadd.s32 %v3385, %v3389
      %v3391 = vadd.s32 %v3390, 536870912
      %v3392 = vshrl.u32 %v3391, 30
      %v3393 = vshll.u32 %v3392, 30
      %v3394 = vsub.s32 %v3390, %v3393
      %vm3395 = vcmp.lt.s32.totalorder %v3394, 0
      %v3396 = vsub.s32 0, %v3394
      %v3397 = vsel %vm3395, %v3396, %v3394
      %v3398 = vclz %v3397
      %v3399 = vsub.s32 %v3398, 2
      %vm3400 = vcmp.gt.s32.totalorder 0, %v3399
      %v3401 = vsel %vm3400, 0, %v3399
      %v3402 = vsub.s32 32, %v3401
      %v3403 = vshll.u32 %v3394, %v3401
      %v3404 = vshrl.u32 %v3386, %v3402
      %v3405 = vor.u32 %v3403, %v3404
      %v3406 = vsub.s32 4294967266, %v3401
      %v3407 = vadd.s32 %v3406, 127
      %v3408 = vshll.u32 %v3407, 23
      %v3409 = vor.u32 4788187, %v3408
      %v3410 = vand.u32 2147483647, %v3409
      %v3412 = vcvt.s32.f32 %v3405
      %v3413 = vmul.f32 %v3412, %v3410
      %v3414 = vxor.u32 %v3413, 2147483648
      %v3415 = vsel %vm3294, %v3414, %v3413
      %v3416 = vsub.s32 4, %v3392
      %v3417 = vsel %vm3294, %v3416, %v3392
      %v3418 = vsel %vm3293, %v340, %v3415
      %v3419 = vsel %vm3293, 0, %v3417
      %v3420 = vmul.f32 %v3418, %v3418
      %v3421 = vmul.f32 %v3420, -0.001358992
      %v3422 = vadd.f32 %v3421, 0.041655596
      %v3423 = vmul.f32 %v3420, %v3422
      %v3424 = vadd.f32 %v3423, -0.4999988
      %v3425 = vmul.f32 %v3420, %v3424
      %v3426 = vadd.f32 1.0, %v3425
      %v3427 = vmul.f32 %v3418, %v3418
      %v3428 = vmul.f32 %v3427, -0.00019511016
      %v3429 = vadd.f32 %v3428, 0.008332121
      %v3430 = vmul.f32 %v3427, %v3429
      %v3431 = vadd.f32 %v3430, -0.16666654
      %v3432 = vmul.f32 %v3427, %v3431
      %v3433 = vadd.f32 %v3432, 1.0
      %v3434 = vmul.f32 %v3433, %v3418
      %vm3435 = vweird.f32 %v340
      %v3436 = vadd.s32 %v3419, 3
      %v3437 = vand.u32 %v3436, 3
      %vm3438 = vcmp.lt.s32.totalorder %v3437, 2
      %vm3439 = vcmp.eq.s32.totalorder %v3437, 0
      %v3440 = vxor.u32 %v3434, 2147483648
      %v3441 = vsel %vm3439, %v3426, %v3440
      %vm3442 = vcmp.eq.s32.totalorder %v3437, 2
      %v3443 = vxor.u32 %v3426, 2147483648
      %v3444 = vsel %vm3442, %v3443, %v3434
      %v3445 = vsel %vm3438, %v3441, %v3444
      %v3446 = vsel %vm3435, nan, %v3445
      %v3447 = vand.u32 2147483647, %v341
      %vm3448 = vcmp.le.f32.partialorder %v3447, 0.7853982
      %vm3449 = vcmp.lt.s32.totalorder %v341, 0
      %v3450 = vand.u32 %v341, 2139095040
      %v3451 = vshrl.u32 %v3450, 23
      %v3452 = vsub.s32 %v3451, 127
      %v3453 = vand.u32 2147483647, %v341
      %v3454 = vand.u32 %v3453, 8388607
      %v3455 = vor.u32 %v3454, 8388608
      %v3456 = vsub.s32 0, %v3455
      %v3457 = vadd.s32 %v3452, 1
      %vm3458 = vcmp.gt.s32.totalorder %v3457, 0
      %v3459 = vsel %vm3458, %v3457, 0
      %v3460 = vshrl.u32 %v3459, 5
      %v3461 = vand.u32 %v3459, 31
      %v3462 = vsub.s32 32, %v3461
      %v3463 = vshrl.u32 683565275, %v3462
      %v3464 = vshll.u32 683565275, %v3461
      %v3465 = vshrl.u32 2475754826, %v3462
      %v3466 = vor.u32 %v3464, %v3465
      %v3467 = vshll.u32 2475754826, %v3461
      %v3468 = vshrl.u32 2131351028, %v3462
      %v3469 = vor.u32 %v3467, %v3468
      %v3470 = vshll.u32 2131351028, %v3461
      %v3471 = vshrl.u32 2102212464, %v3462
      %v3472 = vor.u32 %v3470, %v3471
      %v3473 = vshll.u32 2102212464, %v3461
      %v3474 = vshrl.u32 920167782, %v3462
      %v3475 = vor.u32 %v3473, %v3474
      %v3476 = vshll.u32 920167782, %v3461
      %v3477 = vshrl.u32 1326507024, %v3462
      %v3478 = vor.u32 %v3476, %v3477
      %vm3479 = vcmp.lt.s32.totalorder %v3460, 1
      %vm3480 = vcmp.lt.s32.totalorder %v3460, 2
      %vm3481 = vcmp.lt.s32.totalorder %v3460, 3
      %vm3482 = vcmp.lt.s32.totalorder %v3460, 4
      %v3483 = vsel %vm3479, %v3463, %v3466
      %v3484 = vsel %vm3482, %v3472, 2102212464
      %v3485 = vsel %vm3481, %v3469, %v3484
      %v3486 = vsel %vm3480, %v3483, %v3485
      %v3487 = vsel %vm3479, %v3466, %v3469
      %v3488 = vsel %vm3482, %v3475, 920167782
      %v3489 = vsel %vm3481, %v3472, %v3488
      %v3490 = vsel %vm3480, %v3487, %v3489
      %v3491 = vsel %vm3479, %v3469, %v3472
      %v3492 = vsel %vm3482, %v3478, 1326507024
      %v3493 = vsel %vm3481, %v3475, %v3492
      %v3494 = vsel %vm3480, %v3491, %v3493
      %v3495 = vshll.u32 %v3455, 8
      %v3496 = vand.u32 %v3495, 65535
      %v3497 = vshrl.u32 %v3495, 16
      %v3498 = vand.u32 %v3494, 65535
      %v3499 = vshrl.u32 %v3494, 16
      %v3500 = vmul.u32 %v3496, %v3498
      %v3501 = vmul.u32 %v3496, %v3499
      %v3502 = vmul.u32 %v3497, %v3498
      %v3503 = vmul.u32 %v3497, %v3499
      %v3504 = vshll.u32 %v3501, 16
      %v3505 = vshrl.u32 %v3501, 16
      %v3506 = vshll.u32 %v3502, 16
      %v3507 = vshrl.u32 %v3502, 16
      %vm3508 = vc.u32 %v3500, %v3504
      %v3509 = vsel %vm3508, 1, 0
      %v3510 = vadd.s32 %v3500, %v3504
      %v3511 = vadd.s32 %v3503, %v3509
      %vm3512 = vc.u32 %v3510, %v3506
      %v3513 = vsel %vm3512, 1, 0
      %v3514 = vadd.s32 %v3510, %v3506
      %v3515 = vadd.s32 %v3511, %v3513
      %v3516 = vadd.s32 %v3515, %v3505
      %v3517 = vadd.s32 %v3516, %v3507
      %v3518 = vand.u32 %v3495, 65535
      %v3519 = vshrl.u32 %v3495, 16
      %v3520 = vand.u32 %v3490, 65535
      %v3521 = vshrl.u32 %v3490, 16
      %v3522 = vmul.u32 %v3518, %v3520
      %v3523 = vmul.u32 %v3518, %v3521
      %v3524 = vmul.u32 %v3519, %v3520
      %v3525 = vmul.u32 %v3519, %v3521
      %v3526 = vshll.u32 %v3523, 16
      %v3527 = vshrl.u32 %v3523, 16
      %v3528 = vshll.u32 %v3524, 16
      %v3529 = vshrl.u32 %v3524, 16
      %vm3530 = vc.u32 %v3522, %v3526
      %v3531 = vsel %vm3530, 1, 0
      %v3532 = vadd.s32 %v3522, %v3526
      %v3533 = vadd.s32 %v3525, %v3531
      %vm3534 = vc.u32 %v3532, %v3528
      %v3535 = vsel %vm3534, 1, 0
      %v3536 = vadd.s32 %v3532, %v3528
      %v3537 = vadd.s32 %v3533, %v3535
      %v3538 = vadd.s32 %v3537, %v3527
      %v3539 = vadd.s32 %v3538, %v3529
      %v3540 = vmul.u32 %v3495, %v3486
      %v3541 = vadd.s32 %v3517, %v3536
      %vm3542 = vc.u32 %v3517, %v3536
      %v3543 = vadd.s32 %v3539, 1
      %v3544 = vsel %vm3542, %v3543, %v3539
      %v3545 = vadd.s32 %v3540, %v3544
      %v3546 = vadd.s32 %v3545, 536870912
      %v3547 = vshrl.u32 %v3546, 30
      %v3548 = vshll.u32 %v3547, 30
      %v3549 = vsub.s32 %v3545, %v3548
      %vm3550 = vcmp.lt.s32.totalorder %v3549, 0
      %v3551 = vsub.s32 0, %v3549
      %v3552 = vsel %vm3550, %v3551, %v3549
      %v3553 = vclz %v3552
      %v3554 = vsub.s32 %v3553, 2
      %vm3555 = vcmp.gt.s32.totalorder 0, %v3554
      %v3556 = vsel %vm3555, 0, %v3554
      %v3557 = vsub.s32 32, %v3556
      %v3558 = vshll.u32 %v3549, %v3556
      %v3559 = vshrl.u32 %v3541, %v3557
      %v3560 = vor.u32 %v3558, %v3559
      %v3561 = vsub.s32 4294967266, %v3556
      %v3562 = vadd.s32 %v3561, 127
      %v3563 = vshll.u32 %v3562, 23
      %v3564 = vor.u32 4788187, %v3563
      %v3565 = vand.u32 2147483647, %v3564
      %v3567 = vcvt.s32.f32 %v3560
      %v3568 = vmul.f32 %v3567, %v3565
      %v3569 = vxor.u32 %v3568, 2147483648
      %v3570 = vsel %vm3449, %v3569, %v3568
      %v3571 = vsub.s32 4, %v3547
      %v3572 = vsel %vm3449, %v3571, %v3547
      %v3573 = vsel %vm3448, %v341, %v3570
      %v3574 = vsel %vm3448, 0, %v3572
      %v3575 = vmul.f32 %v3573, %v3573
      %v3576 = vmul.f32 %v3575, -0.001358992
      %v3577 = vadd.f32 %v3576, 0.041655596
      %v3578 = vmul.f32 %v3575, %v3577
      %v3579 = vadd.f32 %v3578, -0.4999988
      %v3580 = vmul.f32 %v3575, %v3579
      %v3581 = vadd.f32 1.0, %v3580
      %v3582 = vmul.f32 %v3573, %v3573
      %v3583 = vmul.f32 %v3582, -0.00019511016
      %v3584 = vadd.f32 %v3583, 0.008332121
      %v3585 = vmul.f32 %v3582, %v3584
      %v3586 = vadd.f32 %v3585, -0.16666654
      %v3587 = vmul.f32 %v3582, %v3586
      %v3588 = vadd.f32 %v3587, 1.0
      %v3589 = vmul.f32 %v3588, %v3573
      %vm3590 = vweird.f32 %v341
      %v3591 = vadd.s32 %v3574, 3
      %v3592 = vand.u32 %v3591, 3
      %vm3593 = vcmp.lt.s32.totalorder %v3592, 2
      %vm3594 = vcmp.eq.s32.totalorder %v3592, 0
      %v3595 = vxor.u32 %v3589, 2147483648
      %v3596 = vsel %vm3594, %v3581, %v3595
      %vm3597 = vcmp.eq.s32.totalorder %v3592, 2
      %v3598 = vxor.u32 %v3581, 2147483648
      %v3599 = vsel %vm3597, %v3598, %v3589
      %v3600 = vsel %vm3593, %v3596, %v3599
      %v3601 = vsel %vm3590, nan, %v3600
      %v3602 = vand.u32 2147483647, %v342
      %vm3603 = vcmp.le.f32.partialorder %v3602, 0.7853982
      %vm3604 = vcmp.lt.s32.totalorder %v342, 0
      %v3605 = vand.u32 %v342, 2139095040
      %v3606 = vshrl.u32 %v3605, 23
      %v3607 = vsub.s32 %v3606, 127
      %v3608 = vand.u32 2147483647, %v342
      %v3609 = vand.u32 %v3608, 8388607
      %v3610 = vor.u32 %v3609, 8388608
      %v3611 = vsub.s32 0, %v3610
      %v3612 = vadd.s32 %v3607, 1
      %vm3613 = vcmp.gt.s32.totalorder %v3612, 0
      %v3614 = vsel %vm3613, %v3612, 0
      %v3615 = vshrl.u32 %v3614, 5
      %v3616 = vand.u32 %v3614, 31
      %v3617 = vsub.s32 32, %v3616
      %v3618 = vshrl.u32 683565275, %v3617
      %v3619 = vshll.u32 683565275, %v3616
      %v3620 = vshrl.u32 2475754826, %v3617
      %v3621 = vor.u32 %v3619, %v3620
      %v3622 = vshll.u32 2475754826, %v3616
      %v3623 = vshrl.u32 2131351028, %v3617
      %v3624 = vor.u32 %v3622, %v3623
      %v3625 = vshll.u32 2131351028, %v3616
      %v3626 = vshrl.u32 2102212464, %v3617
      %v3627 = vor.u32 %v3625, %v3626
      %v3628 = vshll.u32 2102212464, %v3616
      %v3629 = vshrl.u32 920167782, %v3617
      %v3630 = vor.u32 %v3628, %v3629
      %v3631 = vshll.u32 920167782, %v3616
      %v3632 = vshrl.u32 1326507024, %v3617
      %v3633 = vor.u32 %v3631, %v3632
      %vm3634 = vcmp.lt.s32.totalorder %v3615, 1
      %vm3635 = vcmp.lt.s32.totalorder %v3615, 2
      %vm3636 = vcmp.lt.s32.totalorder %v3615, 3
      %vm3637 = vcmp.lt.s32.totalorder %v3615, 4
      %v3638 = vsel %vm3634, %v3618, %v3621
      %v3639 = vsel %vm3637, %v3627, 2102212464
      %v3640 = vsel %vm3636, %v3624, %v3639
      %v3641 = vsel %vm3635, %v3638, %v3640
      %v3642 = vsel %vm3634, %v3621, %v3624
      %v3643 = vsel %vm3637, %v3630, 920167782
      %v3644 = vsel %vm3636, %v3627, %v3643
      %v3645 = vsel %vm3635, %v3642, %v3644
      %v3646 = vsel %vm3634, %v3624, %v3627
      %v3647 = vsel %vm3637, %v3633, 1326507024
      %v3648 = vsel %vm3636, %v3630, %v3647
      %v3649 = vsel %vm3635, %v3646, %v3648
      %v3650 = vshll.u32 %v3610, 8
      %v3651 = vand.u32 %v3650, 65535
      %v3652 = vshrl.u32 %v3650, 16
      %v3653 = vand.u32 %v3649, 65535
      %v3654 = vshrl.u32 %v3649, 16
      %v3655 = vmul.u32 %v3651, %v3653
      %v3656 = vmul.u32 %v3651, %v3654
      %v3657 = vmul.u32 %v3652, %v3653
      %v3658 = vmul.u32 %v3652, %v3654
      %v3659 = vshll.u32 %v3656, 16
      %v3660 = vshrl.u32 %v3656, 16
      %v3661 = vshll.u32 %v3657, 16
      %v3662 = vshrl.u32 %v3657, 16
      %vm3663 = vc.u32 %v3655, %v3659
      %v3664 = vsel %vm3663, 1, 0
      %v3665 = vadd.s32 %v3655, %v3659
      %v3666 = vadd.s32 %v3658, %v3664
      %vm3667 = vc.u32 %v3665, %v3661
      %v3668 = vsel %vm3667, 1, 0
      %v3669 = vadd.s32 %v3665, %v3661
      %v3670 = vadd.s32 %v3666, %v3668
      %v3671 = vadd.s32 %v3670, %v3660
      %v3672 = vadd.s32 %v3671, %v3662
      %v3673 = vand.u32 %v3650, 65535
      %v3674 = vshrl.u32 %v3650, 16
      %v3675 = vand.u32 %v3645, 65535
      %v3676 = vshrl.u32 %v3645, 16
      %v3677 = vmul.u32 %v3673, %v3675
      %v3678 = vmul.u32 %v3673, %v3676
      %v3679 = vmul.u32 %v3674, %v3675
      %v3680 = vmul.u32 %v3674, %v3676
      %v3681 = vshll.u32 %v3678, 16
      %v3682 = vshrl.u32 %v3678, 16
      %v3683 = vshll.u32 %v3679, 16
      %v3684 = vshrl.u32 %v3679, 16
      %vm3685 = vc.u32 %v3677, %v3681
      %v3686 = vsel %vm3685, 1, 0
      %v3687 = vadd.s32 %v3677, %v3681
      %v3688 = vadd.s32 %v3680, %v3686
      %vm3689 = vc.u32 %v3687, %v3683
      %v3690 = vsel %vm3689, 1, 0
      %v3691 = vadd.s32 %v3687, %v3683
      %v3692 = vadd.s32 %v3688, %v3690
      %v3693 = vadd.s32 %v3692, %v3682
      %v3694 = vadd.s32 %v3693, %v3684
      %v3695 = vmul.u32 %v3650, %v3641
      %v3696 = vadd.s32 %v3672, %v3691
      %vm3697 = vc.u32 %v3672, %v3691
      %v3698 = vadd.s32 %v3694, 1
      %v3699 = vsel %vm3697, %v3698, %v3694
      %v3700 = vadd.s32 %v3695, %v3699
      %v3701 = vadd.s32 %v3700, 536870912
      %v3702 = vshrl.u32 %v3701, 30
      %v3703 = vshll.u32 %v3702, 30
      %v3704 = vsub.s32 %v3700, %v3703
      %vm3705 = vcmp.lt.s32.totalorder %v3704, 0
      %v3706 = vsub.s32 0, %v3704
      %v3707 = vsel %vm3705, %v3706, %v3704
      %v3708 = vclz %v3707
      %v3709 = vsub.s32 %v3708, 2
      %vm3710 = vcmp.gt.s32.totalorder 0, %v3709
      %v3711 = vsel %vm3710, 0, %v3709
      %v3712 = vsub.s32 32, %v3711
      %v3713 = vshll.u32 %v3704, %v3711
      %v3714 = vshrl.u32 %v3696, %v3712
      %v3715 = vor.u32 %v3713, %v3714
      %v3716 = vsub.s32 4294967266, %v3711
      %v3717 = vadd.s32 %v3716, 127
      %v3718 = vshll.u32 %v3717, 23
      %v3719 = vor.u32 4788187, %v3718
      %v3720 = vand.u32 2147483647, %v3719
      %v3722 = vcvt.s32.f32 %v3715
      %v3723 = vmul.f32 %v3722, %v3720
      %v3724 = vxor.u32 %v3723, 2147483648
      %v3725 = vsel %vm3604, %v3724, %v3723
      %v3726 = vsub.s32 4, %v3702
      %v3727 = vsel %vm3604, %v3726, %v3702
      %v3728 = vsel %vm3603, %v342, %v3725
      %v3729 = vsel %vm3603, 0, %v3727
      %v3730 = vmul.f32 %v3728, %v3728
      %v3731 = vmul.f32 %v3730, -0.001358992
      %v3732 = vadd.f32 %v3731, 0.041655596
      %v3733 = vmul.f32 %v3730, %v3732
      %v3734 = vadd.f32 %v3733, -0.4999988
      %v3735 = vmul.f32 %v3730, %v3734
      %v3736 = vadd.f32 1.0, %v3735
      %v3737 = vmul.f32 %v3728, %v3728
      %v3738 = vmul.f32 %v3737, -0.00019511016
      %v3739 = vadd.f32 %v3738, 0.008332121
      %v3740 = vmul.f32 %v3737, %v3739
      %v3741 = vadd.f32 %v3740, -0.16666654
      %v3742 = vmul.f32 %v3737, %v3741
      %v3743 = vadd.f32 %v3742, 1.0
      %v3744 = vmul.f32 %v3743, %v3728
      %vm3745 = vweird.f32 %v342
      %v3746 = vadd.s32 %v3729, 3
      %v3747 = vand.u32 %v3746, 3
      %vm3748 = vcmp.lt.s32.totalorder %v3747, 2
      %vm3749 = vcmp.eq.s32.totalorder %v3747, 0
      %v3750 = vxor.u32 %v3744, 2147483648
      %v3751 = vsel %vm3749, %v3736, %v3750
      %vm3752 = vcmp.eq.s32.totalorder %v3747, 2
      %v3753 = vxor.u32 %v3736, 2147483648
      %v3754 = vsel %vm3752, %v3753, %v3744
      %v3755 = vsel %vm3748, %v3751, %v3754
      %v3756 = vsel %vm3745, nan, %v3755
      %v3757 = vand.u32 2147483647, %v343
      %vm3758 = vcmp.le.f32.partialorder %v3757, 0.7853982
      %vm3759 = vcmp.lt.s32.totalorder %v343, 0
      %v3760 = vand.u32 %v343, 2139095040
      %v3761 = vshrl.u32 %v3760, 23
      %v3762 = vsub.s32 %v3761, 127
      %v3763 = vand.u32 2147483647, %v343
      %v3764 = vand.u32 %v3763, 8388607
      %v3765 = vor.u32 %v3764, 8388608
      %v3766 = vsub.s32 0, %v3765
      %v3767 = vadd.s32 %v3762, 1
      %vm3768 = vcmp.gt.s32.totalorder %v3767, 0
      %v3769 = vsel %vm3768, %v3767, 0
      %v3770 = vshrl.u32 %v3769, 5
      %v3771 = vand.u32 %v3769, 31
      %v3772 = vsub.s32 32, %v3771
      %v3773 = vshrl.u32 683565275, %v3772
      %v3774 = vshll.u32 683565275, %v3771
      %v3775 = vshrl.u32 2475754826, %v3772
      %v3776 = vor.u32 %v3774, %v3775
      %v3777 = vshll.u32 2475754826, %v3771
      %v3778 = vshrl.u32 2131351028, %v3772
      %v3779 = vor.u32 %v3777, %v3778
      %v3780 = vshll.u32 2131351028, %v3771
      %v3781 = vshrl.u32 2102212464, %v3772
      %v3782 = vor.u32 %v3780, %v3781
      %v3783 = vshll.u32 2102212464, %v3771
      %v3784 = vshrl.u32 920167782, %v3772
      %v3785 = vor.u32 %v3783, %v3784
      %v3786 = vshll.u32 920167782, %v3771
      %v3787 = vshrl.u32 1326507024, %v3772
      %v3788 = vor.u32 %v3786, %v3787
      %vm3789 = vcmp.lt.s32.totalorder %v3770, 1
      %vm3790 = vcmp.lt.s32.totalorder %v3770, 2
      %vm3791 = vcmp.lt.s32.totalorder %v3770, 3
      %vm3792 = vcmp.lt.s32.totalorder %v3770, 4
      %v3793 = vsel %vm3789, %v3773, %v3776
      %v3794 = vsel %vm3792, %v3782, 2102212464
      %v3795 = vsel %vm3791, %v3779, %v3794
      %v3796 = vsel %vm3790, %v3793, %v3795
      %v3797 = vsel %vm3789, %v3776, %v3779
      %v3798 = vsel %vm3792, %v3785, 920167782
      %v3799 = vsel %vm3791, %v3782, %v3798
      %v3800 = vsel %vm3790, %v3797, %v3799
      %v3801 = vsel %vm3789, %v3779, %v3782
      %v3802 = vsel %vm3792, %v3788, 1326507024
      %v3803 = vsel %vm3791, %v3785, %v3802
      %v3804 = vsel %vm3790, %v3801, %v3803
      %v3805 = vshll.u32 %v3765, 8
      %v3806 = vand.u32 %v3805, 65535
      %v3807 = vshrl.u32 %v3805, 16
      %v3808 = vand.u32 %v3804, 65535
      %v3809 = vshrl.u32 %v3804, 16
      %v3810 = vmul.u32 %v3806, %v3808
      %v3811 = vmul.u32 %v3806, %v3809
      %v3812 = vmul.u32 %v3807, %v3808
      %v3813 = vmul.u32 %v3807, %v3809
      %v3814 = vshll.u32 %v3811, 16
      %v3815 = vshrl.u32 %v3811, 16
      %v3816 = vshll.u32 %v3812, 16
      %v3817 = vshrl.u32 %v3812, 16
      %vm3818 = vc.u32 %v3810, %v3814
      %v3819 = vsel %vm3818, 1, 0
      %v3820 = vadd.s32 %v3810, %v3814
      %v3821 = vadd.s32 %v3813, %v3819
      %vm3822 = vc.u32 %v3820, %v3816
      %v3823 = vsel %vm3822, 1, 0
      %v3824 = vadd.s32 %v3820, %v3816
      %v3825 = vadd.s32 %v3821, %v3823
      %v3826 = vadd.s32 %v3825, %v3815
      %v3827 = vadd.s32 %v3826, %v3817
      %v3828 = vand.u32 %v3805, 65535
      %v3829 = vshrl.u32 %v3805, 16
      %v3830 = vand.u32 %v3800, 65535
      %v3831 = vshrl.u32 %v3800, 16
      %v3832 = vmul.u32 %v3828, %v3830
      %v3833 = vmul.u32 %v3828, %v3831
      %v3834 = vmul.u32 %v3829, %v3830
      %v3835 = vmul.u32 %v3829, %v3831
      %v3836 = vshll.u32 %v3833, 16
      %v3837 = vshrl.u32 %v3833, 16
      %v3838 = vshll.u32 %v3834, 16
      %v3839 = vshrl.u32 %v3834, 16
      %vm3840 = vc.u32 %v3832, %v3836
      %v3841 = vsel %vm3840, 1, 0
      %v3842 = vadd.s32 %v3832, %v3836
      %v3843 = vadd.s32 %v3835, %v3841
      %vm3844 = vc.u32 %v3842, %v3838
      %v3845 = vsel %vm3844, 1, 0
      %v3846 = vadd.s32 %v3842, %v3838
      %v3847 = vadd.s32 %v3843, %v3845
      %v3848 = vadd.s32 %v3847, %v3837
      %v3849 = vadd.s32 %v3848, %v3839
      %v3850 = vmul.u32 %v3805, %v3796
      %v3851 = vadd.s32 %v3827, %v3846
      %vm3852 = vc.u32 %v3827, %v3846
      %v3853 = vadd.s32 %v3849, 1
      %v3854 = vsel %vm3852, %v3853, %v3849
      %v3855 = vadd.s32 %v3850, %v3854
      %v3856 = vadd.s32 %v3855, 536870912
      %v3857 = vshrl.u32 %v3856, 30
      %v3858 = vshll.u32 %v3857, 30
      %v3859 = vsub.s32 %v3855, %v3858
      %vm3860 = vcmp.lt.s32.totalorder %v3859, 0
      %v3861 = vsub.s32 0, %v3859
      %v3862 = vsel %vm3860, %v3861, %v3859
      %v3863 = vclz %v3862
      %v3864 = vsub.s32 %v3863, 2
      %vm3865 = vcmp.gt.s32.totalorder 0, %v3864
      %v3866 = vsel %vm3865, 0, %v3864
      %v3867 = vsub.s32 32, %v3866
      %v3868 = vshll.u32 %v3859, %v3866
      %v3869 = vshrl.u32 %v3851, %v3867
      %v3870 = vor.u32 %v3868, %v3869
      %v3871 = vsub.s32 4294967266, %v3866
      %v3872 = vadd.s32 %v3871, 127
      %v3873 = vshll.u32 %v3872, 23
      %v3874 = vor.u32 4788187, %v3873
      %v3875 = vand.u32 2147483647, %v3874
      %v3877 = vcvt.s32.f32 %v3870
      %v3878 = vmul.f32 %v3877, %v3875
      %v3879 = vxor.u32 %v3878, 2147483648
      %v3880 = vsel %vm3759, %v3879, %v3878
      %v3881 = vsub.s32 4, %v3857
      %v3882 = vsel %vm3759, %v3881, %v3857
      %v3883 = vsel %vm3758, %v343, %v3880
      %v3884 = vsel %vm3758, 0, %v3882
      %v3885 = vmul.f32 %v3883, %v3883
      %v3886 = vmul.f32 %v3885, -0.001358992
      %v3887 = vadd.f32 %v3886, 0.041655596
      %v3888 = vmul.f32 %v3885, %v3887
      %v3889 = vadd.f32 %v3888, -0.4999988
      %v3890 = vmul.f32 %v3885, %v3889
      %v3891 = vadd.f32 1.0, %v3890
      %v3892 = vmul.f32 %v3883, %v3883
      %v3893 = vmul.f32 %v3892, -0.00019511016
      %v3894 = vadd.f32 %v3893, 0.008332121
      %v3895 = vmul.f32 %v3892, %v3894
      %v3896 = vadd.f32 %v3895, -0.16666654
      %v3897 = vmul.f32 %v3892, %v3896
      %v3898 = vadd.f32 %v3897, 1.0
      %v3899 = vmul.f32 %v3898, %v3883
      %vm3900 = vweird.f32 %v343
      %v3901 = vadd.s32 %v3884, 3
      %v3902 = vand.u32 %v3901, 3
      %vm3903 = vcmp.lt.s32.totalorder %v3902, 2
      %vm3904 = vcmp.eq.s32.totalorder %v3902, 0
      %v3905 = vxor.u32 %v3899, 2147483648
      %v3906 = vsel %vm3904, %v3891, %v3905
      %vm3907 = vcmp.eq.s32.totalorder %v3902, 2
      %v3908 = vxor.u32 %v3891, 2147483648
      %v3909 = vsel %vm3907, %v3908, %v3899
      %v3910 = vsel %vm3903, %v3906, %v3909
      %v3911 = vsel %vm3900, nan, %v3910
      %v3912 = vand.u32 2147483647, %v344
      %vm3913 = vcmp.le.f32.partialorder %v3912, 0.7853982
      %vm3914 = vcmp.lt.s32.totalorder %v344, 0
      %v3915 = vand.u32 %v344, 2139095040
      %v3916 = vshrl.u32 %v3915, 23
      %v3917 = vsub.s32 %v3916, 127
      %v3918 = vand.u32 2147483647, %v344
      %v3919 = vand.u32 %v3918, 8388607
      %v3920 = vor.u32 %v3919, 8388608
      %v3921 = vsub.s32 0, %v3920
      %v3922 = vadd.s32 %v3917, 1
      %vm3923 = vcmp.gt.s32.totalorder %v3922, 0
      %v3924 = vsel %vm3923, %v3922, 0
      %v3925 = vshrl.u32 %v3924, 5
      %v3926 = vand.u32 %v3924, 31
      %v3927 = vsub.s32 32, %v3926
      %v3928 = vshrl.u32 683565275, %v3927
      %v3929 = vshll.u32 683565275, %v3926
      %v3930 = vshrl.u32 2475754826, %v3927
      %v3931 = vor.u32 %v3929, %v3930
      %v3932 = vshll.u32 2475754826, %v3926
      %v3933 = vshrl.u32 2131351028, %v3927
      %v3934 = vor.u32 %v3932, %v3933
      %v3935 = vshll.u32 2131351028, %v3926
      %v3936 = vshrl.u32 2102212464, %v3927
      %v3937 = vor.u32 %v3935, %v3936
      %v3938 = vshll.u32 2102212464, %v3926
      %v3939 = vshrl.u32 920167782, %v3927
      %v3940 = vor.u32 %v3938, %v3939
      %v3941 = vshll.u32 920167782, %v3926
      %v3942 = vshrl.u32 1326507024, %v3927
      %v3943 = vor.u32 %v3941, %v3942
      %vm3944 = vcmp.lt.s32.totalorder %v3925, 1
      %vm3945 = vcmp.lt.s32.totalorder %v3925, 2
      %vm3946 = vcmp.lt.s32.totalorder %v3925, 3
      %vm3947 = vcmp.lt.s32.totalorder %v3925, 4
      %v3948 = vsel %vm3944, %v3928, %v3931
      %v3949 = vsel %vm3947, %v3937, 2102212464
      %v3950 = vsel %vm3946, %v3934, %v3949
      %v3951 = vsel %vm3945, %v3948, %v3950
      %v3952 = vsel %vm3944, %v3931, %v3934
      %v3953 = vsel %vm3947, %v3940, 920167782
      %v3954 = vsel %vm3946, %v3937, %v3953
      %v3955 = vsel %vm3945, %v3952, %v3954
      %v3956 = vsel %vm3944, %v3934, %v3937
      %v3957 = vsel %vm3947, %v3943, 1326507024
      %v3958 = vsel %vm3946, %v3940, %v3957
      %v3959 = vsel %vm3945, %v3956, %v3958
      %v3960 = vshll.u32 %v3920, 8
      %v3961 = vand.u32 %v3960, 65535
      %v3962 = vshrl.u32 %v3960, 16
      %v3963 = vand.u32 %v3959, 65535
      %v3964 = vshrl.u32 %v3959, 16
      %v3965 = vmul.u32 %v3961, %v3963
      %v3966 = vmul.u32 %v3961, %v3964
      %v3967 = vmul.u32 %v3962, %v3963
      %v3968 = vmul.u32 %v3962, %v3964
      %v3969 = vshll.u32 %v3966, 16
      %v3970 = vshrl.u32 %v3966, 16
      %v3971 = vshll.u32 %v3967, 16
      %v3972 = vshrl.u32 %v3967, 16
      %vm3973 = vc.u32 %v3965, %v3969
      %v3974 = vsel %vm3973, 1, 0
      %v3975 = vadd.s32 %v3965, %v3969
      %v3976 = vadd.s32 %v3968, %v3974
      %vm3977 = vc.u32 %v3975, %v3971
      %v3978 = vsel %vm3977, 1, 0
      %v3979 = vadd.s32 %v3975, %v3971
      %v3980 = vadd.s32 %v3976, %v3978
      %v3981 = vadd.s32 %v3980, %v3970
      %v3982 = vadd.s32 %v3981, %v3972
      %v3983 = vand.u32 %v3960, 65535
      %v3984 = vshrl.u32 %v3960, 16
      %v3985 = vand.u32 %v3955, 65535
      %v3986 = vshrl.u32 %v3955, 16
      %v3987 = vmul.u32 %v3983, %v3985
      %v3988 = vmul.u32 %v3983, %v3986
      %v3989 = vmul.u32 %v3984, %v3985
      %v3990 = vmul.u32 %v3984, %v3986
      %v3991 = vshll.u32 %v3988, 16
      %v3992 = vshrl.u32 %v3988, 16
      %v3993 = vshll.u32 %v3989, 16
      %v3994 = vshrl.u32 %v3989, 16
      %vm3995 = vc.u32 %v3987, %v3991
      %v3996 = vsel %vm3995, 1, 0
      %v3997 = vadd.s32 %v3987, %v3991
      %v3998 = vadd.s32 %v3990, %v3996
      %vm3999 = vc.u32 %v3997, %v3993
      %v4000 = vsel %vm3999, 1, 0
      %v4001 = vadd.s32 %v3997, %v3993
      %v4002 = vadd.s32 %v3998, %v4000
      %v4003 = vadd.s32 %v4002, %v3992
      %v4004 = vadd.s32 %v4003, %v3994
      %v4005 = vmul.u32 %v3960, %v3951
      %v4006 = vadd.s32 %v3982, %v4001
      %vm4007 = vc.u32 %v3982, %v4001
      %v4008 = vadd.s32 %v4004, 1
      %v4009 = vsel %vm4007, %v4008, %v4004
      %v4010 = vadd.s32 %v4005, %v4009
      %v4011 = vadd.s32 %v4010, 536870912
      %v4012 = vshrl.u32 %v4011, 30
      %v4013 = vshll.u32 %v4012, 30
      %v4014 = vsub.s32 %v4010, %v4013
      %vm4015 = vcmp.lt.s32.totalorder %v4014, 0
      %v4016 = vsub.s32 0, %v4014
      %v4017 = vsel %vm4015, %v4016, %v4014
      %v4018 = vclz %v4017
      %v4019 = vsub.s32 %v4018, 2
      %vm4020 = vcmp.gt.s32.totalorder 0, %v4019
      %v4021 = vsel %vm4020, 0, %v4019
      %v4022 = vsub.s32 32, %v4021
      %v4023 = vshll.u32 %v4014, %v4021
      %v4024 = vshrl.u32 %v4006, %v4022
      %v4025 = vor.u32 %v4023, %v4024
      %v4026 = vsub.s32 4294967266, %v4021
      %v4027 = vadd.s32 %v4026, 127
      %v4028 = vshll.u32 %v4027, 23
      %v4029 = vor.u32 4788187, %v4028
      %v4030 = vand.u32 2147483647, %v4029
      %v4032 = vcvt.s32.f32 %v4025
      %v4033 = vmul.f32 %v4032, %v4030
      %v4034 = vxor.u32 %v4033, 2147483648
      %v4035 = vsel %vm3914, %v4034, %v4033
      %v4036 = vsub.s32 4, %v4012
      %v4037 = vsel %vm3914, %v4036, %v4012
      %v4038 = vsel %vm3913, %v344, %v4035
      %v4039 = vsel %vm3913, 0, %v4037
      %v4040 = vmul.f32 %v4038, %v4038
      %v4041 = vmul.f32 %v4040, -0.001358992
      %v4042 = vadd.f32 %v4041, 0.041655596
      %v4043 = vmul.f32 %v4040, %v4042
      %v4044 = vadd.f32 %v4043, -0.4999988
      %v4045 = vmul.f32 %v4040, %v4044
      %v4046 = vadd.f32 1.0, %v4045
      %v4047 = vmul.f32 %v4038, %v4038
      %v4048 = vmul.f32 %v4047, -0.00019511016
      %v4049 = vadd.f32 %v4048, 0.008332121
      %v4050 = vmul.f32 %v4047, %v4049
      %v4051 = vadd.f32 %v4050, -0.16666654
      %v4052 = vmul.f32 %v4047, %v4051
      %v4053 = vadd.f32 %v4052, 1.0
      %v4054 = vmul.f32 %v4053, %v4038
      %vm4055 = vweird.f32 %v344
      %v4056 = vadd.s32 %v4039, 3
      %v4057 = vand.u32 %v4056, 3
      %vm4058 = vcmp.lt.s32.totalorder %v4057, 2
      %vm4059 = vcmp.eq.s32.totalorder %v4057, 0
      %v4060 = vxor.u32 %v4054, 2147483648
      %v4061 = vsel %vm4059, %v4046, %v4060
      %vm4062 = vcmp.eq.s32.totalorder %v4057, 2
      %v4063 = vxor.u32 %v4046, 2147483648
      %v4064 = vsel %vm4062, %v4063, %v4054
      %v4065 = vsel %vm4058, %v4061, %v4064
      %v4066 = vsel %vm4055, nan, %v4065
      %v4067 = vand.u32 2147483647, %v345
      %vm4068 = vcmp.le.f32.partialorder %v4067, 0.7853982
      %vm4069 = vcmp.lt.s32.totalorder %v345, 0
      %v4070 = vand.u32 %v345, 2139095040
      %v4071 = vshrl.u32 %v4070, 23
      %v4072 = vsub.s32 %v4071, 127
      %v4073 = vand.u32 2147483647, %v345
      %v4074 = vand.u32 %v4073, 8388607
      %v4075 = vor.u32 %v4074, 8388608
      %v4076 = vsub.s32 0, %v4075
      %v4077 = vadd.s32 %v4072, 1
      %vm4078 = vcmp.gt.s32.totalorder %v4077, 0
      %v4079 = vsel %vm4078, %v4077, 0
      %v4080 = vshrl.u32 %v4079, 5
      %v4081 = vand.u32 %v4079, 31
      %v4082 = vsub.s32 32, %v4081
      %v4083 = vshrl.u32 683565275, %v4082
      %v4084 = vshll.u32 683565275, %v4081
      %v4085 = vshrl.u32 2475754826, %v4082
      %v4086 = vor.u32 %v4084, %v4085
      %v4087 = vshll.u32 2475754826, %v4081
      %v4088 = vshrl.u32 2131351028, %v4082
      %v4089 = vor.u32 %v4087, %v4088
      %v4090 = vshll.u32 2131351028, %v4081
      %v4091 = vshrl.u32 2102212464, %v4082
      %v4092 = vor.u32 %v4090, %v4091
      %v4093 = vshll.u32 2102212464, %v4081
      %v4094 = vshrl.u32 920167782, %v4082
      %v4095 = vor.u32 %v4093, %v4094
      %v4096 = vshll.u32 920167782, %v4081
      %v4097 = vshrl.u32 1326507024, %v4082
      %v4098 = vor.u32 %v4096, %v4097
      %vm4099 = vcmp.lt.s32.totalorder %v4080, 1
      %vm4100 = vcmp.lt.s32.totalorder %v4080, 2
      %vm4101 = vcmp.lt.s32.totalorder %v4080, 3
      %vm4102 = vcmp.lt.s32.totalorder %v4080, 4
      %v4103 = vsel %vm4099, %v4083, %v4086
      %v4104 = vsel %vm4102, %v4092, 2102212464
      %v4105 = vsel %vm4101, %v4089, %v4104
      %v4106 = vsel %vm4100, %v4103, %v4105
      %v4107 = vsel %vm4099, %v4086, %v4089
      %v4108 = vsel %vm4102, %v4095, 920167782
      %v4109 = vsel %vm4101, %v4092, %v4108
      %v4110 = vsel %vm4100, %v4107, %v4109
      %v4111 = vsel %vm4099, %v4089, %v4092
      %v4112 = vsel %vm4102, %v4098, 1326507024
      %v4113 = vsel %vm4101, %v4095, %v4112
      %v4114 = vsel %vm4100, %v4111, %v4113
      %v4115 = vshll.u32 %v4075, 8
      %v4116 = vand.u32 %v4115, 65535
      %v4117 = vshrl.u32 %v4115, 16
      %v4118 = vand.u32 %v4114, 65535
      %v4119 = vshrl.u32 %v4114, 16
      %v4120 = vmul.u32 %v4116, %v4118
      %v4121 = vmul.u32 %v4116, %v4119
      %v4122 = vmul.u32 %v4117, %v4118
      %v4123 = vmul.u32 %v4117, %v4119
      %v4124 = vshll.u32 %v4121, 16
      %v4125 = vshrl.u32 %v4121, 16
      %v4126 = vshll.u32 %v4122, 16
      %v4127 = vshrl.u32 %v4122, 16
      %vm4128 = vc.u32 %v4120, %v4124
      %v4129 = vsel %vm4128, 1, 0
      %v4130 = vadd.s32 %v4120, %v4124
      %v4131 = vadd.s32 %v4123, %v4129
      %vm4132 = vc.u32 %v4130, %v4126
      %v4133 = vsel %vm4132, 1, 0
      %v4134 = vadd.s32 %v4130, %v4126
      %v4135 = vadd.s32 %v4131, %v4133
      %v4136 = vadd.s32 %v4135, %v4125
      %v4137 = vadd.s32 %v4136, %v4127
      %v4138 = vand.u32 %v4115, 65535
      %v4139 = vshrl.u32 %v4115, 16
      %v4140 = vand.u32 %v4110, 65535
      %v4141 = vshrl.u32 %v4110, 16
      %v4142 = vmul.u32 %v4138, %v4140
      %v4143 = vmul.u32 %v4138, %v4141
      %v4144 = vmul.u32 %v4139, %v4140
      %v4145 = vmul.u32 %v4139, %v4141
      %v4146 = vshll.u32 %v4143, 16
      %v4147 = vshrl.u32 %v4143, 16
      %v4148 = vshll.u32 %v4144, 16
      %v4149 = vshrl.u32 %v4144, 16
      %vm4150 = vc.u32 %v4142, %v4146
      %v4151 = vsel %vm4150, 1, 0
      %v4152 = vadd.s32 %v4142, %v4146
      %v4153 = vadd.s32 %v4145, %v4151
      %vm4154 = vc.u32 %v4152, %v4148
      %v4155 = vsel %vm4154, 1, 0
      %v4156 = vadd.s32 %v4152, %v4148
      %v4157 = vadd.s32 %v4153, %v4155
      %v4158 = vadd.s32 %v4157, %v4147
      %v4159 = vadd.s32 %v4158, %v4149
      %v4160 = vmul.u32 %v4115, %v4106
      %v4161 = vadd.s32 %v4137, %v4156
      %vm4162 = vc.u32 %v4137, %v4156
      %v4163 = vadd.s32 %v4159, 1
      %v4164 = vsel %vm4162, %v4163, %v4159
      %v4165 = vadd.s32 %v4160, %v4164
      %v4166 = vadd.s32 %v4165, 536870912
      %v4167 = vshrl.u32 %v4166, 30
      %v4168 = vshll.u32 %v4167, 30
      %v4169 = vsub.s32 %v4165, %v4168
      %vm4170 = vcmp.lt.s32.totalorder %v4169, 0
      %v4171 = vsub.s32 0, %v4169
      %v4172 = vsel %vm4170, %v4171, %v4169
      %v4173 = vclz %v4172
      %v4174 = vsub.s32 %v4173, 2
      %vm4175 = vcmp.gt.s32.totalorder 0, %v4174
      %v4176 = vsel %vm4175, 0, %v4174
      %v4177 = vsub.s32 32, %v4176
      %v4178 = vshll.u32 %v4169, %v4176
      %v4179 = vshrl.u32 %v4161, %v4177
      %v4180 = vor.u32 %v4178, %v4179
      %v4181 = vsub.s32 4294967266, %v4176
      %v4182 = vadd.s32 %v4181, 127
      %v4183 = vshll.u32 %v4182, 23
      %v4184 = vor.u32 4788187, %v4183
      %v4185 = vand.u32 2147483647, %v4184
      %v4187 = vcvt.s32.f32 %v4180
      %v4188 = vmul.f32 %v4187, %v4185
      %v4189 = vxor.u32 %v4188, 2147483648
      %v4190 = vsel %vm4069, %v4189, %v4188
      %v4191 = vsub.s32 4, %v4167
      %v4192 = vsel %vm4069, %v4191, %v4167
      %v4193 = vsel %vm4068, %v345, %v4190
      %v4194 = vsel %vm4068, 0, %v4192
      %v4195 = vmul.f32 %v4193, %v4193
      %v4196 = vmul.f32 %v4195, -0.001358992
      %v4197 = vadd.f32 %v4196, 0.041655596
      %v4198 = vmul.f32 %v4195, %v4197
      %v4199 = vadd.f32 %v4198, -0.4999988
      %v4200 = vmul.f32 %v4195, %v4199
      %v4201 = vadd.f32 1.0, %v4200
      %v4202 = vmul.f32 %v4193, %v4193
      %v4203 = vmul.f32 %v4202, -0.00019511016
      %v4204 = vadd.f32 %v4203, 0.008332121
      %v4205 = vmul.f32 %v4202, %v4204
      %v4206 = vadd.f32 %v4205, -0.16666654
      %v4207 = vmul.f32 %v4202, %v4206
      %v4208 = vadd.f32 %v4207, 1.0
      %v4209 = vmul.f32 %v4208, %v4193
      %vm4210 = vweird.f32 %v345
      %v4211 = vadd.s32 %v4194, 3
      %v4212 = vand.u32 %v4211, 3
      %vm4213 = vcmp.lt.s32.totalorder %v4212, 2
      %vm4214 = vcmp.eq.s32.totalorder %v4212, 0
      %v4215 = vxor.u32 %v4209, 2147483648
      %v4216 = vsel %vm4214, %v4201, %v4215
      %vm4217 = vcmp.eq.s32.totalorder %v4212, 2
      %v4218 = vxor.u32 %v4201, 2147483648
      %v4219 = vsel %vm4217, %v4218, %v4209
      %v4220 = vsel %vm4213, %v4216, %v4219
      %v4221 = vsel %vm4210, nan, %v4220
      %v4222 = vand.u32 2147483647, %v346
      %vm4223 = vcmp.le.f32.partialorder %v4222, 0.7853982
      %vm4224 = vcmp.lt.s32.totalorder %v346, 0
      %v4225 = vand.u32 %v346, 2139095040
      %v4226 = vshrl.u32 %v4225, 23
      %v4227 = vsub.s32 %v4226, 127
      %v4228 = vand.u32 2147483647, %v346
      %v4229 = vand.u32 %v4228, 8388607
      %v4230 = vor.u32 %v4229, 8388608
      %v4231 = vsub.s32 0, %v4230
      %v4232 = vadd.s32 %v4227, 1
      %vm4233 = vcmp.gt.s32.totalorder %v4232, 0
      %v4234 = vsel %vm4233, %v4232, 0
      %v4235 = vshrl.u32 %v4234, 5
      %v4236 = vand.u32 %v4234, 31
      %v4237 = vsub.s32 32, %v4236
      %v4238 = vshrl.u32 683565275, %v4237
      %v4239 = vshll.u32 683565275, %v4236
      %v4240 = vshrl.u32 2475754826, %v4237
      %v4241 = vor.u32 %v4239, %v4240
      %v4242 = vshll.u32 2475754826, %v4236
      %v4243 = vshrl.u32 2131351028, %v4237
      %v4244 = vor.u32 %v4242, %v4243
      %v4245 = vshll.u32 2131351028, %v4236
      %v4246 = vshrl.u32 2102212464, %v4237
      %v4247 = vor.u32 %v4245, %v4246
      %v4248 = vshll.u32 2102212464, %v4236
      %v4249 = vshrl.u32 920167782, %v4237
      %v4250 = vor.u32 %v4248, %v4249
      %v4251 = vshll.u32 920167782, %v4236
      %v4252 = vshrl.u32 1326507024, %v4237
      %v4253 = vor.u32 %v4251, %v4252
      %vm4254 = vcmp.lt.s32.totalorder %v4235, 1
      %vm4255 = vcmp.lt.s32.totalorder %v4235, 2
      %vm4256 = vcmp.lt.s32.totalorder %v4235, 3
      %vm4257 = vcmp.lt.s32.totalorder %v4235, 4
      %v4258 = vsel %vm4254, %v4238, %v4241
      %v4259 = vsel %vm4257, %v4247, 2102212464
      %v4260 = vsel %vm4256, %v4244, %v4259
      %v4261 = vsel %vm4255, %v4258, %v4260
      %v4262 = vsel %vm4254, %v4241, %v4244
      %v4263 = vsel %vm4257, %v4250, 920167782
      %v4264 = vsel %vm4256, %v4247, %v4263
      %v4265 = vsel %vm4255, %v4262, %v4264
      %v4266 = vsel %vm4254, %v4244, %v4247
      %v4267 = vsel %vm4257, %v4253, 1326507024
      %v4268 = vsel %vm4256, %v4250, %v4267
      %v4269 = vsel %vm4255, %v4266, %v4268
      %v4270 = vshll.u32 %v4230, 8
      %v4271 = vand.u32 %v4270, 65535
      %v4272 = vshrl.u32 %v4270, 16
      %v4273 = vand.u32 %v4269, 65535
      %v4274 = vshrl.u32 %v4269, 16
      %v4275 = vmul.u32 %v4271, %v4273
      %v4276 = vmul.u32 %v4271, %v4274
      %v4277 = vmul.u32 %v4272, %v4273
      %v4278 = vmul.u32 %v4272, %v4274
      %v4279 = vshll.u32 %v4276, 16
      %v4280 = vshrl.u32 %v4276, 16
      %v4281 = vshll.u32 %v4277, 16
      %v4282 = vshrl.u32 %v4277, 16
      %vm4283 = vc.u32 %v4275, %v4279
      %v4284 = vsel %vm4283, 1, 0
      %v4285 = vadd.s32 %v4275, %v4279
      %v4286 = vadd.s32 %v4278, %v4284
      %vm4287 = vc.u32 %v4285, %v4281
      %v4288 = vsel %vm4287, 1, 0
      %v4289 = vadd.s32 %v4285, %v4281
      %v4290 = vadd.s32 %v4286, %v4288
      %v4291 = vadd.s32 %v4290, %v4280
      %v4292 = vadd.s32 %v4291, %v4282
      %v4293 = vand.u32 %v4270, 65535
      %v4294 = vshrl.u32 %v4270, 16
      %v4295 = vand.u32 %v4265, 65535
      %v4296 = vshrl.u32 %v4265, 16
      %v4297 = vmul.u32 %v4293, %v4295
      %v4298 = vmul.u32 %v4293, %v4296
      %v4299 = vmul.u32 %v4294, %v4295
      %v4300 = vmul.u32 %v4294, %v4296
      %v4301 = vshll.u32 %v4298, 16
      %v4302 = vshrl.u32 %v4298, 16
      %v4303 = vshll.u32 %v4299, 16
      %v4304 = vshrl.u32 %v4299, 16
      %vm4305 = vc.u32 %v4297, %v4301
      %v4306 = vsel %vm4305, 1, 0
      %v4307 = vadd.s32 %v4297, %v4301
      %v4308 = vadd.s32 %v4300, %v4306
      %vm4309 = vc.u32 %v4307, %v4303
      %v4310 = vsel %vm4309, 1, 0
      %v4311 = vadd.s32 %v4307, %v4303
      %v4312 = vadd.s32 %v4308, %v4310
      %v4313 = vadd.s32 %v4312, %v4302
      %v4314 = vadd.s32 %v4313, %v4304
      %v4315 = vmul.u32 %v4270, %v4261
      %v4316 = vadd.s32 %v4292, %v4311
      %vm4317 = vc.u32 %v4292, %v4311
      %v4318 = vadd.s32 %v4314, 1
      %v4319 = vsel %vm4317, %v4318, %v4314
      %v4320 = vadd.s32 %v4315, %v4319
      %v4321 = vadd.s32 %v4320, 536870912
      %v4322 = vshrl.u32 %v4321, 30
      %v4323 = vshll.u32 %v4322, 30
      %v4324 = vsub.s32 %v4320, %v4323
      %vm4325 = vcmp.lt.s32.totalorder %v4324, 0
      %v4326 = vsub.s32 0, %v4324
      %v4327 = vsel %vm4325, %v4326, %v4324
      %v4328 = vclz %v4327
      %v4329 = vsub.s32 %v4328, 2
      %vm4330 = vcmp.gt.s32.totalorder 0, %v4329
      %v4331 = vsel %vm4330, 0, %v4329
      %v4332 = vsub.s32 32, %v4331
      %v4333 = vshll.u32 %v4324, %v4331
      %v4334 = vshrl.u32 %v4316, %v4332
      %v4335 = vor.u32 %v4333, %v4334
      %v4336 = vsub.s32 4294967266, %v4331
      %v4337 = vadd.s32 %v4336, 127
      %v4338 = vshll.u32 %v4337, 23
      %v4339 = vor.u32 4788187, %v4338
      %v4340 = vand.u32 2147483647, %v4339
      %v4342 = vcvt.s32.f32 %v4335
      %v4343 = vmul.f32 %v4342, %v4340
      %v4344 = vxor.u32 %v4343, 2147483648
      %v4345 = vsel %vm4224, %v4344, %v4343
      %v4346 = vsub.s32 4, %v4322
      %v4347 = vsel %vm4224, %v4346, %v4322
      %v4348 = vsel %vm4223, %v346, %v4345
      %v4349 = vsel %vm4223, 0, %v4347
      %v4350 = vmul.f32 %v4348, %v4348
      %v4351 = vmul.f32 %v4350, -0.001358992
      %v4352 = vadd.f32 %v4351, 0.041655596
      %v4353 = vmul.f32 %v4350, %v4352
      %v4354 = vadd.f32 %v4353, -0.4999988
      %v4355 = vmul.f32 %v4350, %v4354
      %v4356 = vadd.f32 1.0, %v4355
      %v4357 = vmul.f32 %v4348, %v4348
      %v4358 = vmul.f32 %v4357, -0.00019511016
      %v4359 = vadd.f32 %v4358, 0.008332121
      %v4360 = vmul.f32 %v4357, %v4359
      %v4361 = vadd.f32 %v4360, -0.16666654
      %v4362 = vmul.f32 %v4357, %v4361
      %v4363 = vadd.f32 %v4362, 1.0
      %v4364 = vmul.f32 %v4363, %v4348
      %vm4365 = vweird.f32 %v346
      %v4366 = vadd.s32 %v4349, 3
      %v4367 = vand.u32 %v4366, 3
      %vm4368 = vcmp.lt.s32.totalorder %v4367, 2
      %vm4369 = vcmp.eq.s32.totalorder %v4367, 0
      %v4370 = vxor.u32 %v4364, 2147483648
      %v4371 = vsel %vm4369, %v4356, %v4370
      %vm4372 = vcmp.eq.s32.totalorder %v4367, 2
      %v4373 = vxor.u32 %v4356, 2147483648
      %v4374 = vsel %vm4372, %v4373, %v4364
      %v4375 = vsel %vm4368, %v4371, %v4374
      %v4376 = vsel %vm4365, nan, %v4375
      %4377 = vst [vmem:[%s208] sm:$0xff] %v501
      %4378 = vst [vmem:[%s208 + $0x8] sm:$0xff] %v656
      %4379 = vst [vmem:[%s208 + $0x10] sm:$0xff] %v811
      %4380 = vst [vmem:[%s208 + $0x18] sm:$0xff] %v966
      %4381 = vst [vmem:[%s208 + $0x20] sm:$0xff] %v1121
      %4382 = vst [vmem:[%s208 + $0x28] sm:$0xff] %v1276
      %4383 = vst [vmem:[%s208 + $0x30] sm:$0xff] %v1431
      %4384 = vst [vmem:[%s208 + $0x38] sm:$0xff] %v1586
      %4385 = vst [vmem:[%s208 + $0x40] sm:$0xff] %v1741
      %4386 = vst [vmem:[%s208 + $0x48] sm:$0xff] %v1896
      %4387 = vst [vmem:[%s208 + $0x50] sm:$0xff] %v2051
      %4388 = vst [vmem:[%s208 + $0x58] sm:$0xff] %v2206
      %4389 = vst [vmem:[%s208 + $0x60] sm:$0xff] %v2361
      %4390 = vst [vmem:[%s208 + $0x68] sm:$0xff] %v2516
      %4391 = vst [vmem:[%s208 + $0x70] sm:$0xff] %v2671
      %4392 = vst [vmem:[%s208 + $0x78] sm:$0xff] %v2826
      %4393 = vst [vmem:[%s208 + $0x80] sm:$0xff] %v2981
      %4394 = vst [vmem:[%s208 + $0x88] sm:$0xff] %v3136
      %4395 = vst [vmem:[%s208 + $0x90] sm:$0xff] %v3291
      %4396 = vst [vmem:[%s208 + $0x98] sm:$0xff] %v3446
      %4397 = vst [vmem:[%s208 + $0xa0] sm:$0xff] %v3601
      %4398 = vst [vmem:[%s208 + $0xa8] sm:$0xff] %v3756
      %4399 = vst [vmem:[%s208 + $0xb0] sm:$0xff] %v3911
      %4400 = vst [vmem:[%s208 + $0xb8] sm:$0xff] %v4066
      %4401 = vst [vmem:[%s208 + $0xc0] sm:$0xf] %v4221
      %4402 = vst [vmem:[%s208 + $0xc8] sm:$0xf] %v4376
      %s4403 = smul.u32 2, %s19
      %p4404 = scmp.lt.s32.totalorder %s18, 1
      %s4405 = scalar_select %p4404, %s18, 1
      %p4406 = scmp.lt.s32.totalorder %s4403, 1
      %s4407 = scalar_select %p4406, %s4403, 1
      %s4408 = smul.addr %s4405, 26
      %s4409 = sadd.s32 %s4407, %s4408
      %s4410 = smul.addr %s4409, 8
      %s4411 = scalar_lea.vmem %s3, %s4410
      // Predicated region
      $region33: #{wave_attn.1} parent=31 // pred_check
        %p4412 = pneg %p116
      $region34: #{wave_attn.1} parent=31 // pred_check_branch
        %4414 = sbr.rel (%p4412) target = $region36
      $region35: #{wave_attn.1} parent=31 // pred_region
        %s4415 = smul.u32 2, %s19
      $region36: #{wave_attn.1} parent=31 // pred_fallthru
        _
    $region32: #{wave_attn.1} parent=5 // pred_fallthru
      _
    %p4416 = scmp.le.s32.totalorder 2, %s9
    // Predicated region
    $region37: #{wave_attn.1} parent=5 // pred_check
      %p4417 = pneg %p4416
    $region38: #{wave_attn.1} parent=5 // pred_check_branch
      %4419 = sbr.rel (%p4417) target = $region40
    $region39: #{wave_attn.1} parent=5 // pred_region
      %s4420 = ssub.s32 %s9, 2
      // Predicated region
      $region41: #{wave_attn.1} parent=39 // pred_check
        %p4421 = pneg %p122
      $region42: #{wave_attn.1} parent=39 // pred_check_branch
        %4423 = sbr.rel (%p4421) target = $region44
      $region43: #{wave_attn.1} parent=39 // pred_region
        %s4424 = smul.u32 2, %s21
        %p4425 = scmp.lt.s32.totalorder %s20, 1
        %s4426 = scalar_select %p4425, %s20, 1
        %p4427 = scmp.lt.s32.totalorder %s4424, 1
        %s4428 = scalar_select %p4427, %s4424, 1
        %s4429 = smul.addr %s4426, 26
        %s4430 = sadd.s32 %s4428, %s4429
        %s4431 = smul.addr %s4430, 8
        %s4432 = scalar_lea.vmem %s3, %s4431
      $region44: #{wave_attn.1} parent=39 // pred_fallthru
        _
    $region40: #{wave_attn.1} parent=5 // pred_fallthru
      _
  $region6: #{wave_attn.1} parent=0 // loop_footer
    %s13 = sadd.s32 1, %s9
  $region7: #{wave_attn.1} parent=0 // loop_footer_branch
    %8 = sbr.rel target = $region3
  $region8: #{wave_attn.1} parent=0 // loop_exit
    _

</llo_original>
